<compile_context>
chip_gen: v5e
topology: v5e:2x2
jax: 0.10.0
libtpu: 0.0.40
codegen_flags: <defaults>
</compile_context>

<pallas_src>
import math

import jax
import jax.numpy as jnp
from jax.experimental import pallas as pl
from jax.experimental.pallas import tpu as pltpu

D_MODEL = 32
NHEAD = 4
DIM_FF = 64
KSIZE = 3
EPS = 1e-5
SEQ = 8     # L
BATCH = 8   # N  (must equal SEQ for the reference module's residual add)


# ----------------------------------------------------------------------------
# Fused kernel: causal conv (folded) + MHA + out-proj + axis swap + residual +
# LayerNorm1 + FFN (relu) + residual + LayerNorm2, all resident in VMEM.
# ----------------------------------------------------------------------------
def _fused_encoder_kernel(src_ref, wqkv_ref, wow1_ref, w2_ref, vecs_ref, out_ref):
    L, N, E = src_ref.shape
    M = L * N
    H = NHEAD
    D = E // H
    F = w2_ref.shape[0]
    K = wqkv_ref.shape[0] // E
    f32 = jnp.float32

    src2 = src_ref[...].reshape(M, E)                          # (M, E)

    # Constant (l, n)-block shift / swap matrices built from iotas on the VPU
    # (no HBM traffic); they are applied on the otherwise idle MXU.
    ri = jax.lax.broadcasted_iota(jnp.int32, (M, M), 0)
    ci = jax.lax.broadcasted_iota(jnp.int32, (M, M), 1)
    if (N & (N - 1)) == 0:                                     # N is a power of two
        rn = jnp.bitwise_and(ri, N - 1)                        # n (inner) index of row
        rl = jnp.right_shift(ri, int(math.log2(N)))            # l (outer) index of row
    else:
        rn = ri % N
        rl = ri // N

    # X = [shift_{K-1}(src) | ... | shift_1(src) | src]        (M, K*E)
    # shift_s moves rows toward larger n within each l-block, zero-padding the
    # first s rows (== Conv1d's causal left pad over the batch axis).
    parts = []
    for j in range(K - 1):
        sh = K - 1 - j
        t = ((ci == ri - sh) & (rn >= sh)).astype(f32)
        parts.append(jnp.dot(t, src2, preferred_element_type=f32))
    parts.append(src2)
    x = jnp.concatenate(parts, axis=-1)                        # (M, K*E)

    # Fused causal conv + packed q/k/v in-projection (1/sqrt(D) folded into q).
    qkv = (jnp.dot(x, wqkv_ref[...], preferred_element_type=f32)
           + vecs_ref[0:1, 0:3 * E])                           # (M, 3E)
    q3 = qkv[:, 0:E].reshape(L, N, E)
    k3 = qkv[:, E:2 * E].reshape(L, N, E)
    v3 = qkv[:, 2 * E:3 * E].reshape(L, N, E)

    # Multi-head attention, batched over the MHA batch dim (= original L axis).
    ctx_parts = []
    for h in range(H):                                         # static unroll, H = 4
        qh = q3[:, :, h * D:(h + 1) * D]
        kh = k3[:, :, h * D:(h + 1) * D]
        vh = v3[:, :, h * D:(h + 1) * D]
        s = jnp.einsum('lnd,lmd->lnm', qh, kh, preferred_element_type=f32)
        s = s - jnp.max(s, axis=-1, keepdims=True)
        p = jnp.exp(s)
        # exact division kept (vs approx reciprocal) for numerical fidelity;
        # it is a (L, N, 1)-sized op and not on the critical path at this size.
        attn = p / jnp.sum(p, axis=-1, keepdims=True)
        ctx_parts.append(jnp.einsum('lnm,lmd->lnd', attn, vh,
                                    preferred_element_type=f32))
    ctx = jnp.concatenate(ctx_parts, axis=-1).reshape(M, E)    # (M, E)

    # Single out-projection over all heads.
    o = (jnp.dot(ctx, wow1_ref[:, 0:E], preferred_element_type=f32)
         + vecs_ref[1:2, 0:E])

    # Swap the (l, n) / (n, l) axes of the attention output entirely in VMEM
    # via a permutation matmul (replaces the old HBM round trip + XLA transpose).
    perm = (ci == rn * N + rl).astype(f32)
    o_sw = jnp.dot(perm, o, preferred_element_type=f32)

    # Residual + LayerNorm1 (dropout1 == identity, eval mode).
    x1 = src2 + o_sw
    mu = jnp.mean(x1, axis=-1, keepdims=True)
    var = jnp.mean(jnp.square(x1 - mu), axis=-1, keepdims=True)
    x1 = ((x1 - mu) * jax.lax.rsqrt(var + EPS) * vecs_ref[2:3, 0:E]
          + vecs_ref[3:4, 0:E])

    # FFN (relu); inner dropout == identity (eval mode).
    hdn = (jnp.dot(x1, wow1_ref[:, E:E + F], preferred_element_type=f32)
           + vecs_ref[4:5, 0:F])
    hdn = jnp.maximum(hdn, 0.0)
    y = jnp.dot(hdn, w2_ref[...], preferred_element_type=f32) + vecs_ref[5:6, 0:E]

    # Residual + LayerNorm2 (dropout2 == identity, eval mode).
    z = x1 + y
    mu2 = jnp.mean(z, axis=-1, keepdims=True)
    var2 = jnp.mean(jnp.square(z - mu2), axis=-1, keepdims=True)
    out_ref[...] = ((z - mu2) * jax.lax.rsqrt(var2 + EPS) * vecs_ref[6:7, 0:E]
                    + vecs_ref[7:8, 0:E])


@jax.jit
def conv_attention_encoder_layer(src, params):
    # TODO(synk): src_mask / src_key_padding_mask (None in this path) not implemented.
    L, N, E = src.shape
    assert L == N, "reference module's residual only type-checks when seq_len == batch"
    F = DIM_FF
    K = KSIZE
    M = L * N
    D = E // NHEAD
    scale = 1.0 / math.sqrt(D)
    hi = jax.lax.Precision.HIGHEST   # exact weight folding (tiny one-time matmuls)

    # ---- fold the causal conv taps (+ 1/sqrt(D) scale) into the q/k projections ----
    wq = params['in_proj_w'][0:E].T
    wk = params['in_proj_w'][E:2 * E].T
    wv = params['in_proj_w'][2 * E:3 * E].T
    bq = params['in_proj_b'][0:E]
    bk = params['in_proj_b'][E:2 * E]
    bv = params['in_proj_b'][2 * E:3 * E]

    row_blocks = []
    for j in range(K):                                   # row block j <-> conv tap j
        wq_j = jnp.dot(params['conv1_w'][:, :, j].T, wq, precision=hi) * scale
        wk_j = jnp.dot(params['conv2_w'][:, :, j].T, wk, precision=hi)
        wv_j = wv if j == K - 1 else jnp.zeros((E, E), jnp.float32)
        row_blocks.append(jnp.concatenate([wq_j, wk_j, wv_j], axis=1))
    w_qkv = jnp.concatenate(row_blocks, axis=0)          # (K*E, 3E) = (96, 96)

    b_qkv = jnp.concatenate([
        (jnp.dot(params['conv1_b'], wq, precision=hi) + bq) * scale,
        jnp.dot(params['conv2_b'], wk, precision=hi) + bk,
        bv])                                             # (3E,)

    # pack [out_proj.weight^T | linear1.weight^T] and all small vectors
    wow1 = jnp.concatenate([params['out_proj_w'].T, params['linear1_w'].T], axis=1)
    w2 = params['linear2_w'].T                           # (F, E)

    def _row(v):
        return jnp.pad(v, (0, 128 - v.shape[0])).reshape(1, 128)

    vecs = jnp.concatenate([
        _row(b_qkv),                 # row 0: qkv bias (3E)
        _row(params['out_proj_b']),  # row 1
        _row(params['norm1_w']),     # row 2
        _row(params['norm1_b']),     # row 3
        _row(params['linear1_b']),   # row 4 (F)
        _row(params['linear2_b']),   # row 5
        _row(params['norm2_w']),     # row 6
        _row(params['norm2_b']),     # row 7
    ], axis=0)                       # (8, 128)

    inputs = (src, w_qkv, wow1, w2, vecs)
    out2 = pl.pallas_call(
        _fused_encoder_kernel,
        out_shape=jax.ShapeDtypeStruct((M, E), jnp.float32),
        grid=(1,),
        in_specs=[pl.BlockSpec(a.shape, lambda *_, nd=a.ndim: (0,) * nd)
                  for a in inputs],
        out_specs=pl.BlockSpec((M, E), lambda *_: (0, 0)),
        compiler_params=pltpu.CompilerParams(dimension_semantics=("arbitrary",)),
    )(*inputs)
    return out2.reshape(L, N, E)


# ----------------------------------------------------------------------------
# Pure-JAX reference that mirrors the PyTorch forward op-for-op (eval mode).
# ----------------------------------------------------------------------------
def reference_forward(src, params):
    L, N, E = src.shape
    k, H = KSIZE, NHEAD
    D = E // H
    q_t = jnp.transpose(src, (0, 2, 1))                   # (L, E, N)
    pad = jnp.zeros((L, E, k - 1), src.dtype)

    def conv1d(x_ncw, W, b):
        xp = jnp.concatenate([pad, x_ncw], axis=2)
        out = jnp.zeros((L, E, N), src.dtype)
        for j in range(k):
            out = out + jnp.einsum('lcn,oc->lon', xp[:, :, j:j + N], W[:, :, j])
        return out + b[None, :, None]

    qc = conv1d(q_t, params['conv1_w'], params['conv1_b'])
    kc = conv1d(q_t, params['conv2_w'], params['conv2_b'])
    Q = jnp.swapaxes(jnp.swapaxes(qc, 2, 0), 2, 1)        # (N, L, E)
    K = jnp.swapaxes(jnp.swapaxes(kc, 2, 0), 2, 1)
    V = jnp.swapaxes(src, 0, 1)                            # (N, L, E)

    Wq, Wk, Wv = (params['in_proj_w'][:E], params['in_proj_w'][E:2 * E],
                  params['in_proj_w'][2 * E:])
    bq, bk, bv = (params['in_proj_b'][:E], params['in_proj_b'][E:2 * E],
                  params['in_proj_b'][2 * E:])
    tgt, bsz = N, L
    q = (Q @ Wq.T + bq) * (D ** -0.5)
    kk = K @ Wk.T + bk
    v = V @ Wv.T + bv
    qh = jnp.swapaxes(q.reshape(tgt, bsz * H, D), 0, 1)
    kh = jnp.swapaxes(kk.reshape(tgt, bsz * H, D), 0, 1)
    vh = jnp.swapaxes(v.reshape(tgt, bsz * H, D), 0, 1)
    s = jnp.einsum('btd,bsd->bts', qh, kh)
    attn = jax.nn.softmax(s, axis=-1)
    ctx = jnp.einsum('bts,bsd->btd', attn, vh)
    ctx = jnp.swapaxes(ctx, 0, 1).reshape(tgt, bsz, E)
    ao = ctx @ params['out_proj_w'].T + params['out_proj_b']   # (N, L, E)

    def ln(x, g, b):
        mu = jnp.mean(x, -1, keepdims=True)
        var = jnp.mean((x - mu) ** 2, -1, keepdims=True)
        return (x - mu) / jnp.sqrt(var + EPS) * g + b

    x = ln(src + ao, params['norm1_w'], params['norm1_b'])
    y = (jnp.maximum(x @ params['linear1_w'].T + params['linear1_b'], 0.0)
         @ params['linear2_w'].T + params['linear2_b'])
    return ln(x + y, params['norm2_w'], params['norm2_b'])


if __name__ == "__main__":
    E, F, k = D_MODEL, DIM_FF, KSIZE
    key = jax.random.PRNGKey(0)
    keys = jax.random.split(key, 12)

    def u(kk, shape, scale):
        return jax.random.uniform(kk, shape, jnp.float32, -scale, scale)

    params = {
        'conv1_w': u(keys[0], (E, E, k), 0.1),
        'conv1_b': u(keys[1], (E,), 0.1),
        'conv2_w': u(keys[2], (E, E, k), 0.1),
        'conv2_b': u(keys[3], (E,), 0.1),
        'in_proj_w': u(keys[4], (3 * E, E), math.sqrt(6.0 / (4 * E))),  # xavier_uniform
        'in_proj_b': jnp.zeros((3 * E,), jnp.float32),
        'out_proj_w': u(keys[5], (E, E), math.sqrt(6.0 / (2 * E))),
        'out_proj_b': jnp.zeros((E,), jnp.float32),
        'linear1_w': u(keys[6], (F, E), math.sqrt(6.0 / (E + F))),
        'linear1_b': u(keys[7], (F,), 0.1),
        'linear2_w': u(keys[8], (E, F), math.sqrt(6.0 / (E + F))),
        'linear2_b': u(keys[9], (E,), 0.1),
        'norm1_w': jnp.ones((E,), jnp.float32),
        'norm1_b': jnp.zeros((E,), jnp.float32),
        'norm2_w': jnp.ones((E,), jnp.float32),
        'norm2_b': jnp.zeros((E,), jnp.float32),
    }

    src = jax.random.normal(keys[10], (SEQ, BATCH, E), jnp.float32)

    out = conv_attention_encoder_layer(src, params)
    out = jax.block_until_ready(out)
    assert out.shape == (SEQ, BATCH, E)

    ref = reference_forward(src, params)
    err = float(jnp.max(jnp.abs(out - ref)))
    assert err < 5e-3, f"kernel/reference mismatch: max abs err = {err}"
    print("KERNEL_OK")
</pallas_src>

<mosaic_0001>
module attributes {stable_mosaic.version = 11 : i64} {
  func.func @_fused_encoder_kernel(%arg0: i32, %arg1: memref<8x8x32xf32, #tpu.memory_space<vmem>>, %arg2: memref<96x96xf32, #tpu.memory_space<vmem>>, %arg3: memref<32x96xf32, #tpu.memory_space<vmem>>, %arg4: memref<64x32xf32, #tpu.memory_space<vmem>>, %arg5: memref<8x128xf32, #tpu.memory_space<vmem>>, %arg6: memref<64x32xf32, #tpu.memory_space<vmem>>) attributes {dimension_semantics = [#tpu.dimension_semantics<arbitrary>], iteration_bounds = array<i64: 1>, scalar_prefetch = 0 : i64, scratch_operands = 0 : i64, tpu.core_type = #tpu.core_type<tc>, window_params = [{pipeline_mode = #tpu.pipeline_mode<synchronous>, transform_indices = @transform_0, window_bounds = array<i64: 8, 8, 32>}, {pipeline_mode = #tpu.pipeline_mode<synchronous>, transform_indices = @transform_1, window_bounds = array<i64: 96, 96>}, {pipeline_mode = #tpu.pipeline_mode<synchronous>, transform_indices = @transform_2, window_bounds = array<i64: 32, 96>}, {pipeline_mode = #tpu.pipeline_mode<synchronous>, transform_indices = @transform_3, window_bounds = array<i64: 64, 32>}, {pipeline_mode = #tpu.pipeline_mode<synchronous>, transform_indices = @transform_4, window_bounds = array<i64: 8, 128>}, {pipeline_mode = #tpu.pipeline_mode<synchronous>, transform_indices = @transform_5, window_bounds = array<i64: 64, 32>}]} {
    %c0 = arith.constant 0 : index
    %c0_0 = arith.constant 0 : index
    %c0_1 = arith.constant 0 : index
    %0 = vector.load %arg1[%c0, %c0_0, %c0_1] : memref<8x8x32xf32, #tpu.memory_space<vmem>>, vector<8x8x32xf32>
    %1 = vector.shape_cast %0 : vector<8x8x32xf32> to vector<64x32xf32>
    %2 = tpu.iota {dimensions = array<i32: 0>} : vector<64x64xi32>
    %3 = tpu.iota {dimensions = array<i32: 1>} : vector<64x64xi32>
    %c7_i32 = arith.constant 7 : i32
    %4 = vector.broadcast %c7_i32 : i32 to vector<64x64xi32>
    %5 = arith.andi %2, %4 : vector<64x64xi32>
    %c3_i32 = arith.constant 3 : i32
    %6 = vector.broadcast %c3_i32 : i32 to vector<64x64xi32>
    %7 = arith.shrsi %2, %6 : vector<64x64xi32>
    %c2_i32 = arith.constant 2 : i32
    %8 = vector.broadcast %c2_i32 : i32 to vector<64x64xi32>
    %9 = arith.subi %2, %8 : vector<64x64xi32>
    %10 = arith.cmpi eq, %3, %9 : vector<64x64xi32>
    %c2_i32_2 = arith.constant 2 : i32
    %11 = vector.broadcast %c2_i32_2 : i32 to vector<64x64xi32>
    %12 = arith.cmpi sge, %5, %11 : vector<64x64xi32>
    %13 = arith.andi %10, %12 : vector<64x64xi1>
    %14 = arith.extui %13 : vector<64x64xi1> to vector<64x64xi32>
    %15 = arith.sitofp %14 : vector<64x64xi32> to vector<64x64xf32>
    %cst = arith.constant dense<0.000000e+00> : vector<64x32xf32>
    %16 = tpu.matmul %15, %1, %cst {dimension_numbers = #tpu.dot_dimension_numbers<[1], [0], [0], [1], [0, 0, 1, 1], [], []>} : vector<64x64xf32>, vector<64x32xf32>, vector<64x32xf32> -> vector<64x32xf32>
    %c1_i32 = arith.constant 1 : i32
    %17 = vector.broadcast %c1_i32 : i32 to vector<64x64xi32>
    %18 = arith.subi %2, %17 : vector<64x64xi32>
    %19 = arith.cmpi eq, %3, %18 : vector<64x64xi32>
    %c1_i32_3 = arith.constant 1 : i32
    %20 = vector.broadcast %c1_i32_3 : i32 to vector<64x64xi32>
    %21 = arith.cmpi sge, %5, %20 : vector<64x64xi32>
    %22 = arith.andi %19, %21 : vector<64x64xi1>
    %23 = arith.extui %22 : vector<64x64xi1> to vector<64x64xi32>
    %24 = arith.sitofp %23 : vector<64x64xi32> to vector<64x64xf32>
    %cst_4 = arith.constant dense<0.000000e+00> : vector<64x32xf32>
    %25 = tpu.matmul %24, %1, %cst_4 {dimension_numbers = #tpu.dot_dimension_numbers<[1], [0], [0], [1], [0, 0, 1, 1], [], []>} : vector<64x64xf32>, vector<64x32xf32>, vector<64x32xf32> -> vector<64x32xf32>
    %26 = tpu.concatenate %16, %25, %1 in 1 : vector<64x32xf32>, vector<64x32xf32>, vector<64x32xf32> -> vector<64x96xf32>
    %c0_5 = arith.constant 0 : index
    %c0_6 = arith.constant 0 : index
    %27 = vector.load %arg2[%c0_5, %c0_6] : memref<96x96xf32, #tpu.memory_space<vmem>>, vector<96x96xf32>
    %cst_7 = arith.constant dense<0.000000e+00> : vector<64x96xf32>
    %28 = tpu.matmul %26, %27, %cst_7 {dimension_numbers = #tpu.dot_dimension_numbers<[1], [0], [0], [1], [0, 0, 1, 1], [], []>} : vector<64x96xf32>, vector<96x96xf32>, vector<64x96xf32> -> vector<64x96xf32>
    %c0_8 = arith.constant 0 : index
    %c0_9 = arith.constant 0 : index
    %29 = vector.load %arg5[%c0_8, %c0_9] : memref<8x128xf32, #tpu.memory_space<vmem>>, vector<1x96xf32>
    %30 = vector.broadcast %29 : vector<1x96xf32> to vector<64x96xf32>
    %31 = arith.addf %28, %30 : vector<64x96xf32>
    %32 = vector.extract_strided_slice %31 {offsets = [0, 0], sizes = [64, 32], strides = [1, 1]} : vector<64x96xf32> to vector<64x32xf32>
    %33 = vector.shape_cast %32 : vector<64x32xf32> to vector<8x8x32xf32>
    %34 = vector.extract_strided_slice %31 {offsets = [0, 32], sizes = [64, 32], strides = [1, 1]} : vector<64x96xf32> to vector<64x32xf32>
    %35 = vector.shape_cast %34 : vector<64x32xf32> to vector<8x8x32xf32>
    %36 = vector.extract_strided_slice %31 {offsets = [0, 64], sizes = [64, 32], strides = [1, 1]} : vector<64x96xf32> to vector<64x32xf32>
    %37 = vector.shape_cast %36 : vector<64x32xf32> to vector<8x8x32xf32>
    %38 = vector.extract_strided_slice %33 {offsets = [0, 0, 0], sizes = [8, 8, 8], strides = [1, 1, 1]} : vector<8x8x32xf32> to vector<8x8x8xf32>
    %39 = vector.extract_strided_slice %35 {offsets = [0, 0, 0], sizes = [8, 8, 8], strides = [1, 1, 1]} : vector<8x8x32xf32> to vector<8x8x8xf32>
    %40 = vector.extract_strided_slice %37 {offsets = [0, 0, 0], sizes = [8, 8, 8], strides = [1, 1, 1]} : vector<8x8x32xf32> to vector<8x8x8xf32>
    "tpu.trace_start"() <{level = 10 : i32, message = "lnd,lmd->lnm"}> : () -> ()
    %cst_10 = arith.constant dense<0.000000e+00> : vector<8x8x8xf32>
    %41 = tpu.matmul %38, %39, %cst_10 {dimension_numbers = #tpu.dot_dimension_numbers<[2], [2], [1], [1], [0, 0, 0, 1, 1, 1], [0], [0]>} : vector<8x8x8xf32>, vector<8x8x8xf32>, vector<8x8x8xf32> -> vector<8x8x8xf32>
    "tpu.trace_stop"() : () -> ()
    %cst_11 = arith.constant dense<0xFF800000> : vector<8x8xf32>
    %42 = vector.multi_reduction <maximumf>, %41, %cst_11 [2] : vector<8x8x8xf32> to vector<8x8xf32>
    %43 = vector.shape_cast %42 : vector<8x8xf32> to vector<8x8x1xf32>
    %44 = vector.broadcast %43 : vector<8x8x1xf32> to vector<8x8x8xf32>
    %45 = arith.subf %41, %44 : vector<8x8x8xf32>
    %46 = math.exp %45 : vector<8x8x8xf32>
    %cst_12 = arith.constant dense<0.000000e+00> : vector<8x8xf32>
    %47 = vector.multi_reduction <add>, %46, %cst_12 [2] : vector<8x8x8xf32> to vector<8x8xf32>
    %48 = vector.shape_cast %47 : vector<8x8xf32> to vector<8x8x1xf32>
    %49 = vector.broadcast %48 : vector<8x8x1xf32> to vector<8x8x8xf32>
    %50 = arith.divf %46, %49 : vector<8x8x8xf32>
    "tpu.trace_start"() <{level = 10 : i32, message = "lnm,lmd->lnd"}> : () -> ()
    %cst_13 = arith.constant dense<0.000000e+00> : vector<8x8x8xf32>
    %51 = tpu.matmul %50, %40, %cst_13 {dimension_numbers = #tpu.dot_dimension_numbers<[2], [1], [1], [2], [0, 0, 0, 1, 1, 2], [0], [0]>} : vector<8x8x8xf32>, vector<8x8x8xf32>, vector<8x8x8xf32> -> vector<8x8x8xf32>
    "tpu.trace_stop"() : () -> ()
    %52 = vector.extract_strided_slice %33 {offsets = [0, 0, 8], sizes = [8, 8, 8], strides = [1, 1, 1]} : vector<8x8x32xf32> to vector<8x8x8xf32>
    %53 = vector.extract_strided_slice %35 {offsets = [0, 0, 8], sizes = [8, 8, 8], strides = [1, 1, 1]} : vector<8x8x32xf32> to vector<8x8x8xf32>
    %54 = vector.extract_strided_slice %37 {offsets = [0, 0, 8], sizes = [8, 8, 8], strides = [1, 1, 1]} : vector<8x8x32xf32> to vector<8x8x8xf32>
    "tpu.trace_start"() <{level = 10 : i32, message = "lnd,lmd->lnm"}> : () -> ()
    %cst_14 = arith.constant dense<0.000000e+00> : vector<8x8x8xf32>
    %55 = tpu.matmul %52, %53, %cst_14 {dimension_numbers = #tpu.dot_dimension_numbers<[2], [2], [1], [1], [0, 0, 0, 1, 1, 1], [0], [0]>} : vector<8x8x8xf32>, vector<8x8x8xf32>, vector<8x8x8xf32> -> vector<8x8x8xf32>
    "tpu.trace_stop"() : () -> ()
    %cst_15 = arith.constant dense<0xFF800000> : vector<8x8xf32>
    %56 = vector.multi_reduction <maximumf>, %55, %cst_15 [2] : vector<8x8x8xf32> to vector<8x8xf32>
    %57 = vector.shape_cast %56 : vector<8x8xf32> to vector<8x8x1xf32>
    %58 = vector.broadcast %57 : vector<8x8x1xf32> to vector<8x8x8xf32>
    %59 = arith.subf %55, %58 : vector<8x8x8xf32>
    %60 = math.exp %59 : vector<8x8x8xf32>
    %cst_16 = arith.constant dense<0.000000e+00> : vector<8x8xf32>
    %61 = vector.multi_reduction <add>, %60, %cst_16 [2] : vector<8x8x8xf32> to vector<8x8xf32>
    %62 = vector.shape_cast %61 : vector<8x8xf32> to vector<8x8x1xf32>
    %63 = vector.broadcast %62 : vector<8x8x1xf32> to vector<8x8x8xf32>
    %64 = arith.divf %60, %63 : vector<8x8x8xf32>
    "tpu.trace_start"() <{level = 10 : i32, message = "lnm,lmd->lnd"}> : () -> ()
    %cst_17 = arith.constant dense<0.000000e+00> : vector<8x8x8xf32>
    %65 = tpu.matmul %64, %54, %cst_17 {dimension_numbers = #tpu.dot_dimension_numbers<[2], [1], [1], [2], [0, 0, 0, 1, 1, 2], [0], [0]>} : vector<8x8x8xf32>, vector<8x8x8xf32>, vector<8x8x8xf32> -> vector<8x8x8xf32>
    "tpu.trace_stop"() : () -> ()
    %66 = vector.extract_strided_slice %33 {offsets = [0, 0, 16], sizes = [8, 8, 8], strides = [1, 1, 1]} : vector<8x8x32xf32> to vector<8x8x8xf32>
    %67 = vector.extract_strided_slice %35 {offsets = [0, 0, 16], sizes = [8, 8, 8], strides = [1, 1, 1]} : vector<8x8x32xf32> to vector<8x8x8xf32>
    %68 = vector.extract_strided_slice %37 {offsets = [0, 0, 16], sizes = [8, 8, 8], strides = [1, 1, 1]} : vector<8x8x32xf32> to vector<8x8x8xf32>
    "tpu.trace_start"() <{level = 10 : i32, message = "lnd,lmd->lnm"}> : () -> ()
    %cst_18 = arith.constant dense<0.000000e+00> : vector<8x8x8xf32>
    %69 = tpu.matmul %66, %67, %cst_18 {dimension_numbers = #tpu.dot_dimension_numbers<[2], [2], [1], [1], [0, 0, 0, 1, 1, 1], [0], [0]>} : vector<8x8x8xf32>, vector<8x8x8xf32>, vector<8x8x8xf32> -> vector<8x8x8xf32>
    "tpu.trace_stop"() : () -> ()
    %cst_19 = arith.constant dense<0xFF800000> : vector<8x8xf32>
    %70 = vector.multi_reduction <maximumf>, %69, %cst_19 [2] : vector<8x8x8xf32> to vector<8x8xf32>
    %71 = vector.shape_cast %70 : vector<8x8xf32> to vector<8x8x1xf32>
    %72 = vector.broadcast %71 : vector<8x8x1xf32> to vector<8x8x8xf32>
    %73 = arith.subf %69, %72 : vector<8x8x8xf32>
    %74 = math.exp %73 : vector<8x8x8xf32>
    %cst_20 = arith.constant dense<0.000000e+00> : vector<8x8xf32>
    %75 = vector.multi_reduction <add>, %74, %cst_20 [2] : vector<8x8x8xf32> to vector<8x8xf32>
    %76 = vector.shape_cast %75 : vector<8x8xf32> to vector<8x8x1xf32>
    %77 = vector.broadcast %76 : vector<8x8x1xf32> to vector<8x8x8xf32>
    %78 = arith.divf %74, %77 : vector<8x8x8xf32>
    "tpu.trace_start"() <{level = 10 : i32, message = "lnm,lmd->lnd"}> : () -> ()
    %cst_21 = arith.constant dense<0.000000e+00> : vector<8x8x8xf32>
    %79 = tpu.matmul %78, %68, %cst_21 {dimension_numbers = #tpu.dot_dimension_numbers<[2], [1], [1], [2], [0, 0, 0, 1, 1, 2], [0], [0]>} : vector<8x8x8xf32>, vector<8x8x8xf32>, vector<8x8x8xf32> -> vector<8x8x8xf32>
    "tpu.trace_stop"() : () -> ()
    %80 = vector.extract_strided_slice %33 {offsets = [0, 0, 24], sizes = [8, 8, 8], strides = [1, 1, 1]} : vector<8x8x32xf32> to vector<8x8x8xf32>
    %81 = vector.extract_strided_slice %35 {offsets = [0, 0, 24], sizes = [8, 8, 8], strides = [1, 1, 1]} : vector<8x8x32xf32> to vector<8x8x8xf32>
    %82 = vector.extract_strided_slice %37 {offsets = [0, 0, 24], sizes = [8, 8, 8], strides = [1, 1, 1]} : vector<8x8x32xf32> to vector<8x8x8xf32>
    "tpu.trace_start"() <{level = 10 : i32, message = "lnd,lmd->lnm"}> : () -> ()
    %cst_22 = arith.constant dense<0.000000e+00> : vector<8x8x8xf32>
    %83 = tpu.matmul %80, %81, %cst_22 {dimension_numbers = #tpu.dot_dimension_numbers<[2], [2], [1], [1], [0, 0, 0, 1, 1, 1], [0], [0]>} : vector<8x8x8xf32>, vector<8x8x8xf32>, vector<8x8x8xf32> -> vector<8x8x8xf32>
    "tpu.trace_stop"() : () -> ()
    %cst_23 = arith.constant dense<0xFF800000> : vector<8x8xf32>
    %84 = vector.multi_reduction <maximumf>, %83, %cst_23 [2] : vector<8x8x8xf32> to vector<8x8xf32>
    %85 = vector.shape_cast %84 : vector<8x8xf32> to vector<8x8x1xf32>
    %86 = vector.broadcast %85 : vector<8x8x1xf32> to vector<8x8x8xf32>
    %87 = arith.subf %83, %86 : vector<8x8x8xf32>
    %88 = math.exp %87 : vector<8x8x8xf32>
    %cst_24 = arith.constant dense<0.000000e+00> : vector<8x8xf32>
    %89 = vector.multi_reduction <add>, %88, %cst_24 [2] : vector<8x8x8xf32> to vector<8x8xf32>
    %90 = vector.shape_cast %89 : vector<8x8xf32> to vector<8x8x1xf32>
    %91 = vector.broadcast %90 : vector<8x8x1xf32> to vector<8x8x8xf32>
    %92 = arith.divf %88, %91 : vector<8x8x8xf32>
    "tpu.trace_start"() <{level = 10 : i32, message = "lnm,lmd->lnd"}> : () -> ()
    %cst_25 = arith.constant dense<0.000000e+00> : vector<8x8x8xf32>
    %93 = tpu.matmul %92, %82, %cst_25 {dimension_numbers = #tpu.dot_dimension_numbers<[2], [1], [1], [2], [0, 0, 0, 1, 1, 2], [0], [0]>} : vector<8x8x8xf32>, vector<8x8x8xf32>, vector<8x8x8xf32> -> vector<8x8x8xf32>
    "tpu.trace_stop"() : () -> ()
    %94 = tpu.concatenate %51, %65, %79, %93 in 2 : vector<8x8x8xf32>, vector<8x8x8xf32>, vector<8x8x8xf32>, vector<8x8x8xf32> -> vector<8x8x32xf32>
    %95 = vector.shape_cast %94 : vector<8x8x32xf32> to vector<64x32xf32>
    %c0_26 = arith.constant 0 : index
    %c0_27 = arith.constant 0 : index
    %96 = vector.load %arg3[%c0_26, %c0_27] : memref<32x96xf32, #tpu.memory_space<vmem>>, vector<32x32xf32>
    %cst_28 = arith.constant dense<0.000000e+00> : vector<64x32xf32>
    %97 = tpu.matmul %95, %96, %cst_28 {dimension_numbers = #tpu.dot_dimension_numbers<[1], [0], [0], [1], [0, 0, 1, 1], [], []>} : vector<64x32xf32>, vector<32x32xf32>, vector<64x32xf32> -> vector<64x32xf32>
    %c1 = arith.constant 1 : index
    %c0_29 = arith.constant 0 : index
    %98 = vector.load %arg5[%c1, %c0_29] : memref<8x128xf32, #tpu.memory_space<vmem>>, vector<1x32xf32>
    %99 = vector.broadcast %98 : vector<1x32xf32> to vector<64x32xf32>
    %100 = arith.addf %97, %99 : vector<64x32xf32>
    %c8_i32 = arith.constant 8 : i32
    %101 = vector.broadcast %c8_i32 : i32 to vector<64x64xi32>
    %102 = arith.muli %5, %101 : vector<64x64xi32>
    %103 = arith.addi %102, %7 : vector<64x64xi32>
    %104 = arith.cmpi eq, %3, %103 : vector<64x64xi32>
    %105 = arith.extui %104 : vector<64x64xi1> to vector<64x64xi32>
    %106 = arith.sitofp %105 : vector<64x64xi32> to vector<64x64xf32>
    %cst_30 = arith.constant dense<0.000000e+00> : vector<64x32xf32>
    %107 = tpu.matmul %106, %100, %cst_30 {dimension_numbers = #tpu.dot_dimension_numbers<[1], [0], [0], [1], [0, 0, 1, 1], [], []>} : vector<64x64xf32>, vector<64x32xf32>, vector<64x32xf32> -> vector<64x32xf32>
    %108 = arith.addf %1, %107 : vector<64x32xf32>
    %cst_31 = arith.constant dense<0.000000e+00> : vector<64xf32>
    %109 = vector.multi_reduction <add>, %108, %cst_31 [1] : vector<64x32xf32> to vector<64xf32>
    %110 = vector.shape_cast %109 : vector<64xf32> to vector<64x1xf32>
    %cst_32 = arith.constant 3.200000e+01 : f32
    %111 = vector.broadcast %cst_32 : f32 to vector<64x1xf32>
    %112 = arith.divf %110, %111 : vector<64x1xf32>
    %113 = vector.broadcast %112 : vector<64x1xf32> to vector<64x32xf32>
    %114 = arith.subf %108, %113 : vector<64x32xf32>
    %115 = arith.mulf %114, %114 : vector<64x32xf32>
    %cst_33 = arith.constant dense<0.000000e+00> : vector<64xf32>
    %116 = vector.multi_reduction <add>, %115, %cst_33 [1] : vector<64x32xf32> to vector<64xf32>
    %117 = vector.shape_cast %116 : vector<64xf32> to vector<64x1xf32>
    %cst_34 = arith.constant 3.200000e+01 : f32
    %118 = vector.broadcast %cst_34 : f32 to vector<64x1xf32>
    %119 = arith.divf %117, %118 : vector<64x1xf32>
    %120 = vector.broadcast %112 : vector<64x1xf32> to vector<64x32xf32>
    %121 = arith.subf %108, %120 : vector<64x32xf32>
    %cst_35 = arith.constant 9.99999974E-6 : f32
    %122 = vector.broadcast %cst_35 : f32 to vector<64x1xf32>
    %123 = arith.addf %119, %122 : vector<64x1xf32>
    %124 = math.rsqrt %123 : vector<64x1xf32>
    %125 = vector.broadcast %124 : vector<64x1xf32> to vector<64x32xf32>
    %126 = arith.mulf %121, %125 : vector<64x32xf32>
    %c2 = arith.constant 2 : index
    %c0_36 = arith.constant 0 : index
    %127 = vector.load %arg5[%c2, %c0_36] : memref<8x128xf32, #tpu.memory_space<vmem>>, vector<1x32xf32>
    %128 = vector.broadcast %127 : vector<1x32xf32> to vector<64x32xf32>
    %129 = arith.mulf %126, %128 : vector<64x32xf32>
    %c3 = arith.constant 3 : index
    %c0_37 = arith.constant 0 : index
    %130 = vector.load %arg5[%c3, %c0_37] : memref<8x128xf32, #tpu.memory_space<vmem>>, vector<1x32xf32>
    %131 = vector.broadcast %130 : vector<1x32xf32> to vector<64x32xf32>
    %132 = arith.addf %129, %131 : vector<64x32xf32>
    %c0_38 = arith.constant 0 : index
    %c32 = arith.constant 32 : index
    %133 = vector.load %arg3[%c0_38, %c32] : memref<32x96xf32, #tpu.memory_space<vmem>>, vector<32x64xf32>
    %cst_39 = arith.constant dense<0.000000e+00> : vector<64x64xf32>
    %134 = tpu.matmul %132, %133, %cst_39 {dimension_numbers = #tpu.dot_dimension_numbers<[1], [0], [0], [1], [0, 0, 1, 1], [], []>} : vector<64x32xf32>, vector<32x64xf32>, vector<64x64xf32> -> vector<64x64xf32>
    %c4 = arith.constant 4 : index
    %c0_40 = arith.constant 0 : index
    %135 = vector.load %arg5[%c4, %c0_40] : memref<8x128xf32, #tpu.memory_space<vmem>>, vector<1x64xf32>
    %136 = vector.broadcast %135 : vector<1x64xf32> to vector<64x64xf32>
    %137 = arith.addf %134, %136 : vector<64x64xf32>
    %cst_41 = arith.constant 0.000000e+00 : f32
    %138 = vector.broadcast %cst_41 : f32 to vector<64x64xf32>
    %139 = arith.maximumf %137, %138 : vector<64x64xf32>
    %c0_42 = arith.constant 0 : index
    %c0_43 = arith.constant 0 : index
    %140 = vector.load %arg4[%c0_42, %c0_43] : memref<64x32xf32, #tpu.memory_space<vmem>>, vector<64x32xf32>
    %cst_44 = arith.constant dense<0.000000e+00> : vector<64x32xf32>
    %141 = tpu.matmul %139, %140, %cst_44 {dimension_numbers = #tpu.dot_dimension_numbers<[1], [0], [0], [1], [0, 0, 1, 1], [], []>} : vector<64x64xf32>, vector<64x32xf32>, vector<64x32xf32> -> vector<64x32xf32>
    %c5 = arith.constant 5 : index
    %c0_45 = arith.constant 0 : index
    %142 = vector.load %arg5[%c5, %c0_45] : memref<8x128xf32, #tpu.memory_space<vmem>>, vector<1x32xf32>
    %143 = vector.broadcast %142 : vector<1x32xf32> to vector<64x32xf32>
    %144 = arith.addf %141, %143 : vector<64x32xf32>
    %145 = arith.addf %132, %144 : vector<64x32xf32>
    %cst_46 = arith.constant dense<0.000000e+00> : vector<64xf32>
    %146 = vector.multi_reduction <add>, %145, %cst_46 [1] : vector<64x32xf32> to vector<64xf32>
    %147 = vector.shape_cast %146 : vector<64xf32> to vector<64x1xf32>
    %cst_47 = arith.constant 3.200000e+01 : f32
    %148 = vector.broadcast %cst_47 : f32 to vector<64x1xf32>
    %149 = arith.divf %147, %148 : vector<64x1xf32>
    %150 = vector.broadcast %149 : vector<64x1xf32> to vector<64x32xf32>
    %151 = arith.subf %145, %150 : vector<64x32xf32>
    %152 = arith.mulf %151, %151 : vector<64x32xf32>
    %cst_48 = arith.constant dense<0.000000e+00> : vector<64xf32>
    %153 = vector.multi_reduction <add>, %152, %cst_48 [1] : vector<64x32xf32> to vector<64xf32>
    %154 = vector.shape_cast %153 : vector<64xf32> to vector<64x1xf32>
    %cst_49 = arith.constant 3.200000e+01 : f32
    %155 = vector.broadcast %cst_49 : f32 to vector<64x1xf32>
    %156 = arith.divf %154, %155 : vector<64x1xf32>
    %157 = vector.broadcast %149 : vector<64x1xf32> to vector<64x32xf32>
    %158 = arith.subf %145, %157 : vector<64x32xf32>
    %cst_50 = arith.constant 9.99999974E-6 : f32
    %159 = vector.broadcast %cst_50 : f32 to vector<64x1xf32>
    %160 = arith.addf %156, %159 : vector<64x1xf32>
    %161 = math.rsqrt %160 : vector<64x1xf32>
    %162 = vector.broadcast %161 : vector<64x1xf32> to vector<64x32xf32>
    %163 = arith.mulf %158, %162 : vector<64x32xf32>
    %c6 = arith.constant 6 : index
    %c0_51 = arith.constant 0 : index
    %164 = vector.load %arg5[%c6, %c0_51] : memref<8x128xf32, #tpu.memory_space<vmem>>, vector<1x32xf32>
    %165 = vector.broadcast %164 : vector<1x32xf32> to vector<64x32xf32>
    %166 = arith.mulf %163, %165 : vector<64x32xf32>
    %c7 = arith.constant 7 : index
    %c0_52 = arith.constant 0 : index
    %167 = vector.load %arg5[%c7, %c0_52] : memref<8x128xf32, #tpu.memory_space<vmem>>, vector<1x32xf32>
    %168 = vector.broadcast %167 : vector<1x32xf32> to vector<64x32xf32>
    %169 = arith.addf %166, %168 : vector<64x32xf32>
    %c0_53 = arith.constant 0 : index
    %c0_54 = arith.constant 0 : index
    %170 = vector.load %arg6[%c0_53, %c0_54] : memref<64x32xf32, #tpu.memory_space<vmem>>, vector<64x32xf32>
    tpu.vector_store %arg6[%c0_53, %c0_54], %169 {strides = array<i32>} : memref<64x32xf32, #tpu.memory_space<vmem>>, vector<64x32xf32>,
    return
  }
  func.func @transform_0(%arg0: i32) -> (i32, i32, i32) {
    %c0_i32 = arith.constant 0 : i32
    %c0_i32_0 = arith.constant 0 : i32
    %c0_i32_1 = arith.constant 0 : i32
    %c0_i32_2 = arith.constant 0 : i32
    return %c0_i32, %c0_i32_0, %c0_i32_1 : i32, i32, i32
  }
  func.func @transform_1(%arg0: i32) -> (i32, i32) {
    %c0_i32 = arith.constant 0 : i32
    %c0_i32_0 = arith.constant 0 : i32
    %c0_i32_1 = arith.constant 0 : i32
    return %c0_i32, %c0_i32_0 : i32, i32
  }
  func.func @transform_2(%arg0: i32) -> (i32, i32) {
    %c0_i32 = arith.constant 0 : i32
    %c0_i32_0 = arith.constant 0 : i32
    %c0_i32_1 = arith.constant 0 : i32
    return %c0_i32, %c0_i32_0 : i32, i32
  }
  func.func @transform_3(%arg0: i32) -> (i32, i32) {
    %c0_i32 = arith.constant 0 : i32
    %c0_i32_0 = arith.constant 0 : i32
    %c0_i32_1 = arith.constant 0 : i32
    return %c0_i32, %c0_i32_0 : i32, i32
  }
  func.func @transform_4(%arg0: i32) -> (i32, i32) {
    %c0_i32 = arith.constant 0 : i32
    %c0_i32_0 = arith.constant 0 : i32
    %c0_i32_1 = arith.constant 0 : i32
    return %c0_i32, %c0_i32_0 : i32, i32
  }
  func.func @transform_5(%arg0: i32) -> (i32, i32) {
    %c0_i32 = arith.constant 0 : i32
    %c0_i32_0 = arith.constant 0 : i32
    %c0_i32_1 = arith.constant 0 : i32
    return %c0_i32, %c0_i32_0 : i32, i32
  }
}

</mosaic_0001>

<llo_original>
// kernel: conv_attention_encoder_layer.1
$region0: #{conv_attention_encoder_layer.1}
  #allocation0 [shape = 'u32[]', space=smem, size = 0x4, offset = 0x4, fixed_abs, tag = 'smem constant byte address 0x4 - core index']
  #allocation1 [shape = 'u32[72,128]{1,0:T(1,128)}', space=vmem, size = 0x9000, scoped, tag = 'internal scratch']
  %s0 = inlined_call_operand.vmem [shape: f32[8,8,32], index: 0, kind: input, shape index: {}]
  %s1 = inlined_call_operand.vmem [shape: f32[96,96], index: 1, kind: input, shape index: {}]
  %s2 = inlined_call_operand.vmem [shape: f32[32,96], index: 2, kind: input, shape index: {}]
  %s3 = inlined_call_operand.vmem [shape: f32[64,32], index: 3, kind: input, shape index: {}]
  %s4 = inlined_call_operand.vmem [shape: f32[8,128], index: 4, kind: input, shape index: {}]
  %s5 = inlined_call_operand.hbm [shape: f32[64,32], index: 5, kind: output, shape index: {}]
  %s6 = sld [smem:[#allocation0]]
  $region30: #{conv_attention_encoder_layer.1} parent=0
    _
  %s8 = ssub.s32 1, %s6
  %s9 = scalar_select 0, %s8, %s6
  $region1: #{conv_attention_encoder_layer.1} parent=0
    #allocation2 [shape = 'u8[32768]{0}', space=vmem, size = 0x8000, scoped, tag = 'output window, operand 0, single buffered']
    #allocation3 [shape = 's32[1]{0}', space=sflag, size = 0x4, scoped, tag = 'scoped memory for conv_attention_encoder_layer.1']
    %10 = vsyncpa [#allocation3], 0
    // Predicated region
    $region2: #{conv_attention_encoder_layer.1} parent=1 // pred_check
      _
    $region3: #{conv_attention_encoder_layer.1} parent=1 // pred_check_branch
      %12 = sbr.rel (0) target = $region5
    $region4: #{conv_attention_encoder_layer.1} parent=1 // pred_region
      _
    $region5: #{conv_attention_encoder_layer.1} parent=1 // pred_fallthru
      _
    // Predicated region
    $region6: #{conv_attention_encoder_layer.1} parent=1 // pred_check
      _
    $region7: #{conv_attention_encoder_layer.1} parent=1 // pred_check_branch
      %14 = sbr.rel (0) target = $region9
    $region8: #{conv_attention_encoder_layer.1} parent=1 // pred_region
      _
    $region9: #{conv_attention_encoder_layer.1} parent=1 // pred_fallthru
      _
    // Predicated region
    $region10: #{conv_attention_encoder_layer.1} parent=1 // pred_check
      _
    $region11: #{conv_attention_encoder_layer.1} parent=1 // pred_check_branch
      %16 = sbr.rel (0) target = $region13
    $region12: #{conv_attention_encoder_layer.1} parent=1 // pred_region
      _
    $region13: #{conv_attention_encoder_layer.1} parent=1 // pred_fallthru
      _
    // Predicated region
    $region14: #{conv_attention_encoder_layer.1} parent=1 // pred_check
      _
    $region15: #{conv_attention_encoder_layer.1} parent=1 // pred_check_branch
      %18 = sbr.rel (0) target = $region17
    $region16: #{conv_attention_encoder_layer.1} parent=1 // pred_region
      _
    $region17: #{conv_attention_encoder_layer.1} parent=1 // pred_fallthru
      _
    // Predicated region
    $region18: #{conv_attention_encoder_layer.1} parent=1 // pred_check
      _
    $region19: #{conv_attention_encoder_layer.1} parent=1 // pred_check_branch
      %20 = sbr.rel (0) target = $region21
    $region20: #{conv_attention_encoder_layer.1} parent=1 // pred_region
      _
    $region21: #{conv_attention_encoder_layer.1} parent=1 // pred_fallthru
      _
    %v21 = vld [vmem:[%s0] sm:$0xff]
    %v22 = vld [vmem:[%s0 + $0x8] sm:$0xff]
    %v23 = vld [vmem:[%s0 + $0x10] sm:$0xff]
    %v24 = vld [vmem:[%s0 + $0x18] sm:$0xff]
    %v25 = vld [vmem:[%s0 + $0x20] sm:$0xff]
    %v26 = vld [vmem:[%s0 + $0x28] sm:$0xff]
    %v27 = vld [vmem:[%s0 + $0x30] sm:$0xff]
    %v28 = vld [vmem:[%s0 + $0x38] sm:$0xff]
    %v29 = vlaneseq
    %v30 = vshrl.u32 %v29, 7
    %v31 = vadd.s32 %v30, 8
    %v32 = vadd.s32 %v30, 16
    %v33 = vadd.s32 %v30, 24
    %v34 = vadd.s32 %v30, 32
    %v35 = vadd.s32 %v30, 40
    %v36 = vadd.s32 %v30, 48
    %v37 = vadd.s32 %v30, 56
    %v38 = vlaneseq
    %v39 = vand.u32 %v38, 127
    %v40 = vand.u32 %v30, 7
    %v41 = vand.u32 %v31, 7
    %v42 = vand.u32 %v32, 7
    %v43 = vand.u32 %v33, 7
    %v44 = vand.u32 %v34, 7
    %v45 = vand.u32 %v35, 7
    %v46 = vand.u32 %v36, 7
    %v47 = vand.u32 %v37, 7
    %v48 = vshra.s32 %v30, 3
    %v49 = vshra.s32 %v31, 3
    %v50 = vshra.s32 %v32, 3
    %v51 = vshra.s32 %v33, 3
    %v52 = vshra.s32 %v34, 3
    %v53 = vshra.s32 %v35, 3
    %v54 = vshra.s32 %v36, 3
    %v55 = vshra.s32 %v37, 3
    %v56 = vsub.s32 %v30, 2
    %v57 = vsub.s32 %v31, 2
    %v58 = vsub.s32 %v32, 2
    %v59 = vsub.s32 %v33, 2
    %v60 = vsub.s32 %v34, 2
    %v61 = vsub.s32 %v35, 2
    %v62 = vsub.s32 %v36, 2
    %v63 = vsub.s32 %v37, 2
    %vm64 = vcmp.eq.s32.totalorder %v39, %v56
    %vm65 = vcmp.eq.s32.totalorder %v39, %v57
    %vm66 = vcmp.eq.s32.totalorder %v39, %v58
    %vm67 = vcmp.eq.s32.totalorder %v39, %v59
    %vm68 = vcmp.eq.s32.totalorder %v39, %v60
    %vm69 = vcmp.eq.s32.totalorder %v39, %v61
    %vm70 = vcmp.eq.s32.totalorder %v39, %v62
    %vm71 = vcmp.eq.s32.totalorder %v39, %v63
    %vm72 = vcmp.ge.s32.totalorder %v40, 2
    %vm73 = vcmp.ge.s32.totalorder %v41, 2
    %vm74 = vcmp.ge.s32.totalorder %v42, 2
    %vm75 = vcmp.ge.s32.totalorder %v43, 2
    %vm76 = vcmp.ge.s32.totalorder %v44, 2
    %vm77 = vcmp.ge.s32.totalorder %v45, 2
    %vm78 = vcmp.ge.s32.totalorder %v46, 2
    %vm79 = vcmp.ge.s32.totalorder %v47, 2
    %vm80 = vmand %vm64, %vm72
    %vm81 = vmand %vm65, %vm73
    %vm82 = vmand %vm66, %vm74
    %vm83 = vmand %vm67, %vm75
    %vm84 = vmand %vm68, %vm76
    %vm85 = vmand %vm69, %vm77
    %vm86 = vmand %vm70, %vm78
    %vm87 = vmand %vm71, %vm79
    %v88 = vsel %vm80, 1, 0
    %v89 = vsel %vm81, 1, 0
    %v90 = vsel %vm82, 1, 0
    %v91 = vsel %vm83, 1, 0
    %v92 = vsel %vm84, 1, 0
    %v93 = vsel %vm85, 1, 0
    %v94 = vsel %vm86, 1, 0
    %v95 = vsel %vm87, 1, 0
    %v96 = vcvt.s32.f32 %v88
    %v97 = vcvt.s32.f32 %v89
    %v98 = vcvt.s32.f32 %v90
    %v99 = vcvt.s32.f32 %v91
    %v100 = vcvt.s32.f32 %v92
    %v101 = vcvt.s32.f32 %v93
    %v102 = vcvt.s32.f32 %v94
    %v103 = vcvt.s32.f32 %v95
    %vm104 = vcmask 523264
    %v106 = vsel %vm104, %v96, 0
    %v109 = vsel %vm104, %v97, 0
    %v112 = vsel %vm104, %v98, 0
    %v115 = vsel %vm104, %v99, 0
    %v118 = vsel %vm104, %v100, 0
    %v121 = vsel %vm104, %v101, 0
    %v124 = vsel %vm104, %v102, 0
    %v127 = vsel %vm104, %v103, 0
    %129 = vmatpush.msra.mxu0 0.0
    %130 = vmatpush.msra.mxu0 0.0
    %131 = vmatpush.msra.mxu0 0.0
    %132 = vmatpush.msra.mxu0 0.0
    %133 = vmatpush.msra.mxu0 0.0
    %134 = vmatpush.msra.mxu0 0.0
    %135 = vmatpush.msra.mxu0 0.0
    %136 = vmatpush.msra.mxu0 0.0
    %137 = vmatpush.msra.mxu0 %v28
    %138 = vmatpush.msra.mxu0 %v27
    %139 = vmatpush.msra.mxu0 %v26
    %140 = vmatpush.msra.mxu0 %v25
    %141 = vmatpush.msra.mxu0 %v24
    %142 = vmatpush.msra.mxu0 %v23
    %143 = vmatpush.msra.mxu0 %v22
    %144 = vmatpush.msra.mxu0 %v21
    %145 = vmatmul.f32.gmra.mxu0 %v106
    %v146 = vpop.f32.mrf.mxu0
    %v147 = vadd.f32 0.0, %v146
    %148 = vmatmul.f32.gmra.mxu0 %v109
    %v149 = vpop.f32.mrf.mxu0
    %v150 = vadd.f32 0.0, %v149
    %151 = vmatmul.f32.gmra.mxu0 %v112
    %v152 = vpop.f32.mrf.mxu0
    %v153 = vadd.f32 0.0, %v152
    %154 = vmatmul.f32.gmra.mxu0 %v115
    %v155 = vpop.f32.mrf.mxu0
    %v156 = vadd.f32 0.0, %v155
    %157 = vmatmul.f32.gmra.mxu0 %v118
    %v158 = vpop.f32.mrf.mxu0
    %v159 = vadd.f32 0.0, %v158
    %160 = vmatmul.f32.gmra.mxu0 %v121
    %v161 = vpop.f32.mrf.mxu0
    %v162 = vadd.f32 0.0, %v161
    %163 = vmatmul.f32.gmra.mxu0 %v124
    %v164 = vpop.f32.mrf.mxu0
    %v165 = vadd.f32 0.0, %v164
    %166 = vmatmul.f32.gmra.mxu0 %v127
    %v167 = vpop.f32.mrf.mxu0
    %v168 = vadd.f32 0.0, %v167
    %169 = vdwg.mxu0
    %v170 = vsub.s32 %v30, 1
    %v171 = vsub.s32 %v31, 1
    %v172 = vsub.s32 %v32, 1
    %v173 = vsub.s32 %v33, 1
    %v174 = vsub.s32 %v34, 1
    %v175 = vsub.s32 %v35, 1
    %v176 = vsub.s32 %v36, 1
    %v177 = vsub.s32 %v37, 1
    %vm178 = vcmp.eq.s32.totalorder %v39, %v170
    %vm179 = vcmp.eq.s32.totalorder %v39, %v171
    %vm180 = vcmp.eq.s32.totalorder %v39, %v172
    %vm181 = vcmp.eq.s32.totalorder %v39, %v173
    %vm182 = vcmp.eq.s32.totalorder %v39, %v174
    %vm183 = vcmp.eq.s32.totalorder %v39, %v175
    %vm184 = vcmp.eq.s32.totalorder %v39, %v176
    %vm185 = vcmp.eq.s32.totalorder %v39, %v177
    %vm186 = vcmp.ge.s32.totalorder %v40, 1
    %vm187 = vcmp.ge.s32.totalorder %v41, 1
    %vm188 = vcmp.ge.s32.totalorder %v42, 1
    %vm189 = vcmp.ge.s32.totalorder %v43, 1
    %vm190 = vcmp.ge.s32.totalorder %v44, 1
    %vm191 = vcmp.ge.s32.totalorder %v45, 1
    %vm192 = vcmp.ge.s32.totalorder %v46, 1
    %vm193 = vcmp.ge.s32.totalorder %v47, 1
    %vm194 = vmand %vm178, %vm186
    %vm195 = vmand %vm179, %vm187
    %vm196 = vmand %vm180, %vm188
    %vm197 = vmand %vm181, %vm189
    %vm198 = vmand %vm182, %vm190
    %vm199 = vmand %vm183, %vm191
    %vm200 = vmand %vm184, %vm192
    %vm201 = vmand %vm185, %vm193
    %v202 = vsel %vm194, 1, 0
    %v203 = vsel %vm195, 1, 0
    %v204 = vsel %vm196, 1, 0
    %v205 = vsel %vm197, 1, 0
    %v206 = vsel %vm198, 1, 0
    %v207 = vsel %vm199, 1, 0
    %v208 = vsel %vm200, 1, 0
    %v209 = vsel %vm201, 1, 0
    %v210 = vcvt.s32.f32 %v202
    %v211 = vcvt.s32.f32 %v203
    %v212 = vcvt.s32.f32 %v204
    %v213 = vcvt.s32.f32 %v205
    %v214 = vcvt.s32.f32 %v206
    %v215 = vcvt.s32.f32 %v207
    %v216 = vcvt.s32.f32 %v208
    %v217 = vcvt.s32.f32 %v209
    %v219 = vsel %vm104, %v210, 0
    %v222 = vsel %vm104, %v211, 0
    %v225 = vsel %vm104, %v212, 0
    %v228 = vsel %vm104, %v213, 0
    %v231 = vsel %vm104, %v214, 0
    %v234 = vsel %vm104, %v215, 0
    %v237 = vsel %vm104, %v216, 0
    %v240 = vsel %vm104, %v217, 0
    %242 = vmatpush.msra.mxu0 0.0
    %243 = vmatpush.msra.mxu0 0.0
    %244 = vmatpush.msra.mxu0 0.0
    %245 = vmatpush.msra.mxu0 0.0
    %246 = vmatpush.msra.mxu0 0.0
    %247 = vmatpush.msra.mxu0 0.0
    %248 = vmatpush.msra.mxu0 0.0
    %249 = vmatpush.msra.mxu0 0.0
    %250 = vmatpush.msra.mxu0 %v28
    %251 = vmatpush.msra.mxu0 %v27
    %252 = vmatpush.msra.mxu0 %v26
    %253 = vmatpush.msra.mxu0 %v25
    %254 = vmatpush.msra.mxu0 %v24
    %255 = vmatpush.msra.mxu0 %v23
    %256 = vmatpush.msra.mxu0 %v22
    %257 = vmatpush.msra.mxu0 %v21
    %258 = vmatmul.f32.gmra.mxu0 %v219
    %v259 = vpop.f32.mrf.mxu0
    %v260 = vadd.f32 0.0, %v259
    %261 = vmatmul.f32.gmra.mxu0 %v222
    %v262 = vpop.f32.mrf.mxu0
    %v263 = vadd.f32 0.0, %v262
    %264 = vmatmul.f32.gmra.mxu0 %v225
    %v265 = vpop.f32.mrf.mxu0
    %v266 = vadd.f32 0.0, %v265
    %267 = vmatmul.f32.gmra.mxu0 %v228
    %v268 = vpop.f32.mrf.mxu0
    %v269 = vadd.f32 0.0, %v268
    %270 = vmatmul.f32.gmra.mxu0 %v231
    %v271 = vpop.f32.mrf.mxu0
    %v272 = vadd.f32 0.0, %v271
    %273 = vmatmul.f32.gmra.mxu0 %v234
    %v274 = vpop.f32.mrf.mxu0
    %v275 = vadd.f32 0.0, %v274
    %276 = vmatmul.f32.gmra.mxu0 %v237
    %v277 = vpop.f32.mrf.mxu0
    %v278 = vadd.f32 0.0, %v277
    %279 = vmatmul.f32.gmra.mxu0 %v240
    %v280 = vpop.f32.mrf.mxu0
    %v281 = vadd.f32 0.0, %v280
    %282 = vdwg.mxu0
    %291 = vrot.lane.b32.xlu0 %v260, 32
    %v292 = vpop.permute.xlu0 %291
    %293 = vrot.lane.b32.xlu0 %v263, 32
    %v294 = vpop.permute.xlu0 %293
    %295 = vrot.lane.b32.xlu0 %v266, 32
    %v296 = vpop.permute.xlu0 %295
    %297 = vrot.lane.b32.xlu0 %v269, 32
    %v298 = vpop.permute.xlu0 %297
    %299 = vrot.lane.b32.xlu0 %v272, 32
    %v300 = vpop.permute.xlu0 %299
    %301 = vrot.lane.b32.xlu0 %v275, 32
    %v302 = vpop.permute.xlu0 %301
    %303 = vrot.lane.b32.xlu0 %v278, 32
    %v304 = vpop.permute.xlu0 %303
    %305 = vrot.lane.b32.xlu0 %v281, 32
    %v306 = vpop.permute.xlu0 %305
    %323 = vrot.lane.b32.xlu0 %v21, 64
    %v324 = vpop.permute.xlu0 %323
    %325 = vrot.lane.b32.xlu0 %v22, 64
    %v326 = vpop.permute.xlu0 %325
    %327 = vrot.lane.b32.xlu0 %v23, 64
    %v328 = vpop.permute.xlu0 %327
    %329 = vrot.lane.b32.xlu0 %v24, 64
    %v330 = vpop.permute.xlu0 %329
    %331 = vrot.lane.b32.xlu0 %v25, 64
    %v332 = vpop.permute.xlu0 %331
    %333 = vrot.lane.b32.xlu0 %v26, 64
    %v334 = vpop.permute.xlu0 %333
    %335 = vrot.lane.b32.xlu0 %v27, 64
    %v336 = vpop.permute.xlu0 %335
    %337 = vrot.lane.b32.xlu0 %v28, 64
    %v338 = vpop.permute.xlu0 %337
    %vm347 = vcmask 261120
    %v348 = vsel %vm347, %v147, %v292
    %v349 = vsel %vm347, %v150, %v294
    %v350 = vsel %vm347, %v153, %v296
    %v351 = vsel %vm347, %v156, %v298
    %v352 = vsel %vm347, %v159, %v300
    %v353 = vsel %vm347, %v162, %v302
    %v354 = vsel %vm347, %v165, %v304
    %v355 = vsel %vm347, %v168, %v306
    %v356 = vsel %vm104, %v348, %v324
    %v357 = vsel %vm104, %v349, %v326
    %v358 = vsel %vm104, %v350, %v328
    %v359 = vsel %vm104, %v351, %v330
    %v360 = vsel %vm104, %v352, %v332
    %v361 = vsel %vm104, %v353, %v334
    %v362 = vsel %vm104, %v354, %v336
    %v363 = vsel %vm104, %v355, %v338
    %v364 = vld [vmem:[%s1] sm:$0xff]
    %v365 = vld [vmem:[%s1 + $0x8] sm:$0xff]
    %v366 = vld [vmem:[%s1 + $0x10] sm:$0xff]
    %v367 = vld [vmem:[%s1 + $0x18] sm:$0xff]
    %v368 = vld [vmem:[%s1 + $0x20] sm:$0xff]
    %v369 = vld [vmem:[%s1 + $0x28] sm:$0xff]
    %v370 = vld [vmem:[%s1 + $0x30] sm:$0xff]
    %v371 = vld [vmem:[%s1 + $0x38] sm:$0xff]
    %v372 = vld [vmem:[%s1 + $0x40] sm:$0xff]
    %v373 = vld [vmem:[%s1 + $0x48] sm:$0xff]
    %v374 = vld [vmem:[%s1 + $0x50] sm:$0xff]
    %v375 = vld [vmem:[%s1 + $0x58] sm:$0xff]
    %v376 = vld [vmem:[%s4] sm:$0x1]
    %v377 = vperm.slane %v376, 0
    %vm378 = vcmask 785408
    %v380 = vsel %vm378, %v356, 0
    %v383 = vsel %vm378, %v357, 0
    %v386 = vsel %vm378, %v358, 0
    %v389 = vsel %vm378, %v359, 0
    %v392 = vsel %vm378, %v360, 0
    %v395 = vsel %vm378, %v361, 0
    %v398 = vsel %vm378, %v362, 0
    %v401 = vsel %vm378, %v363, 0
    %403 = vmatpush.msra.mxu0 0.0
    %404 = vmatpush.msra.mxu0 0.0
    %405 = vmatpush.msra.mxu0 0.0
    %406 = vmatpush.msra.mxu0 0.0
    %407 = vmatpush.msra.mxu0 %v375
    %408 = vmatpush.msra.mxu0 %v374
    %409 = vmatpush.msra.mxu0 %v373
    %410 = vmatpush.msra.mxu0 %v372
    %411 = vmatpush.msra.mxu0 %v371
    %412 = vmatpush.msra.mxu0 %v370
    %413 = vmatpush.msra.mxu0 %v369
    %414 = vmatpush.msra.mxu0 %v368
    %415 = vmatpush.msra.mxu0 %v367
    %416 = vmatpush.msra.mxu0 %v366
    %417 = vmatpush.msra.mxu0 %v365
    %418 = vmatpush.msra.mxu0 %v364
    %419 = vmatmul.f32.gmra.mxu0 %v380
    %v420 = vpop.f32.mrf.mxu0
    %v421 = vadd.f32 %v377, %v420
    %422 = vmatmul.f32.gmra.mxu0 %v383
    %v423 = vpop.f32.mrf.mxu0
    %v424 = vadd.f32 %v377, %v423
    %425 = vmatmul.f32.gmra.mxu0 %v386
    %v426 = vpop.f32.mrf.mxu0
    %v427 = vadd.f32 %v377, %v426
    %428 = vmatmul.f32.gmra.mxu0 %v389
    %v429 = vpop.f32.mrf.mxu0
    %v430 = vadd.f32 %v377, %v429
    %431 = vmatmul.f32.gmra.mxu0 %v392
    %v432 = vpop.f32.mrf.mxu0
    %v433 = vadd.f32 %v377, %v432
    %434 = vmatmul.f32.gmra.mxu0 %v395
    %v435 = vpop.f32.mrf.mxu0
    %v436 = vadd.f32 %v377, %v435
    %437 = vmatmul.f32.gmra.mxu0 %v398
    %v438 = vpop.f32.mrf.mxu0
    %v439 = vadd.f32 %v377, %v438
    %440 = vmatmul.f32.gmra.mxu0 %v401
    %v441 = vpop.f32.mrf.mxu0
    %v442 = vadd.f32 %v377, %v441
    %443 = vdwg.mxu0
    %445 = vrot.lane.b32.xlu0 %v421, 96
    %v446 = vpop.permute.xlu0 %445
    %vm447 = vcmask 64512
    %v448 = vsel %vm447, %v421, 0
    %v450 = vsel %vm447, %v446, 0
    %452 = vmatpush.xpose.msra.mxu0 0.0
    %453 = vmatpush.xpose.msra.mxu0 0.0
    %454 = vmatpush.xpose.msra.mxu0 0.0
    %455 = vmatpush.xpose.msra.mxu0 0.0
    %456 = vmatpush.xpose.msra.mxu0 0.0
    %457 = vmatpush.xpose.msra.mxu0 0.0
    %458 = vmatpush.xpose.msra.mxu0 0.0
    %459 = vmatpush.xpose.msra.mxu0 0.0
    %460 = vmatpush.xpose.msra.mxu0 0.0
    %461 = vmatpush.xpose.msra.mxu0 0.0
    %462 = vmatpush.xpose.msra.mxu0 0.0
    %463 = vmatpush.xpose.msra.mxu0 0.0
    %464 = vmatpush.xpose.msra.mxu0 0.0
    %465 = vmatpush.xpose.msra.mxu0 0.0
    %466 = vmatpush.xpose.msra.mxu0 0.0
    %467 = vmatpush.xpose.msra.mxu0 %v450
    %468 = vmatmul.f32.gmra.mxu0 %v448
    %v469 = vpop.f32.mrf.mxu0
    %v470 = vadd.f32 0.0, %v469
    %471 = vdwg.mxu0
    %473 = vrot.lane.b32.xlu0 %v424, 96
    %v474 = vpop.permute.xlu0 %473
    %v475 = vsel %vm447, %v424, 0
    %v477 = vsel %vm447, %v474, 0
    %479 = vmatpush.xpose.msra.mxu0 0.0
    %480 = vmatpush.xpose.msra.mxu0 0.0
    %481 = vmatpush.xpose.msra.mxu0 0.0
    %482 = vmatpush.xpose.msra.mxu0 0.0
    %483 = vmatpush.xpose.msra.mxu0 0.0
    %484 = vmatpush.xpose.msra.mxu0 0.0
    %485 = vmatpush.xpose.msra.mxu0 0.0
    %486 = vmatpush.xpose.msra.mxu0 0.0
    %487 = vmatpush.xpose.msra.mxu0 0.0
    %488 = vmatpush.xpose.msra.mxu0 0.0
    %489 = vmatpush.xpose.msra.mxu0 0.0
    %490 = vmatpush.xpose.msra.mxu0 0.0
    %491 = vmatpush.xpose.msra.mxu0 0.0
    %492 = vmatpush.xpose.msra.mxu0 0.0
    %493 = vmatpush.xpose.msra.mxu0 0.0
    %494 = vmatpush.xpose.msra.mxu0 %v477
    %495 = vmatmul.f32.gmra.mxu0 %v475
    %v496 = vpop.f32.mrf.mxu0
    %v497 = vadd.f32 0.0, %v496
    %498 = vdwg.mxu0
    %500 = vrot.lane.b32.xlu0 %v427, 96
    %v501 = vpop.permute.xlu0 %500
    %v502 = vsel %vm447, %v427, 0
    %v504 = vsel %vm447, %v501, 0
    %506 = vmatpush.xpose.msra.mxu0 0.0
    %507 = vmatpush.xpose.msra.mxu0 0.0
    %508 = vmatpush.xpose.msra.mxu0 0.0
    %509 = vmatpush.xpose.msra.mxu0 0.0
    %510 = vmatpush.xpose.msra.mxu0 0.0
    %511 = vmatpush.xpose.msra.mxu0 0.0
    %512 = vmatpush.xpose.msra.mxu0 0.0
    %513 = vmatpush.xpose.msra.mxu0 0.0
    %514 = vmatpush.xpose.msra.mxu0 0.0
    %515 = vmatpush.xpose.msra.mxu0 0.0
    %516 = vmatpush.xpose.msra.mxu0 0.0
    %517 = vmatpush.xpose.msra.mxu0 0.0
    %518 = vmatpush.xpose.msra.mxu0 0.0
    %519 = vmatpush.xpose.msra.mxu0 0.0
    %520 = vmatpush.xpose.msra.mxu0 0.0
    %521 = vmatpush.xpose.msra.mxu0 %v504
    %522 = vmatmul.f32.gmra.mxu0 %v502
    %v523 = vpop.f32.mrf.mxu0
    %v524 = vadd.f32 0.0, %v523
    %525 = vdwg.mxu0
    %527 = vrot.lane.b32.xlu0 %v430, 96
    %v528 = vpop.permute.xlu0 %527
    %v529 = vsel %vm447, %v430, 0
    %v531 = vsel %vm447, %v528, 0
    %533 = vmatpush.xpose.msra.mxu0 0.0
    %534 = vmatpush.xpose.msra.mxu0 0.0
    %535 = vmatpush.xpose.msra.mxu0 0.0
    %536 = vmatpush.xpose.msra.mxu0 0.0
    %537 = vmatpush.xpose.msra.mxu0 0.0
    %538 = vmatpush.xpose.msra.mxu0 0.0
    %539 = vmatpush.xpose.msra.mxu0 0.0
    %540 = vmatpush.xpose.msra.mxu0 0.0
    %541 = vmatpush.xpose.msra.mxu0 0.0
    %542 = vmatpush.xpose.msra.mxu0 0.0
    %543 = vmatpush.xpose.msra.mxu0 0.0
    %544 = vmatpush.xpose.msra.mxu0 0.0
    %545 = vmatpush.xpose.msra.mxu0 0.0
    %546 = vmatpush.xpose.msra.mxu0 0.0
    %547 = vmatpush.xpose.msra.mxu0 0.0
    %548 = vmatpush.xpose.msra.mxu0 %v531
    %549 = vmatmul.f32.gmra.mxu0 %v529
    %v550 = vpop.f32.mrf.mxu0
    %v551 = vadd.f32 0.0, %v550
    %552 = vdwg.mxu0
    %554 = vrot.lane.b32.xlu0 %v433, 96
    %v555 = vpop.permute.xlu0 %554
    %v556 = vsel %vm447, %v433, 0
    %v558 = vsel %vm447, %v555, 0
    %560 = vmatpush.xpose.msra.mxu0 0.0
    %561 = vmatpush.xpose.msra.mxu0 0.0
    %562 = vmatpush.xpose.msra.mxu0 0.0
    %563 = vmatpush.xpose.msra.mxu0 0.0
    %564 = vmatpush.xpose.msra.mxu0 0.0
    %565 = vmatpush.xpose.msra.mxu0 0.0
    %566 = vmatpush.xpose.msra.mxu0 0.0
    %567 = vmatpush.xpose.msra.mxu0 0.0
    %568 = vmatpush.xpose.msra.mxu0 0.0
    %569 = vmatpush.xpose.msra.mxu0 0.0
    %570 = vmatpush.xpose.msra.mxu0 0.0
    %571 = vmatpush.xpose.msra.mxu0 0.0
    %572 = vmatpush.xpose.msra.mxu0 0.0
    %573 = vmatpush.xpose.msra.mxu0 0.0
    %574 = vmatpush.xpose.msra.mxu0 0.0
    %575 = vmatpush.xpose.msra.mxu0 %v558
    %576 = vmatmul.f32.gmra.mxu0 %v556
    %v577 = vpop.f32.mrf.mxu0
    %v578 = vadd.f32 0.0, %v577
    %579 = vdwg.mxu0
    %581 = vrot.lane.b32.xlu0 %v436, 96
    %v582 = vpop.permute.xlu0 %581
    %v583 = vsel %vm447, %v436, 0
    %v585 = vsel %vm447, %v582, 0
    %587 = vmatpush.xpose.msra.mxu0 0.0
    %588 = vmatpush.xpose.msra.mxu0 0.0
    %589 = vmatpush.xpose.msra.mxu0 0.0
    %590 = vmatpush.xpose.msra.mxu0 0.0
    %591 = vmatpush.xpose.msra.mxu0 0.0
    %592 = vmatpush.xpose.msra.mxu0 0.0
    %593 = vmatpush.xpose.msra.mxu0 0.0
    %594 = vmatpush.xpose.msra.mxu0 0.0
    %595 = vmatpush.xpose.msra.mxu0 0.0
    %596 = vmatpush.xpose.msra.mxu0 0.0
    %597 = vmatpush.xpose.msra.mxu0 0.0
    %598 = vmatpush.xpose.msra.mxu0 0.0
    %599 = vmatpush.xpose.msra.mxu0 0.0
    %600 = vmatpush.xpose.msra.mxu0 0.0
    %601 = vmatpush.xpose.msra.mxu0 0.0
    %602 = vmatpush.xpose.msra.mxu0 %v585
    %603 = vmatmul.f32.gmra.mxu0 %v583
    %v604 = vpop.f32.mrf.mxu0
    %v605 = vadd.f32 0.0, %v604
    %606 = vdwg.mxu0
    %608 = vrot.lane.b32.xlu0 %v439, 96
    %v609 = vpop.permute.xlu0 %608
    %v610 = vsel %vm447, %v439, 0
    %v612 = vsel %vm447, %v609, 0
    %614 = vmatpush.xpose.msra.mxu0 0.0
    %615 = vmatpush.xpose.msra.mxu0 0.0
    %616 = vmatpush.xpose.msra.mxu0 0.0
    %617 = vmatpush.xpose.msra.mxu0 0.0
    %618 = vmatpush.xpose.msra.mxu0 0.0
    %619 = vmatpush.xpose.msra.mxu0 0.0
    %620 = vmatpush.xpose.msra.mxu0 0.0
    %621 = vmatpush.xpose.msra.mxu0 0.0
    %622 = vmatpush.xpose.msra.mxu0 0.0
    %623 = vmatpush.xpose.msra.mxu0 0.0
    %624 = vmatpush.xpose.msra.mxu0 0.0
    %625 = vmatpush.xpose.msra.mxu0 0.0
    %626 = vmatpush.xpose.msra.mxu0 0.0
    %627 = vmatpush.xpose.msra.mxu0 0.0
    %628 = vmatpush.xpose.msra.mxu0 0.0
    %629 = vmatpush.xpose.msra.mxu0 %v612
    %630 = vmatmul.f32.gmra.mxu0 %v610
    %v631 = vpop.f32.mrf.mxu0
    %v632 = vadd.f32 0.0, %v631
    %633 = vdwg.mxu0
    %635 = vrot.lane.b32.xlu0 %v442, 96
    %v636 = vpop.permute.xlu0 %635
    %v637 = vsel %vm447, %v442, 0
    %v639 = vsel %vm447, %v636, 0
    %641 = vmatpush.xpose.msra.mxu0 0.0
    %642 = vmatpush.xpose.msra.mxu0 0.0
    %643 = vmatpush.xpose.msra.mxu0 0.0
    %644 = vmatpush.xpose.msra.mxu0 0.0
    %645 = vmatpush.xpose.msra.mxu0 0.0
    %646 = vmatpush.xpose.msra.mxu0 0.0
    %647 = vmatpush.xpose.msra.mxu0 0.0
    %648 = vmatpush.xpose.msra.mxu0 0.0
    %649 = vmatpush.xpose.msra.mxu0 0.0
    %650 = vmatpush.xpose.msra.mxu0 0.0
    %651 = vmatpush.xpose.msra.mxu0 0.0
    %652 = vmatpush.xpose.msra.mxu0 0.0
    %653 = vmatpush.xpose.msra.mxu0 0.0
    %654 = vmatpush.xpose.msra.mxu0 0.0
    %655 = vmatpush.xpose.msra.mxu0 0.0
    %656 = vmatpush.xpose.msra.mxu0 %v639
    %657 = vmatmul.f32.gmra.mxu0 %v637
    %v658 = vpop.f32.mrf.mxu0
    %v659 = vadd.f32 0.0, %v658
    %660 = vdwg.mxu0
    %v661 = vsel %vm447, %v470, -inf
    %662 = vmax.xlane.f32.xlu0 %v661
    %v663 = vpop.xlane.xlu0 %662
    %v664 = vsel %vm447, %v497, -inf
    %665 = vmax.xlane.f32.xlu0 %v664
    %v666 = vpop.xlane.xlu0 %665
    %v667 = vsel %vm447, %v524, -inf
    %668 = vmax.xlane.f32.xlu0 %v667
    %v669 = vpop.xlane.xlu0 %668
    %v670 = vsel %vm447, %v551, -inf
    %671 = vmax.xlane.f32.xlu0 %v670
    %v672 = vpop.xlane.xlu0 %671
    %v673 = vsel %vm447, %v578, -inf
    %674 = vmax.xlane.f32.xlu0 %v673
    %v675 = vpop.xlane.xlu0 %674
    %v676 = vsel %vm447, %v605, -inf
    %677 = vmax.xlane.f32.xlu0 %v676
    %v678 = vpop.xlane.xlu0 %677
    %v679 = vsel %vm447, %v632, -inf
    %680 = vmax.xlane.f32.xlu0 %v679
    %v681 = vpop.xlane.xlu0 %680
    %v682 = vsel %vm447, %v659, -inf
    %683 = vmax.xlane.f32.xlu0 %v682
    %v684 = vpop.xlane.xlu0 %683
    %v685 = vsub.f32 %v470, %v663
    %v686 = vsub.f32 %v497, %v666
    %v687 = vsub.f32 %v524, %v669
    %v688 = vsub.f32 %v551, %v672
    %v689 = vsub.f32 %v578, %v675
    %v690 = vsub.f32 %v605, %v678
    %v691 = vsub.f32 %v632, %v681
    %v692 = vsub.f32 %v659, %v684
    %v693 = vmul.f32 %v685, 1.442695
    %v694 = vpow.pop %v693
    %v695 = vmul.f32 %v686, 1.442695
    %v696 = vpow.pop %v695
    %v697 = vmul.f32 %v687, 1.442695
    %v698 = vpow.pop %v697
    %v699 = vmul.f32 %v688, 1.442695
    %v700 = vpow.pop %v699
    %v701 = vmul.f32 %v689, 1.442695
    %v702 = vpow.pop %v701
    %v703 = vmul.f32 %v690, 1.442695
    %v704 = vpow.pop %v703
    %v705 = vmul.f32 %v691, 1.442695
    %v706 = vpow.pop %v705
    %v707 = vmul.f32 %v692, 1.442695
    %v708 = vpow.pop %v707
    %v709 = vsel %vm447, %v694, 0.0
    %710 = vadd.xlane.f32.xlu0 %v709
    %v711 = vpop.xlane.xlu0 %710
    %v712 = vsel %vm447, %v696, 0.0
    %713 = vadd.xlane.f32.xlu0 %v712
    %v714 = vpop.xlane.xlu0 %713
    %v715 = vsel %vm447, %v698, 0.0
    %716 = vadd.xlane.f32.xlu0 %v715
    %v717 = vpop.xlane.xlu0 %716
    %v718 = vsel %vm447, %v700, 0.0
    %719 = vadd.xlane.f32.xlu0 %v718
    %v720 = vpop.xlane.xlu0 %719
    %v721 = vsel %vm447, %v702, 0.0
    %722 = vadd.xlane.f32.xlu0 %v721
    %v723 = vpop.xlane.xlu0 %722
    %v724 = vsel %vm447, %v704, 0.0
    %725 = vadd.xlane.f32.xlu0 %v724
    %v726 = vpop.xlane.xlu0 %725
    %v727 = vsel %vm447, %v706, 0.0
    %728 = vadd.xlane.f32.xlu0 %v727
    %v729 = vpop.xlane.xlu0 %728
    %v730 = vsel %vm447, %v708, 0.0
    %731 = vadd.xlane.f32.xlu0 %v730
    %v732 = vpop.xlane.xlu0 %731
    %v733 = vrcp.pop %v711
    %v734 = vmul.f32 %v711, %v733
    %v735 = vsub.f32 1.0, %v734
    %v736 = vmul.f32 %v733, %v735
    %v737 = vadd.f32 %v733, %v736
    %vm738 = vweird.f32 %v711
    %vm739 = vweird.f32 %v733
    %vm740 = vmor %vm738, %vm739
    %v741 = vsel %vm740, %v733, %v737
    %v742 = vand.u32 2147483647, %v711
    %vm743 = vcmp.eq.f32.partialorder %v742, 8.507059e+37
    %v744 = vand.u32 %v711, 2147483648
    %v745 = vor.u32 1.1754944e-38, %v744
    %v746 = vsel %vm743, %v745, %v741
    %v747 = vmul.f32 %v694, %v746
    %v748 = vrcp.pop %v714
    %v749 = vmul.f32 %v714, %v748
    %v750 = vsub.f32 1.0, %v749
    %v751 = vmul.f32 %v748, %v750
    %v752 = vadd.f32 %v748, %v751
    %vm753 = vweird.f32 %v714
    %vm754 = vweird.f32 %v748
    %vm755 = vmor %vm753, %vm754
    %v756 = vsel %vm755, %v748, %v752
    %v757 = vand.u32 2147483647, %v714
    %vm758 = vcmp.eq.f32.partialorder %v757, 8.507059e+37
    %v759 = vand.u32 %v714, 2147483648
    %v760 = vor.u32 1.1754944e-38, %v759
    %v761 = vsel %vm758, %v760, %v756
    %v762 = vmul.f32 %v696, %v761
    %v763 = vrcp.pop %v717
    %v764 = vmul.f32 %v717, %v763
    %v765 = vsub.f32 1.0, %v764
    %v766 = vmul.f32 %v763, %v765
    %v767 = vadd.f32 %v763, %v766
    %vm768 = vweird.f32 %v717
    %vm769 = vweird.f32 %v763
    %vm770 = vmor %vm768, %vm769
    %v771 = vsel %vm770, %v763, %v767
    %v772 = vand.u32 2147483647, %v717
    %vm773 = vcmp.eq.f32.partialorder %v772, 8.507059e+37
    %v774 = vand.u32 %v717, 2147483648
    %v775 = vor.u32 1.1754944e-38, %v774
    %v776 = vsel %vm773, %v775, %v771
    %v777 = vmul.f32 %v698, %v776
    %v778 = vrcp.pop %v720
    %v779 = vmul.f32 %v720, %v778
    %v780 = vsub.f32 1.0, %v779
    %v781 = vmul.f32 %v778, %v780
    %v782 = vadd.f32 %v778, %v781
    %vm783 = vweird.f32 %v720
    %vm784 = vweird.f32 %v778
    %vm785 = vmor %vm783, %vm784
    %v786 = vsel %vm785, %v778, %v782
    %v787 = vand.u32 2147483647, %v720
    %vm788 = vcmp.eq.f32.partialorder %v787, 8.507059e+37
    %v789 = vand.u32 %v720, 2147483648
    %v790 = vor.u32 1.1754944e-38, %v789
    %v791 = vsel %vm788, %v790, %v786
    %v792 = vmul.f32 %v700, %v791
    %v793 = vrcp.pop %v723
    %v794 = vmul.f32 %v723, %v793
    %v795 = vsub.f32 1.0, %v794
    %v796 = vmul.f32 %v793, %v795
    %v797 = vadd.f32 %v793, %v796
    %vm798 = vweird.f32 %v723
    %vm799 = vweird.f32 %v793
    %vm800 = vmor %vm798, %vm799
    %v801 = vsel %vm800, %v793, %v797
    %v802 = vand.u32 2147483647, %v723
    %vm803 = vcmp.eq.f32.partialorder %v802, 8.507059e+37
    %v804 = vand.u32 %v723, 2147483648
    %v805 = vor.u32 1.1754944e-38, %v804
    %v806 = vsel %vm803, %v805, %v801
    %v807 = vmul.f32 %v702, %v806
    %v808 = vrcp.pop %v726
    %v809 = vmul.f32 %v726, %v808
    %v810 = vsub.f32 1.0, %v809
    %v811 = vmul.f32 %v808, %v810
    %v812 = vadd.f32 %v808, %v811
    %vm813 = vweird.f32 %v726
    %vm814 = vweird.f32 %v808
    %vm815 = vmor %vm813, %vm814
    %v816 = vsel %vm815, %v808, %v812
    %v817 = vand.u32 2147483647, %v726
    %vm818 = vcmp.eq.f32.partialorder %v817, 8.507059e+37
    %v819 = vand.u32 %v726, 2147483648
    %v820 = vor.u32 1.1754944e-38, %v819
    %v821 = vsel %vm818, %v820, %v816
    %v822 = vmul.f32 %v704, %v821
    %v823 = vrcp.pop %v729
    %v824 = vmul.f32 %v729, %v823
    %v825 = vsub.f32 1.0, %v824
    %v826 = vmul.f32 %v823, %v825
    %v827 = vadd.f32 %v823, %v826
    %vm828 = vweird.f32 %v729
    %vm829 = vweird.f32 %v823
    %vm830 = vmor %vm828, %vm829
    %v831 = vsel %vm830, %v823, %v827
    %v832 = vand.u32 2147483647, %v729
    %vm833 = vcmp.eq.f32.partialorder %v832, 8.507059e+37
    %v834 = vand.u32 %v729, 2147483648
    %v835 = vor.u32 1.1754944e-38, %v834
    %v836 = vsel %vm833, %v835, %v831
    %v837 = vmul.f32 %v706, %v836
    %v838 = vrcp.pop %v732
    %v839 = vmul.f32 %v732, %v838
    %v840 = vsub.f32 1.0, %v839
    %v841 = vmul.f32 %v838, %v840
    %v842 = vadd.f32 %v838, %v841
    %vm843 = vweird.f32 %v732
    %vm844 = vweird.f32 %v838
    %vm845 = vmor %vm843, %vm844
    %v846 = vsel %vm845, %v838, %v842
    %v847 = vand.u32 2147483647, %v732
    %vm848 = vcmp.eq.f32.partialorder %v847, 8.507059e+37
    %v849 = vand.u32 %v732, 2147483648
    %v850 = vor.u32 1.1754944e-38, %v849
    %v851 = vsel %vm848, %v850, %v846
    %v852 = vmul.f32 %v708, %v851
    %853 = vrot.lane.b32.xlu0 %v421, 64
    %v854 = vpop.permute.xlu0 %853
    %v857 = vsel %vm447, %v747, 0
    %859 = vmatpush.msra.mxu0 0.0
    %860 = vmatpush.msra.mxu0 0.0
    %861 = vmatpush.msra.mxu0 0.0
    %862 = vmatpush.msra.mxu0 0.0
    %863 = vmatpush.msra.mxu0 0.0
    %864 = vmatpush.msra.mxu0 0.0
    %865 = vmatpush.msra.mxu0 0.0
    %866 = vmatpush.msra.mxu0 0.0
    %867 = vmatpush.msra.mxu0 0.0
    %868 = vmatpush.msra.mxu0 0.0
    %869 = vmatpush.msra.mxu0 0.0
    %870 = vmatpush.msra.mxu0 0.0
    %871 = vmatpush.msra.mxu0 0.0
    %872 = vmatpush.msra.mxu0 0.0
    %873 = vmatpush.msra.mxu0 0.0
    %874 = vmatpush.msra.mxu0 %v854
    %875 = vmatmul.f32.gmra.mxu0 %v857
    %v876 = vpop.f32.mrf.mxu0
    %v877 = vadd.f32 0.0, %v876
    %878 = vdwg.mxu0
    %879 = vrot.lane.b32.xlu0 %v424, 64
    %v880 = vpop.permute.xlu0 %879
    %v883 = vsel %vm447, %v762, 0
    %885 = vmatpush.msra.mxu0 0.0
    %886 = vmatpush.msra.mxu0 0.0
    %887 = vmatpush.msra.mxu0 0.0
    %888 = vmatpush.msra.mxu0 0.0
    %889 = vmatpush.msra.mxu0 0.0
    %890 = vmatpush.msra.mxu0 0.0
    %891 = vmatpush.msra.mxu0 0.0
    %892 = vmatpush.msra.mxu0 0.0
    %893 = vmatpush.msra.mxu0 0.0
    %894 = vmatpush.msra.mxu0 0.0
    %895 = vmatpush.msra.mxu0 0.0
    %896 = vmatpush.msra.mxu0 0.0
    %897 = vmatpush.msra.mxu0 0.0
    %898 = vmatpush.msra.mxu0 0.0
    %899 = vmatpush.msra.mxu0 0.0
    %900 = vmatpush.msra.mxu0 %v880
    %901 = vmatmul.f32.gmra.mxu0 %v883
    %v902 = vpop.f32.mrf.mxu0
    %v903 = vadd.f32 0.0, %v902
    %904 = vdwg.mxu0
    %905 = vrot.lane.b32.xlu0 %v427, 64
    %v906 = vpop.permute.xlu0 %905
    %v909 = vsel %vm447, %v777, 0
    %911 = vmatpush.msra.mxu0 0.0
    %912 = vmatpush.msra.mxu0 0.0
    %913 = vmatpush.msra.mxu0 0.0
    %914 = vmatpush.msra.mxu0 0.0
    %915 = vmatpush.msra.mxu0 0.0
    %916 = vmatpush.msra.mxu0 0.0
    %917 = vmatpush.msra.mxu0 0.0
    %918 = vmatpush.msra.mxu0 0.0
    %919 = vmatpush.msra.mxu0 0.0
    %920 = vmatpush.msra.mxu0 0.0
    %921 = vmatpush.msra.mxu0 0.0
    %922 = vmatpush.msra.mxu0 0.0
    %923 = vmatpush.msra.mxu0 0.0
    %924 = vmatpush.msra.mxu0 0.0
    %925 = vmatpush.msra.mxu0 0.0
    %926 = vmatpush.msra.mxu0 %v906
    %927 = vmatmul.f32.gmra.mxu0 %v909
    %v928 = vpop.f32.mrf.mxu0
    %v929 = vadd.f32 0.0, %v928
    %930 = vdwg.mxu0
    %931 = vrot.lane.b32.xlu0 %v430, 64
    %v932 = vpop.permute.xlu0 %931
    %v935 = vsel %vm447, %v792, 0
    %937 = vmatpush.msra.mxu0 0.0
    %938 = vmatpush.msra.mxu0 0.0
    %939 = vmatpush.msra.mxu0 0.0
    %940 = vmatpush.msra.mxu0 0.0
    %941 = vmatpush.msra.mxu0 0.0
    %942 = vmatpush.msra.mxu0 0.0
    %943 = vmatpush.msra.mxu0 0.0
    %944 = vmatpush.msra.mxu0 0.0
    %945 = vmatpush.msra.mxu0 0.0
    %946 = vmatpush.msra.mxu0 0.0
    %947 = vmatpush.msra.mxu0 0.0
    %948 = vmatpush.msra.mxu0 0.0
    %949 = vmatpush.msra.mxu0 0.0
    %950 = vmatpush.msra.mxu0 0.0
    %951 = vmatpush.msra.mxu0 0.0
    %952 = vmatpush.msra.mxu0 %v932
    %953 = vmatmul.f32.gmra.mxu0 %v935
    %v954 = vpop.f32.mrf.mxu0
    %v955 = vadd.f32 0.0, %v954
    %956 = vdwg.mxu0
    %957 = vrot.lane.b32.xlu0 %v433, 64
    %v958 = vpop.permute.xlu0 %957
    %v961 = vsel %vm447, %v807, 0
    %963 = vmatpush.msra.mxu0 0.0
    %964 = vmatpush.msra.mxu0 0.0
    %965 = vmatpush.msra.mxu0 0.0
    %966 = vmatpush.msra.mxu0 0.0
    %967 = vmatpush.msra.mxu0 0.0
    %968 = vmatpush.msra.mxu0 0.0
    %969 = vmatpush.msra.mxu0 0.0
    %970 = vmatpush.msra.mxu0 0.0
    %971 = vmatpush.msra.mxu0 0.0
    %972 = vmatpush.msra.mxu0 0.0
    %973 = vmatpush.msra.mxu0 0.0
    %974 = vmatpush.msra.mxu0 0.0
    %975 = vmatpush.msra.mxu0 0.0
    %976 = vmatpush.msra.mxu0 0.0
    %977 = vmatpush.msra.mxu0 0.0
    %978 = vmatpush.msra.mxu0 %v958
    %979 = vmatmul.f32.gmra.mxu0 %v961
    %v980 = vpop.f32.mrf.mxu0
    %v981 = vadd.f32 0.0, %v980
    %982 = vdwg.mxu0
    %983 = vrot.lane.b32.xlu0 %v436, 64
    %v984 = vpop.permute.xlu0 %983
    %v987 = vsel %vm447, %v822, 0
    %989 = vmatpush.msra.mxu0 0.0
    %990 = vmatpush.msra.mxu0 0.0
    %991 = vmatpush.msra.mxu0 0.0
    %992 = vmatpush.msra.mxu0 0.0
    %993 = vmatpush.msra.mxu0 0.0
    %994 = vmatpush.msra.mxu0 0.0
    %995 = vmatpush.msra.mxu0 0.0
    %996 = vmatpush.msra.mxu0 0.0
    %997 = vmatpush.msra.mxu0 0.0
    %998 = vmatpush.msra.mxu0 0.0
    %999 = vmatpush.msra.mxu0 0.0
    %1000 = vmatpush.msra.mxu0 0.0
    %1001 = vmatpush.msra.mxu0 0.0
    %1002 = vmatpush.msra.mxu0 0.0
    %1003 = vmatpush.msra.mxu0 0.0
    %1004 = vmatpush.msra.mxu0 %v984
    %1005 = vmatmul.f32.gmra.mxu0 %v987
    %v1006 = vpop.f32.mrf.mxu0
    %v1007 = vadd.f32 0.0, %v1006
    %1008 = vdwg.mxu0
    %1009 = vrot.lane.b32.xlu0 %v439, 64
    %v1010 = vpop.permute.xlu0 %1009
    %v1013 = vsel %vm447, %v837, 0
    %1015 = vmatpush.msra.mxu0 0.0
    %1016 = vmatpush.msra.mxu0 0.0
    %1017 = vmatpush.msra.mxu0 0.0
    %1018 = vmatpush.msra.mxu0 0.0
    %1019 = vmatpush.msra.mxu0 0.0
    %1020 = vmatpush.msra.mxu0 0.0
    %1021 = vmatpush.msra.mxu0 0.0
    %1022 = vmatpush.msra.mxu0 0.0
    %1023 = vmatpush.msra.mxu0 0.0
    %1024 = vmatpush.msra.mxu0 0.0
    %1025 = vmatpush.msra.mxu0 0.0
    %1026 = vmatpush.msra.mxu0 0.0
    %1027 = vmatpush.msra.mxu0 0.0
    %1028 = vmatpush.msra.mxu0 0.0
    %1029 = vmatpush.msra.mxu0 0.0
    %1030 = vmatpush.msra.mxu0 %v1010
    %1031 = vmatmul.f32.gmra.mxu0 %v1013
    %v1032 = vpop.f32.mrf.mxu0
    %v1033 = vadd.f32 0.0, %v1032
    %1034 = vdwg.mxu0
    %1035 = vrot.lane.b32.xlu0 %v442, 64
    %v1036 = vpop.permute.xlu0 %1035
    %v1039 = vsel %vm447, %v852, 0
    %1041 = vmatpush.msra.mxu0 0.0
    %1042 = vmatpush.msra.mxu0 0.0
    %1043 = vmatpush.msra.mxu0 0.0
    %1044 = vmatpush.msra.mxu0 0.0
    %1045 = vmatpush.msra.mxu0 0.0
    %1046 = vmatpush.msra.mxu0 0.0
    %1047 = vmatpush.msra.mxu0 0.0
    %1048 = vmatpush.msra.mxu0 0.0
    %1049 = vmatpush.msra.mxu0 0.0
    %1050 = vmatpush.msra.mxu0 0.0
    %1051 = vmatpush.msra.mxu0 0.0
    %1052 = vmatpush.msra.mxu0 0.0
    %1053 = vmatpush.msra.mxu0 0.0
    %1054 = vmatpush.msra.mxu0 0.0
    %1055 = vmatpush.msra.mxu0 0.0
    %1056 = vmatpush.msra.mxu0 %v1036
    %1057 = vmatmul.f32.gmra.mxu0 %v1039
    %v1058 = vpop.f32.mrf.mxu0
    %v1059 = vadd.f32 0.0, %v1058
    %1060 = vdwg.mxu0
    %1061 = vrot.lane.b32.xlu0 %v421, 120
    %v1062 = vpop.permute.xlu0 %1061
    %1063 = vrot.lane.b32.xlu0 %v421, 88
    %v1064 = vpop.permute.xlu0 %1063
    %v1065 = vsel %vm447, %v1062, 0
    %v1067 = vsel %vm447, %v1064, 0
    %1069 = vmatpush.xpose.msra.mxu0 0.0
    %1070 = vmatpush.xpose.msra.mxu0 0.0
    %1071 = vmatpush.xpose.msra.mxu0 0.0
    %1072 = vmatpush.xpose.msra.mxu0 0.0
    %1073 = vmatpush.xpose.msra.mxu0 0.0
    %1074 = vmatpush.xpose.msra.mxu0 0.0
    %1075 = vmatpush.xpose.msra.mxu0 0.0
    %1076 = vmatpush.xpose.msra.mxu0 0.0
    %1077 = vmatpush.xpose.msra.mxu0 0.0
    %1078 = vmatpush.xpose.msra.mxu0 0.0
    %1079 = vmatpush.xpose.msra.mxu0 0.0
    %1080 = vmatpush.xpose.msra.mxu0 0.0
    %1081 = vmatpush.xpose.msra.mxu0 0.0
    %1082 = vmatpush.xpose.msra.mxu0 0.0
    %1083 = vmatpush.xpose.msra.mxu0 0.0
    %1084 = vmatpush.xpose.msra.mxu0 %v1067
    %1085 = vmatmul.f32.gmra.mxu0 %v1065
    %v1086 = vpop.f32.mrf.mxu0
    %v1087 = vadd.f32 0.0, %v1086
    %1088 = vdwg.mxu0
    %1089 = vrot.lane.b32.xlu0 %v424, 120
    %v1090 = vpop.permute.xlu0 %1089
    %1091 = vrot.lane.b32.xlu0 %v424, 88
    %v1092 = vpop.permute.xlu0 %1091
    %v1093 = vsel %vm447, %v1090, 0
    %v1095 = vsel %vm447, %v1092, 0
    %1097 = vmatpush.xpose.msra.mxu0 0.0
    %1098 = vmatpush.xpose.msra.mxu0 0.0
    %1099 = vmatpush.xpose.msra.mxu0 0.0
    %1100 = vmatpush.xpose.msra.mxu0 0.0
    %1101 = vmatpush.xpose.msra.mxu0 0.0
    %1102 = vmatpush.xpose.msra.mxu0 0.0
    %1103 = vmatpush.xpose.msra.mxu0 0.0
    %1104 = vmatpush.xpose.msra.mxu0 0.0
    %1105 = vmatpush.xpose.msra.mxu0 0.0
    %1106 = vmatpush.xpose.msra.mxu0 0.0
    %1107 = vmatpush.xpose.msra.mxu0 0.0
    %1108 = vmatpush.xpose.msra.mxu0 0.0
    %1109 = vmatpush.xpose.msra.mxu0 0.0
    %1110 = vmatpush.xpose.msra.mxu0 0.0
    %1111 = vmatpush.xpose.msra.mxu0 0.0
    %1112 = vmatpush.xpose.msra.mxu0 %v1095
    %1113 = vmatmul.f32.gmra.mxu0 %v1093
    %v1114 = vpop.f32.mrf.mxu0
    %v1115 = vadd.f32 0.0, %v1114
    %1116 = vdwg.mxu0
    %1117 = vrot.lane.b32.xlu0 %v427, 120
    %v1118 = vpop.permute.xlu0 %1117
    %1119 = vrot.lane.b32.xlu0 %v427, 88
    %v1120 = vpop.permute.xlu0 %1119
    %v1121 = vsel %vm447, %v1118, 0
    %v1123 = vsel %vm447, %v1120, 0
    %1125 = vmatpush.xpose.msra.mxu0 0.0
    %1126 = vmatpush.xpose.msra.mxu0 0.0
    %1127 = vmatpush.xpose.msra.mxu0 0.0
    %1128 = vmatpush.xpose.msra.mxu0 0.0
    %1129 = vmatpush.xpose.msra.mxu0 0.0
    %1130 = vmatpush.xpose.msra.mxu0 0.0
    %1131 = vmatpush.xpose.msra.mxu0 0.0
    %1132 = vmatpush.xpose.msra.mxu0 0.0
    %1133 = vmatpush.xpose.msra.mxu0 0.0
    %1134 = vmatpush.xpose.msra.mxu0 0.0
    %1135 = vmatpush.xpose.msra.mxu0 0.0
    %1136 = vmatpush.xpose.msra.mxu0 0.0
    %1137 = vmatpush.xpose.msra.mxu0 0.0
    %1138 = vmatpush.xpose.msra.mxu0 0.0
    %1139 = vmatpush.xpose.msra.mxu0 0.0
    %1140 = vmatpush.xpose.msra.mxu0 %v1123
    %1141 = vmatmul.f32.gmra.mxu0 %v1121
    %v1142 = vpop.f32.mrf.mxu0
    %v1143 = vadd.f32 0.0, %v1142
    %1144 = vdwg.mxu0
    %1145 = vrot.lane.b32.xlu0 %v430, 120
    %v1146 = vpop.permute.xlu0 %1145
    %1147 = vrot.lane.b32.xlu0 %v430, 88
    %v1148 = vpop.permute.xlu0 %1147
    %v1149 = vsel %vm447, %v1146, 0
    %v1151 = vsel %vm447, %v1148, 0
    %1153 = vmatpush.xpose.msra.mxu0 0.0
    %1154 = vmatpush.xpose.msra.mxu0 0.0
    %1155 = vmatpush.xpose.msra.mxu0 0.0
    %1156 = vmatpush.xpose.msra.mxu0 0.0
    %1157 = vmatpush.xpose.msra.mxu0 0.0
    %1158 = vmatpush.xpose.msra.mxu0 0.0
    %1159 = vmatpush.xpose.msra.mxu0 0.0
    %1160 = vmatpush.xpose.msra.mxu0 0.0
    %1161 = vmatpush.xpose.msra.mxu0 0.0
    %1162 = vmatpush.xpose.msra.mxu0 0.0
    %1163 = vmatpush.xpose.msra.mxu0 0.0
    %1164 = vmatpush.xpose.msra.mxu0 0.0
    %1165 = vmatpush.xpose.msra.mxu0 0.0
    %1166 = vmatpush.xpose.msra.mxu0 0.0
    %1167 = vmatpush.xpose.msra.mxu0 0.0
    %1168 = vmatpush.xpose.msra.mxu0 %v1151
    %1169 = vmatmul.f32.gmra.mxu0 %v1149
    %v1170 = vpop.f32.mrf.mxu0
    %v1171 = vadd.f32 0.0, %v1170
    %1172 = vdwg.mxu0
    %1173 = vrot.lane.b32.xlu0 %v433, 120
    %v1174 = vpop.permute.xlu0 %1173
    %1175 = vrot.lane.b32.xlu0 %v433, 88
    %v1176 = vpop.permute.xlu0 %1175
    %v1177 = vsel %vm447, %v1174, 0
    %v1179 = vsel %vm447, %v1176, 0
    %1181 = vmatpush.xpose.msra.mxu0 0.0
    %1182 = vmatpush.xpose.msra.mxu0 0.0
    %1183 = vmatpush.xpose.msra.mxu0 0.0
    %1184 = vmatpush.xpose.msra.mxu0 0.0
    %1185 = vmatpush.xpose.msra.mxu0 0.0
    %1186 = vmatpush.xpose.msra.mxu0 0.0
    %1187 = vmatpush.xpose.msra.mxu0 0.0
    %1188 = vmatpush.xpose.msra.mxu0 0.0
    %1189 = vmatpush.xpose.msra.mxu0 0.0
    %1190 = vmatpush.xpose.msra.mxu0 0.0
    %1191 = vmatpush.xpose.msra.mxu0 0.0
    %1192 = vmatpush.xpose.msra.mxu0 0.0
    %1193 = vmatpush.xpose.msra.mxu0 0.0
    %1194 = vmatpush.xpose.msra.mxu0 0.0
    %1195 = vmatpush.xpose.msra.mxu0 0.0
    %1196 = vmatpush.xpose.msra.mxu0 %v1179
    %1197 = vmatmul.f32.gmra.mxu0 %v1177
    %v1198 = vpop.f32.mrf.mxu0
    %v1199 = vadd.f32 0.0, %v1198
    %1200 = vdwg.mxu0
    %1201 = vrot.lane.b32.xlu0 %v436, 120
    %v1202 = vpop.permute.xlu0 %1201
    %1203 = vrot.lane.b32.xlu0 %v436, 88
    %v1204 = vpop.permute.xlu0 %1203
    %v1205 = vsel %vm447, %v1202, 0
    %v1207 = vsel %vm447, %v1204, 0
    %1209 = vmatpush.xpose.msra.mxu0 0.0
    %1210 = vmatpush.xpose.msra.mxu0 0.0
    %1211 = vmatpush.xpose.msra.mxu0 0.0
    %1212 = vmatpush.xpose.msra.mxu0 0.0
    %1213 = vmatpush.xpose.msra.mxu0 0.0
    %1214 = vmatpush.xpose.msra.mxu0 0.0
    %1215 = vmatpush.xpose.msra.mxu0 0.0
    %1216 = vmatpush.xpose.msra.mxu0 0.0
    %1217 = vmatpush.xpose.msra.mxu0 0.0
    %1218 = vmatpush.xpose.msra.mxu0 0.0
    %1219 = vmatpush.xpose.msra.mxu0 0.0
    %1220 = vmatpush.xpose.msra.mxu0 0.0
    %1221 = vmatpush.xpose.msra.mxu0 0.0
    %1222 = vmatpush.xpose.msra.mxu0 0.0
    %1223 = vmatpush.xpose.msra.mxu0 0.0
    %1224 = vmatpush.xpose.msra.mxu0 %v1207
    %1225 = vmatmul.f32.gmra.mxu0 %v1205
    %v1226 = vpop.f32.mrf.mxu0
    %v1227 = vadd.f32 0.0, %v1226
    %1228 = vdwg.mxu0
    %1229 = vrot.lane.b32.xlu0 %v439, 120
    %v1230 = vpop.permute.xlu0 %1229
    %1231 = vrot.lane.b32.xlu0 %v439, 88
    %v1232 = vpop.permute.xlu0 %1231
    %v1233 = vsel %vm447, %v1230, 0
    %v1235 = vsel %vm447, %v1232, 0
    %1237 = vmatpush.xpose.msra.mxu0 0.0
    %1238 = vmatpush.xpose.msra.mxu0 0.0
    %1239 = vmatpush.xpose.msra.mxu0 0.0
    %1240 = vmatpush.xpose.msra.mxu0 0.0
    %1241 = vmatpush.xpose.msra.mxu0 0.0
    %1242 = vmatpush.xpose.msra.mxu0 0.0
    %1243 = vmatpush.xpose.msra.mxu0 0.0
    %1244 = vmatpush.xpose.msra.mxu0 0.0
    %1245 = vmatpush.xpose.msra.mxu0 0.0
    %1246 = vmatpush.xpose.msra.mxu0 0.0
    %1247 = vmatpush.xpose.msra.mxu0 0.0
    %1248 = vmatpush.xpose.msra.mxu0 0.0
    %1249 = vmatpush.xpose.msra.mxu0 0.0
    %1250 = vmatpush.xpose.msra.mxu0 0.0
    %1251 = vmatpush.xpose.msra.mxu0 0.0
    %1252 = vmatpush.xpose.msra.mxu0 %v1235
    %1253 = vmatmul.f32.gmra.mxu0 %v1233
    %v1254 = vpop.f32.mrf.mxu0
    %v1255 = vadd.f32 0.0, %v1254
    %1256 = vdwg.mxu0
    %1257 = vrot.lane.b32.xlu0 %v442, 120
    %v1258 = vpop.permute.xlu0 %1257
    %1259 = vrot.lane.b32.xlu0 %v442, 88
    %v1260 = vpop.permute.xlu0 %1259
    %v1261 = vsel %vm447, %v1258, 0
    %v1263 = vsel %vm447, %v1260, 0
    %1265 = vmatpush.xpose.msra.mxu0 0.0
    %1266 = vmatpush.xpose.msra.mxu0 0.0
    %1267 = vmatpush.xpose.msra.mxu0 0.0
    %1268 = vmatpush.xpose.msra.mxu0 0.0
    %1269 = vmatpush.xpose.msra.mxu0 0.0
    %1270 = vmatpush.xpose.msra.mxu0 0.0
    %1271 = vmatpush.xpose.msra.mxu0 0.0
    %1272 = vmatpush.xpose.msra.mxu0 0.0
    %1273 = vmatpush.xpose.msra.mxu0 0.0
    %1274 = vmatpush.xpose.msra.mxu0 0.0
    %1275 = vmatpush.xpose.msra.mxu0 0.0
    %1276 = vmatpush.xpose.msra.mxu0 0.0
    %1277 = vmatpush.xpose.msra.mxu0 0.0
    %1278 = vmatpush.xpose.msra.mxu0 0.0
    %1279 = vmatpush.xpose.msra.mxu0 0.0
    %1280 = vmatpush.xpose.msra.mxu0 %v1263
    %1281 = vmatmul.f32.gmra.mxu0 %v1261
    %v1282 = vpop.f32.mrf.mxu0
    %v1283 = vadd.f32 0.0, %v1282
    %1284 = vdwg.mxu0
    %v1285 = vsel %vm447, %v1087, -inf
    %1286 = vmax.xlane.f32.xlu0 %v1285
    %v1287 = vpop.xlane.xlu0 %1286
    %v1288 = vsel %vm447, %v1115, -inf
    %1289 = vmax.xlane.f32.xlu0 %v1288
    %v1290 = vpop.xlane.xlu0 %1289
    %v1291 = vsel %vm447, %v1143, -inf
    %1292 = vmax.xlane.f32.xlu0 %v1291
    %v1293 = vpop.xlane.xlu0 %1292
    %v1294 = vsel %vm447, %v1171, -inf
    %1295 = vmax.xlane.f32.xlu0 %v1294
    %v1296 = vpop.xlane.xlu0 %1295
    %v1297 = vsel %vm447, %v1199, -inf
    %1298 = vmax.xlane.f32.xlu0 %v1297
    %v1299 = vpop.xlane.xlu0 %1298
    %v1300 = vsel %vm447, %v1227, -inf
    %1301 = vmax.xlane.f32.xlu0 %v1300
    %v1302 = vpop.xlane.xlu0 %1301
    %v1303 = vsel %vm447, %v1255, -inf
    %1304 = vmax.xlane.f32.xlu0 %v1303
    %v1305 = vpop.xlane.xlu0 %1304
    %v1306 = vsel %vm447, %v1283, -inf
    %1307 = vmax.xlane.f32.xlu0 %v1306
    %v1308 = vpop.xlane.xlu0 %1307
    %v1309 = vsub.f32 %v1087, %v1287
    %v1310 = vsub.f32 %v1115, %v1290
    %v1311 = vsub.f32 %v1143, %v1293
    %v1312 = vsub.f32 %v1171, %v1296
    %v1313 = vsub.f32 %v1199, %v1299
    %v1314 = vsub.f32 %v1227, %v1302
    %v1315 = vsub.f32 %v1255, %v1305
    %v1316 = vsub.f32 %v1283, %v1308
    %v1317 = vmul.f32 %v1309, 1.442695
    %v1318 = vpow.pop %v1317
    %v1319 = vmul.f32 %v1310, 1.442695
    %v1320 = vpow.pop %v1319
    %v1321 = vmul.f32 %v1311, 1.442695
    %v1322 = vpow.pop %v1321
    %v1323 = vmul.f32 %v1312, 1.442695
    %v1324 = vpow.pop %v1323
    %v1325 = vmul.f32 %v1313, 1.442695
    %v1326 = vpow.pop %v1325
    %v1327 = vmul.f32 %v1314, 1.442695
    %v1328 = vpow.pop %v1327
    %v1329 = vmul.f32 %v1315, 1.442695
    %v1330 = vpow.pop %v1329
    %v1331 = vmul.f32 %v1316, 1.442695
    %v1332 = vpow.pop %v1331
    %v1333 = vsel %vm447, %v1318, 0.0
    %1334 = vadd.xlane.f32.xlu0 %v1333
    %v1335 = vpop.xlane.xlu0 %1334
    %v1336 = vsel %vm447, %v1320, 0.0
    %1337 = vadd.xlane.f32.xlu0 %v1336
    %v1338 = vpop.xlane.xlu0 %1337
    %v1339 = vsel %vm447, %v1322, 0.0
    %1340 = vadd.xlane.f32.xlu0 %v1339
    %v1341 = vpop.xlane.xlu0 %1340
    %v1342 = vsel %vm447, %v1324, 0.0
    %1343 = vadd.xlane.f32.xlu0 %v1342
    %v1344 = vpop.xlane.xlu0 %1343
    %v1345 = vsel %vm447, %v1326, 0.0
    %1346 = vadd.xlane.f32.xlu0 %v1345
    %v1347 = vpop.xlane.xlu0 %1346
    %v1348 = vsel %vm447, %v1328, 0.0
    %1349 = vadd.xlane.f32.xlu0 %v1348
    %v1350 = vpop.xlane.xlu0 %1349
    %v1351 = vsel %vm447, %v1330, 0.0
    %1352 = vadd.xlane.f32.xlu0 %v1351
    %v1353 = vpop.xlane.xlu0 %1352
    %v1354 = vsel %vm447, %v1332, 0.0
    %1355 = vadd.xlane.f32.xlu0 %v1354
    %v1356 = vpop.xlane.xlu0 %1355
    %v1357 = vrcp.pop %v1335
    %v1358 = vmul.f32 %v1335, %v1357
    %v1359 = vsub.f32 1.0, %v1358
    %v1360 = vmul.f32 %v1357, %v1359
    %v1361 = vadd.f32 %v1357, %v1360
    %vm1362 = vweird.f32 %v1335
    %vm1363 = vweird.f32 %v1357
    %vm1364 = vmor %vm1362, %vm1363
    %v1365 = vsel %vm1364, %v1357, %v1361
    %v1366 = vand.u32 2147483647, %v1335
    %vm1367 = vcmp.eq.f32.partialorder %v1366, 8.507059e+37
    %v1368 = vand.u32 %v1335, 2147483648
    %v1369 = vor.u32 1.1754944e-38, %v1368
    %v1370 = vsel %vm1367, %v1369, %v1365
    %v1371 = vmul.f32 %v1318, %v1370
    %v1372 = vrcp.pop %v1338
    %v1373 = vmul.f32 %v1338, %v1372
    %v1374 = vsub.f32 1.0, %v1373
    %v1375 = vmul.f32 %v1372, %v1374
    %v1376 = vadd.f32 %v1372, %v1375
    %vm1377 = vweird.f32 %v1338
    %vm1378 = vweird.f32 %v1372
    %vm1379 = vmor %vm1377, %vm1378
    %v1380 = vsel %vm1379, %v1372, %v1376
    %v1381 = vand.u32 2147483647, %v1338
    %vm1382 = vcmp.eq.f32.partialorder %v1381, 8.507059e+37
    %v1383 = vand.u32 %v1338, 2147483648
    %v1384 = vor.u32 1.1754944e-38, %v1383
    %v1385 = vsel %vm1382, %v1384, %v1380
    %v1386 = vmul.f32 %v1320, %v1385
    %v1387 = vrcp.pop %v1341
    %v1388 = vmul.f32 %v1341, %v1387
    %v1389 = vsub.f32 1.0, %v1388
    %v1390 = vmul.f32 %v1387, %v1389
    %v1391 = vadd.f32 %v1387, %v1390
    %vm1392 = vweird.f32 %v1341
    %vm1393 = vweird.f32 %v1387
    %vm1394 = vmor %vm1392, %vm1393
    %v1395 = vsel %vm1394, %v1387, %v1391
    %v1396 = vand.u32 2147483647, %v1341
    %vm1397 = vcmp.eq.f32.partialorder %v1396, 8.507059e+37
    %v1398 = vand.u32 %v1341, 2147483648
    %v1399 = vor.u32 1.1754944e-38, %v1398
    %v1400 = vsel %vm1397, %v1399, %v1395
    %v1401 = vmul.f32 %v1322, %v1400
    %v1402 = vrcp.pop %v1344
    %v1403 = vmul.f32 %v1344, %v1402
    %v1404 = vsub.f32 1.0, %v1403
    %v1405 = vmul.f32 %v1402, %v1404
    %v1406 = vadd.f32 %v1402, %v1405
    %vm1407 = vweird.f32 %v1344
    %vm1408 = vweird.f32 %v1402
    %vm1409 = vmor %vm1407, %vm1408
    %v1410 = vsel %vm1409, %v1402, %v1406
    %v1411 = vand.u32 2147483647, %v1344
    %vm1412 = vcmp.eq.f32.partialorder %v1411, 8.507059e+37
    %v1413 = vand.u32 %v1344, 2147483648
    %v1414 = vor.u32 1.1754944e-38, %v1413
    %v1415 = vsel %vm1412, %v1414, %v1410
    %v1416 = vmul.f32 %v1324, %v1415
    %v1417 = vrcp.pop %v1347
    %v1418 = vmul.f32 %v1347, %v1417
    %v1419 = vsub.f32 1.0, %v1418
    %v1420 = vmul.f32 %v1417, %v1419
    %v1421 = vadd.f32 %v1417, %v1420
    %vm1422 = vweird.f32 %v1347
    %vm1423 = vweird.f32 %v1417
    %vm1424 = vmor %vm1422, %vm1423
    %v1425 = vsel %vm1424, %v1417, %v1421
    %v1426 = vand.u32 2147483647, %v1347
    %vm1427 = vcmp.eq.f32.partialorder %v1426, 8.507059e+37
    %v1428 = vand.u32 %v1347, 2147483648
    %v1429 = vor.u32 1.1754944e-38, %v1428
    %v1430 = vsel %vm1427, %v1429, %v1425
    %v1431 = vmul.f32 %v1326, %v1430
    %v1432 = vrcp.pop %v1350
    %v1433 = vmul.f32 %v1350, %v1432
    %v1434 = vsub.f32 1.0, %v1433
    %v1435 = vmul.f32 %v1432, %v1434
    %v1436 = vadd.f32 %v1432, %v1435
    %vm1437 = vweird.f32 %v1350
    %vm1438 = vweird.f32 %v1432
    %vm1439 = vmor %vm1437, %vm1438
    %v1440 = vsel %vm1439, %v1432, %v1436
    %v1441 = vand.u32 2147483647, %v1350
    %vm1442 = vcmp.eq.f32.partialorder %v1441, 8.507059e+37
    %v1443 = vand.u32 %v1350, 2147483648
    %v1444 = vor.u32 1.1754944e-38, %v1443
    %v1445 = vsel %vm1442, %v1444, %v1440
    %v1446 = vmul.f32 %v1328, %v1445
    %v1447 = vrcp.pop %v1353
    %v1448 = vmul.f32 %v1353, %v1447
    %v1449 = vsub.f32 1.0, %v1448
    %v1450 = vmul.f32 %v1447, %v1449
    %v1451 = vadd.f32 %v1447, %v1450
    %vm1452 = vweird.f32 %v1353
    %vm1453 = vweird.f32 %v1447
    %vm1454 = vmor %vm1452, %vm1453
    %v1455 = vsel %vm1454, %v1447, %v1451
    %v1456 = vand.u32 2147483647, %v1353
    %vm1457 = vcmp.eq.f32.partialorder %v1456, 8.507059e+37
    %v1458 = vand.u32 %v1353, 2147483648
    %v1459 = vor.u32 1.1754944e-38, %v1458
    %v1460 = vsel %vm1457, %v1459, %v1455
    %v1461 = vmul.f32 %v1330, %v1460
    %v1462 = vrcp.pop %v1356
    %v1463 = vmul.f32 %v1356, %v1462
    %v1464 = vsub.f32 1.0, %v1463
    %v1465 = vmul.f32 %v1462, %v1464
    %v1466 = vadd.f32 %v1462, %v1465
    %vm1467 = vweird.f32 %v1356
    %vm1468 = vweird.f32 %v1462
    %vm1469 = vmor %vm1467, %vm1468
    %v1470 = vsel %vm1469, %v1462, %v1466
    %v1471 = vand.u32 2147483647, %v1356
    %vm1472 = vcmp.eq.f32.partialorder %v1471, 8.507059e+37
    %v1473 = vand.u32 %v1356, 2147483648
    %v1474 = vor.u32 1.1754944e-38, %v1473
    %v1475 = vsel %vm1472, %v1474, %v1470
    %v1476 = vmul.f32 %v1332, %v1475
    %1477 = vrot.lane.b32.xlu0 %v421, 56
    %v1478 = vpop.permute.xlu0 %1477
    %v1481 = vsel %vm447, %v1371, 0
    %1483 = vmatpush.msra.mxu0 0.0
    %1484 = vmatpush.msra.mxu0 0.0
    %1485 = vmatpush.msra.mxu0 0.0
    %1486 = vmatpush.msra.mxu0 0.0
    %1487 = vmatpush.msra.mxu0 0.0
    %1488 = vmatpush.msra.mxu0 0.0
    %1489 = vmatpush.msra.mxu0 0.0
    %1490 = vmatpush.msra.mxu0 0.0
    %1491 = vmatpush.msra.mxu0 0.0
    %1492 = vmatpush.msra.mxu0 0.0
    %1493 = vmatpush.msra.mxu0 0.0
    %1494 = vmatpush.msra.mxu0 0.0
    %1495 = vmatpush.msra.mxu0 0.0
    %1496 = vmatpush.msra.mxu0 0.0
    %1497 = vmatpush.msra.mxu0 0.0
    %1498 = vmatpush.msra.mxu0 %v1478
    %1499 = vmatmul.f32.gmra.mxu0 %v1481
    %v1500 = vpop.f32.mrf.mxu0
    %v1501 = vadd.f32 0.0, %v1500
    %1502 = vdwg.mxu0
    %1503 = vrot.lane.b32.xlu0 %v424, 56
    %v1504 = vpop.permute.xlu0 %1503
    %v1507 = vsel %vm447, %v1386, 0
    %1509 = vmatpush.msra.mxu0 0.0
    %1510 = vmatpush.msra.mxu0 0.0
    %1511 = vmatpush.msra.mxu0 0.0
    %1512 = vmatpush.msra.mxu0 0.0
    %1513 = vmatpush.msra.mxu0 0.0
    %1514 = vmatpush.msra.mxu0 0.0
    %1515 = vmatpush.msra.mxu0 0.0
    %1516 = vmatpush.msra.mxu0 0.0
    %1517 = vmatpush.msra.mxu0 0.0
    %1518 = vmatpush.msra.mxu0 0.0
    %1519 = vmatpush.msra.mxu0 0.0
    %1520 = vmatpush.msra.mxu0 0.0
    %1521 = vmatpush.msra.mxu0 0.0
    %1522 = vmatpush.msra.mxu0 0.0
    %1523 = vmatpush.msra.mxu0 0.0
    %1524 = vmatpush.msra.mxu0 %v1504
    %1525 = vmatmul.f32.gmra.mxu0 %v1507
    %v1526 = vpop.f32.mrf.mxu0
    %v1527 = vadd.f32 0.0, %v1526
    %1528 = vdwg.mxu0
    %1529 = vrot.lane.b32.xlu0 %v427, 56
    %v1530 = vpop.permute.xlu0 %1529
    %v1533 = vsel %vm447, %v1401, 0
    %1535 = vmatpush.msra.mxu0 0.0
    %1536 = vmatpush.msra.mxu0 0.0
    %1537 = vmatpush.msra.mxu0 0.0
    %1538 = vmatpush.msra.mxu0 0.0
    %1539 = vmatpush.msra.mxu0 0.0
    %1540 = vmatpush.msra.mxu0 0.0
    %1541 = vmatpush.msra.mxu0 0.0
    %1542 = vmatpush.msra.mxu0 0.0
    %1543 = vmatpush.msra.mxu0 0.0
    %1544 = vmatpush.msra.mxu0 0.0
    %1545 = vmatpush.msra.mxu0 0.0
    %1546 = vmatpush.msra.mxu0 0.0
    %1547 = vmatpush.msra.mxu0 0.0
    %1548 = vmatpush.msra.mxu0 0.0
    %1549 = vmatpush.msra.mxu0 0.0
    %1550 = vmatpush.msra.mxu0 %v1530
    %1551 = vmatmul.f32.gmra.mxu0 %v1533
    %v1552 = vpop.f32.mrf.mxu0
    %v1553 = vadd.f32 0.0, %v1552
    %1554 = vdwg.mxu0
    %1555 = vrot.lane.b32.xlu0 %v430, 56
    %v1556 = vpop.permute.xlu0 %1555
    %v1559 = vsel %vm447, %v1416, 0
    %1561 = vmatpush.msra.mxu0 0.0
    %1562 = vmatpush.msra.mxu0 0.0
    %1563 = vmatpush.msra.mxu0 0.0
    %1564 = vmatpush.msra.mxu0 0.0
    %1565 = vmatpush.msra.mxu0 0.0
    %1566 = vmatpush.msra.mxu0 0.0
    %1567 = vmatpush.msra.mxu0 0.0
    %1568 = vmatpush.msra.mxu0 0.0
    %1569 = vmatpush.msra.mxu0 0.0
    %1570 = vmatpush.msra.mxu0 0.0
    %1571 = vmatpush.msra.mxu0 0.0
    %1572 = vmatpush.msra.mxu0 0.0
    %1573 = vmatpush.msra.mxu0 0.0
    %1574 = vmatpush.msra.mxu0 0.0
    %1575 = vmatpush.msra.mxu0 0.0
    %1576 = vmatpush.msra.mxu0 %v1556
    %1577 = vmatmul.f32.gmra.mxu0 %v1559
    %v1578 = vpop.f32.mrf.mxu0
    %v1579 = vadd.f32 0.0, %v1578
    %1580 = vdwg.mxu0
    %1581 = vrot.lane.b32.xlu0 %v433, 56
    %v1582 = vpop.permute.xlu0 %1581
    %v1585 = vsel %vm447, %v1431, 0
    %1587 = vmatpush.msra.mxu0 0.0
    %1588 = vmatpush.msra.mxu0 0.0
    %1589 = vmatpush.msra.mxu0 0.0
    %1590 = vmatpush.msra.mxu0 0.0
    %1591 = vmatpush.msra.mxu0 0.0
    %1592 = vmatpush.msra.mxu0 0.0
    %1593 = vmatpush.msra.mxu0 0.0
    %1594 = vmatpush.msra.mxu0 0.0
    %1595 = vmatpush.msra.mxu0 0.0
    %1596 = vmatpush.msra.mxu0 0.0
    %1597 = vmatpush.msra.mxu0 0.0
    %1598 = vmatpush.msra.mxu0 0.0
    %1599 = vmatpush.msra.mxu0 0.0
    %1600 = vmatpush.msra.mxu0 0.0
    %1601 = vmatpush.msra.mxu0 0.0
    %1602 = vmatpush.msra.mxu0 %v1582
    %1603 = vmatmul.f32.gmra.mxu0 %v1585
    %v1604 = vpop.f32.mrf.mxu0
    %v1605 = vadd.f32 0.0, %v1604
    %1606 = vdwg.mxu0
    %1607 = vrot.lane.b32.xlu0 %v436, 56
    %v1608 = vpop.permute.xlu0 %1607
    %v1611 = vsel %vm447, %v1446, 0
    %1613 = vmatpush.msra.mxu0 0.0
    %1614 = vmatpush.msra.mxu0 0.0
    %1615 = vmatpush.msra.mxu0 0.0
    %1616 = vmatpush.msra.mxu0 0.0
    %1617 = vmatpush.msra.mxu0 0.0
    %1618 = vmatpush.msra.mxu0 0.0
    %1619 = vmatpush.msra.mxu0 0.0
    %1620 = vmatpush.msra.mxu0 0.0
    %1621 = vmatpush.msra.mxu0 0.0
    %1622 = vmatpush.msra.mxu0 0.0
    %1623 = vmatpush.msra.mxu0 0.0
    %1624 = vmatpush.msra.mxu0 0.0
    %1625 = vmatpush.msra.mxu0 0.0
    %1626 = vmatpush.msra.mxu0 0.0
    %1627 = vmatpush.msra.mxu0 0.0
    %1628 = vmatpush.msra.mxu0 %v1608
    %1629 = vmatmul.f32.gmra.mxu0 %v1611
    %v1630 = vpop.f32.mrf.mxu0
    %v1631 = vadd.f32 0.0, %v1630
    %1632 = vdwg.mxu0
    %1633 = vrot.lane.b32.xlu0 %v439, 56
    %v1634 = vpop.permute.xlu0 %1633
    %v1637 = vsel %vm447, %v1461, 0
    %1639 = vmatpush.msra.mxu0 0.0
    %1640 = vmatpush.msra.mxu0 0.0
    %1641 = vmatpush.msra.mxu0 0.0
    %1642 = vmatpush.msra.mxu0 0.0
    %1643 = vmatpush.msra.mxu0 0.0
    %1644 = vmatpush.msra.mxu0 0.0
    %1645 = vmatpush.msra.mxu0 0.0
    %1646 = vmatpush.msra.mxu0 0.0
    %1647 = vmatpush.msra.mxu0 0.0
    %1648 = vmatpush.msra.mxu0 0.0
    %1649 = vmatpush.msra.mxu0 0.0
    %1650 = vmatpush.msra.mxu0 0.0
    %1651 = vmatpush.msra.mxu0 0.0
    %1652 = vmatpush.msra.mxu0 0.0
    %1653 = vmatpush.msra.mxu0 0.0
    %1654 = vmatpush.msra.mxu0 %v1634
    %1655 = vmatmul.f32.gmra.mxu0 %v1637
    %v1656 = vpop.f32.mrf.mxu0
    %v1657 = vadd.f32 0.0, %v1656
    %1658 = vdwg.mxu0
    %1659 = vrot.lane.b32.xlu0 %v442, 56
    %v1660 = vpop.permute.xlu0 %1659
    %v1663 = vsel %vm447, %v1476, 0
    %1665 = vmatpush.msra.mxu0 0.0
    %1666 = vmatpush.msra.mxu0 0.0
    %1667 = vmatpush.msra.mxu0 0.0
    %1668 = vmatpush.msra.mxu0 0.0
    %1669 = vmatpush.msra.mxu0 0.0
    %1670 = vmatpush.msra.mxu0 0.0
    %1671 = vmatpush.msra.mxu0 0.0
    %1672 = vmatpush.msra.mxu0 0.0
    %1673 = vmatpush.msra.mxu0 0.0
    %1674 = vmatpush.msra.mxu0 0.0
    %1675 = vmatpush.msra.mxu0 0.0
    %1676 = vmatpush.msra.mxu0 0.0
    %1677 = vmatpush.msra.mxu0 0.0
    %1678 = vmatpush.msra.mxu0 0.0
    %1679 = vmatpush.msra.mxu0 0.0
    %1680 = vmatpush.msra.mxu0 %v1660
    %1681 = vmatmul.f32.gmra.mxu0 %v1663
    %v1682 = vpop.f32.mrf.mxu0
    %v1683 = vadd.f32 0.0, %v1682
    %1684 = vdwg.mxu0
    %1685 = vrot.lane.b32.xlu0 %v421, 112
    %v1686 = vpop.permute.xlu0 %1685
    %1687 = vrot.lane.b32.xlu0 %v421, 80
    %v1688 = vpop.permute.xlu0 %1687
    %v1689 = vsel %vm447, %v1686, 0
    %v1691 = vsel %vm447, %v1688, 0
    %1693 = vmatpush.xpose.msra.mxu0 0.0
    %1694 = vmatpush.xpose.msra.mxu0 0.0
    %1695 = vmatpush.xpose.msra.mxu0 0.0
    %1696 = vmatpush.xpose.msra.mxu0 0.0
    %1697 = vmatpush.xpose.msra.mxu0 0.0
    %1698 = vmatpush.xpose.msra.mxu0 0.0
    %1699 = vmatpush.xpose.msra.mxu0 0.0
    %1700 = vmatpush.xpose.msra.mxu0 0.0
    %1701 = vmatpush.xpose.msra.mxu0 0.0
    %1702 = vmatpush.xpose.msra.mxu0 0.0
    %1703 = vmatpush.xpose.msra.mxu0 0.0
    %1704 = vmatpush.xpose.msra.mxu0 0.0
    %1705 = vmatpush.xpose.msra.mxu0 0.0
    %1706 = vmatpush.xpose.msra.mxu0 0.0
    %1707 = vmatpush.xpose.msra.mxu0 0.0
    %1708 = vmatpush.xpose.msra.mxu0 %v1691
    %1709 = vmatmul.f32.gmra.mxu0 %v1689
    %v1710 = vpop.f32.mrf.mxu0
    %v1711 = vadd.f32 0.0, %v1710
    %1712 = vdwg.mxu0
    %1713 = vrot.lane.b32.xlu0 %v424, 112
    %v1714 = vpop.permute.xlu0 %1713
    %1715 = vrot.lane.b32.xlu0 %v424, 80
    %v1716 = vpop.permute.xlu0 %1715
    %v1717 = vsel %vm447, %v1714, 0
    %v1719 = vsel %vm447, %v1716, 0
    %1721 = vmatpush.xpose.msra.mxu0 0.0
    %1722 = vmatpush.xpose.msra.mxu0 0.0
    %1723 = vmatpush.xpose.msra.mxu0 0.0
    %1724 = vmatpush.xpose.msra.mxu0 0.0
    %1725 = vmatpush.xpose.msra.mxu0 0.0
    %1726 = vmatpush.xpose.msra.mxu0 0.0
    %1727 = vmatpush.xpose.msra.mxu0 0.0
    %1728 = vmatpush.xpose.msra.mxu0 0.0
    %1729 = vmatpush.xpose.msra.mxu0 0.0
    %1730 = vmatpush.xpose.msra.mxu0 0.0
    %1731 = vmatpush.xpose.msra.mxu0 0.0
    %1732 = vmatpush.xpose.msra.mxu0 0.0
    %1733 = vmatpush.xpose.msra.mxu0 0.0
    %1734 = vmatpush.xpose.msra.mxu0 0.0
    %1735 = vmatpush.xpose.msra.mxu0 0.0
    %1736 = vmatpush.xpose.msra.mxu0 %v1719
    %1737 = vmatmul.f32.gmra.mxu0 %v1717
    %v1738 = vpop.f32.mrf.mxu0
    %v1739 = vadd.f32 0.0, %v1738
    %1740 = vdwg.mxu0
    %1741 = vrot.lane.b32.xlu0 %v427, 112
    %v1742 = vpop.permute.xlu0 %1741
    %1743 = vrot.lane.b32.xlu0 %v427, 80
    %v1744 = vpop.permute.xlu0 %1743
    %v1745 = vsel %vm447, %v1742, 0
    %v1747 = vsel %vm447, %v1744, 0
    %1749 = vmatpush.xpose.msra.mxu0 0.0
    %1750 = vmatpush.xpose.msra.mxu0 0.0
    %1751 = vmatpush.xpose.msra.mxu0 0.0
    %1752 = vmatpush.xpose.msra.mxu0 0.0
    %1753 = vmatpush.xpose.msra.mxu0 0.0
    %1754 = vmatpush.xpose.msra.mxu0 0.0
    %1755 = vmatpush.xpose.msra.mxu0 0.0
    %1756 = vmatpush.xpose.msra.mxu0 0.0
    %1757 = vmatpush.xpose.msra.mxu0 0.0
    %1758 = vmatpush.xpose.msra.mxu0 0.0
    %1759 = vmatpush.xpose.msra.mxu0 0.0
    %1760 = vmatpush.xpose.msra.mxu0 0.0
    %1761 = vmatpush.xpose.msra.mxu0 0.0
    %1762 = vmatpush.xpose.msra.mxu0 0.0
    %1763 = vmatpush.xpose.msra.mxu0 0.0
    %1764 = vmatpush.xpose.msra.mxu0 %v1747
    %1765 = vmatmul.f32.gmra.mxu0 %v1745
    %v1766 = vpop.f32.mrf.mxu0
    %v1767 = vadd.f32 0.0, %v1766
    %1768 = vdwg.mxu0
    %1769 = vrot.lane.b32.xlu0 %v430, 112
    %v1770 = vpop.permute.xlu0 %1769
    %1771 = vrot.lane.b32.xlu0 %v430, 80
    %v1772 = vpop.permute.xlu0 %1771
    %v1773 = vsel %vm447, %v1770, 0
    %v1775 = vsel %vm447, %v1772, 0
    %1777 = vmatpush.xpose.msra.mxu0 0.0
    %1778 = vmatpush.xpose.msra.mxu0 0.0
    %1779 = vmatpush.xpose.msra.mxu0 0.0
    %1780 = vmatpush.xpose.msra.mxu0 0.0
    %1781 = vmatpush.xpose.msra.mxu0 0.0
    %1782 = vmatpush.xpose.msra.mxu0 0.0
    %1783 = vmatpush.xpose.msra.mxu0 0.0
    %1784 = vmatpush.xpose.msra.mxu0 0.0
    %1785 = vmatpush.xpose.msra.mxu0 0.0
    %1786 = vmatpush.xpose.msra.mxu0 0.0
    %1787 = vmatpush.xpose.msra.mxu0 0.0
    %1788 = vmatpush.xpose.msra.mxu0 0.0
    %1789 = vmatpush.xpose.msra.mxu0 0.0
    %1790 = vmatpush.xpose.msra.mxu0 0.0
    %1791 = vmatpush.xpose.msra.mxu0 0.0
    %1792 = vmatpush.xpose.msra.mxu0 %v1775
    %1793 = vmatmul.f32.gmra.mxu0 %v1773
    %v1794 = vpop.f32.mrf.mxu0
    %v1795 = vadd.f32 0.0, %v1794
    %1796 = vdwg.mxu0
    %1797 = vrot.lane.b32.xlu0 %v433, 112
    %v1798 = vpop.permute.xlu0 %1797
    %1799 = vrot.lane.b32.xlu0 %v433, 80
    %v1800 = vpop.permute.xlu0 %1799
    %v1801 = vsel %vm447, %v1798, 0
    %v1803 = vsel %vm447, %v1800, 0
    %1805 = vmatpush.xpose.msra.mxu0 0.0
    %1806 = vmatpush.xpose.msra.mxu0 0.0
    %1807 = vmatpush.xpose.msra.mxu0 0.0
    %1808 = vmatpush.xpose.msra.mxu0 0.0
    %1809 = vmatpush.xpose.msra.mxu0 0.0
    %1810 = vmatpush.xpose.msra.mxu0 0.0
    %1811 = vmatpush.xpose.msra.mxu0 0.0
    %1812 = vmatpush.xpose.msra.mxu0 0.0
    %1813 = vmatpush.xpose.msra.mxu0 0.0
    %1814 = vmatpush.xpose.msra.mxu0 0.0
    %1815 = vmatpush.xpose.msra.mxu0 0.0
    %1816 = vmatpush.xpose.msra.mxu0 0.0
    %1817 = vmatpush.xpose.msra.mxu0 0.0
    %1818 = vmatpush.xpose.msra.mxu0 0.0
    %1819 = vmatpush.xpose.msra.mxu0 0.0
    %1820 = vmatpush.xpose.msra.mxu0 %v1803
    %1821 = vmatmul.f32.gmra.mxu0 %v1801
    %v1822 = vpop.f32.mrf.mxu0
    %v1823 = vadd.f32 0.0, %v1822
    %1824 = vdwg.mxu0
    %1825 = vrot.lane.b32.xlu0 %v436, 112
    %v1826 = vpop.permute.xlu0 %1825
    %1827 = vrot.lane.b32.xlu0 %v436, 80
    %v1828 = vpop.permute.xlu0 %1827
    %v1829 = vsel %vm447, %v1826, 0
    %v1831 = vsel %vm447, %v1828, 0
    %1833 = vmatpush.xpose.msra.mxu0 0.0
    %1834 = vmatpush.xpose.msra.mxu0 0.0
    %1835 = vmatpush.xpose.msra.mxu0 0.0
    %1836 = vmatpush.xpose.msra.mxu0 0.0
    %1837 = vmatpush.xpose.msra.mxu0 0.0
    %1838 = vmatpush.xpose.msra.mxu0 0.0
    %1839 = vmatpush.xpose.msra.mxu0 0.0
    %1840 = vmatpush.xpose.msra.mxu0 0.0
    %1841 = vmatpush.xpose.msra.mxu0 0.0
    %1842 = vmatpush.xpose.msra.mxu0 0.0
    %1843 = vmatpush.xpose.msra.mxu0 0.0
    %1844 = vmatpush.xpose.msra.mxu0 0.0
    %1845 = vmatpush.xpose.msra.mxu0 0.0
    %1846 = vmatpush.xpose.msra.mxu0 0.0
    %1847 = vmatpush.xpose.msra.mxu0 0.0
    %1848 = vmatpush.xpose.msra.mxu0 %v1831
    %1849 = vmatmul.f32.gmra.mxu0 %v1829
    %v1850 = vpop.f32.mrf.mxu0
    %v1851 = vadd.f32 0.0, %v1850
    %1852 = vdwg.mxu0
    %1853 = vrot.lane.b32.xlu0 %v439, 112
    %v1854 = vpop.permute.xlu0 %1853
    %1855 = vrot.lane.b32.xlu0 %v439, 80
    %v1856 = vpop.permute.xlu0 %1855
    %v1857 = vsel %vm447, %v1854, 0
    %v1859 = vsel %vm447, %v1856, 0
    %1861 = vmatpush.xpose.msra.mxu0 0.0
    %1862 = vmatpush.xpose.msra.mxu0 0.0
    %1863 = vmatpush.xpose.msra.mxu0 0.0
    %1864 = vmatpush.xpose.msra.mxu0 0.0
    %1865 = vmatpush.xpose.msra.mxu0 0.0
    %1866 = vmatpush.xpose.msra.mxu0 0.0
    %1867 = vmatpush.xpose.msra.mxu0 0.0
    %1868 = vmatpush.xpose.msra.mxu0 0.0
    %1869 = vmatpush.xpose.msra.mxu0 0.0
    %1870 = vmatpush.xpose.msra.mxu0 0.0
    %1871 = vmatpush.xpose.msra.mxu0 0.0
    %1872 = vmatpush.xpose.msra.mxu0 0.0
    %1873 = vmatpush.xpose.msra.mxu0 0.0
    %1874 = vmatpush.xpose.msra.mxu0 0.0
    %1875 = vmatpush.xpose.msra.mxu0 0.0
    %1876 = vmatpush.xpose.msra.mxu0 %v1859
    %1877 = vmatmul.f32.gmra.mxu0 %v1857
    %v1878 = vpop.f32.mrf.mxu0
    %v1879 = vadd.f32 0.0, %v1878
    %1880 = vdwg.mxu0
    %1881 = vrot.lane.b32.xlu0 %v442, 112
    %v1882 = vpop.permute.xlu0 %1881
    %1883 = vrot.lane.b32.xlu0 %v442, 80
    %v1884 = vpop.permute.xlu0 %1883
    %v1885 = vsel %vm447, %v1882, 0
    %v1887 = vsel %vm447, %v1884, 0
    %1889 = vmatpush.xpose.msra.mxu0 0.0
    %1890 = vmatpush.xpose.msra.mxu0 0.0
    %1891 = vmatpush.xpose.msra.mxu0 0.0
    %1892 = vmatpush.xpose.msra.mxu0 0.0
    %1893 = vmatpush.xpose.msra.mxu0 0.0
    %1894 = vmatpush.xpose.msra.mxu0 0.0
    %1895 = vmatpush.xpose.msra.mxu0 0.0
    %1896 = vmatpush.xpose.msra.mxu0 0.0
    %1897 = vmatpush.xpose.msra.mxu0 0.0
    %1898 = vmatpush.xpose.msra.mxu0 0.0
    %1899 = vmatpush.xpose.msra.mxu0 0.0
    %1900 = vmatpush.xpose.msra.mxu0 0.0
    %1901 = vmatpush.xpose.msra.mxu0 0.0
    %1902 = vmatpush.xpose.msra.mxu0 0.0
    %1903 = vmatpush.xpose.msra.mxu0 0.0
    %1904 = vmatpush.xpose.msra.mxu0 %v1887
    %1905 = vmatmul.f32.gmra.mxu0 %v1885
    %v1906 = vpop.f32.mrf.mxu0
    %v1907 = vadd.f32 0.0, %v1906
    %1908 = vdwg.mxu0
    %v1909 = vsel %vm447, %v1711, -inf
    %1910 = vmax.xlane.f32.xlu0 %v1909
    %v1911 = vpop.xlane.xlu0 %1910
    %v1912 = vsel %vm447, %v1739, -inf
    %1913 = vmax.xlane.f32.xlu0 %v1912
    %v1914 = vpop.xlane.xlu0 %1913
    %v1915 = vsel %vm447, %v1767, -inf
    %1916 = vmax.xlane.f32.xlu0 %v1915
    %v1917 = vpop.xlane.xlu0 %1916
    %v1918 = vsel %vm447, %v1795, -inf
    %1919 = vmax.xlane.f32.xlu0 %v1918
    %v1920 = vpop.xlane.xlu0 %1919
    %v1921 = vsel %vm447, %v1823, -inf
    %1922 = vmax.xlane.f32.xlu0 %v1921
    %v1923 = vpop.xlane.xlu0 %1922
    %v1924 = vsel %vm447, %v1851, -inf
    %1925 = vmax.xlane.f32.xlu0 %v1924
    %v1926 = vpop.xlane.xlu0 %1925
    %v1927 = vsel %vm447, %v1879, -inf
    %1928 = vmax.xlane.f32.xlu0 %v1927
    %v1929 = vpop.xlane.xlu0 %1928
    %v1930 = vsel %vm447, %v1907, -inf
    %1931 = vmax.xlane.f32.xlu0 %v1930
    %v1932 = vpop.xlane.xlu0 %1931
    %v1933 = vsub.f32 %v1711, %v1911
    %v1934 = vsub.f32 %v1739, %v1914
    %v1935 = vsub.f32 %v1767, %v1917
    %v1936 = vsub.f32 %v1795, %v1920
    %v1937 = vsub.f32 %v1823, %v1923
    %v1938 = vsub.f32 %v1851, %v1926
    %v1939 = vsub.f32 %v1879, %v1929
    %v1940 = vsub.f32 %v1907, %v1932
    %v1941 = vmul.f32 %v1933, 1.442695
    %v1942 = vpow.pop %v1941
    %v1943 = vmul.f32 %v1934, 1.442695
    %v1944 = vpow.pop %v1943
    %v1945 = vmul.f32 %v1935, 1.442695
    %v1946 = vpow.pop %v1945
    %v1947 = vmul.f32 %v1936, 1.442695
    %v1948 = vpow.pop %v1947
    %v1949 = vmul.f32 %v1937, 1.442695
    %v1950 = vpow.pop %v1949
    %v1951 = vmul.f32 %v1938, 1.442695
    %v1952 = vpow.pop %v1951
    %v1953 = vmul.f32 %v1939, 1.442695
    %v1954 = vpow.pop %v1953
    %v1955 = vmul.f32 %v1940, 1.442695
    %v1956 = vpow.pop %v1955
    %v1957 = vsel %vm447, %v1942, 0.0
    %1958 = vadd.xlane.f32.xlu0 %v1957
    %v1959 = vpop.xlane.xlu0 %1958
    %v1960 = vsel %vm447, %v1944, 0.0
    %1961 = vadd.xlane.f32.xlu0 %v1960
    %v1962 = vpop.xlane.xlu0 %1961
    %v1963 = vsel %vm447, %v1946, 0.0
    %1964 = vadd.xlane.f32.xlu0 %v1963
    %v1965 = vpop.xlane.xlu0 %1964
    %v1966 = vsel %vm447, %v1948, 0.0
    %1967 = vadd.xlane.f32.xlu0 %v1966
    %v1968 = vpop.xlane.xlu0 %1967
    %v1969 = vsel %vm447, %v1950, 0.0
    %1970 = vadd.xlane.f32.xlu0 %v1969
    %v1971 = vpop.xlane.xlu0 %1970
    %v1972 = vsel %vm447, %v1952, 0.0
    %1973 = vadd.xlane.f32.xlu0 %v1972
    %v1974 = vpop.xlane.xlu0 %1973
    %v1975 = vsel %vm447, %v1954, 0.0
    %1976 = vadd.xlane.f32.xlu0 %v1975
    %v1977 = vpop.xlane.xlu0 %1976
    %v1978 = vsel %vm447, %v1956, 0.0
    %1979 = vadd.xlane.f32.xlu0 %v1978
    %v1980 = vpop.xlane.xlu0 %1979
    %v1981 = vrcp.pop %v1959
    %v1982 = vmul.f32 %v1959, %v1981
    %v1983 = vsub.f32 1.0, %v1982
    %v1984 = vmul.f32 %v1981, %v1983
    %v1985 = vadd.f32 %v1981, %v1984
    %vm1986 = vweird.f32 %v1959
    %vm1987 = vweird.f32 %v1981
    %vm1988 = vmor %vm1986, %vm1987
    %v1989 = vsel %vm1988, %v1981, %v1985
    %v1990 = vand.u32 2147483647, %v1959
    %vm1991 = vcmp.eq.f32.partialorder %v1990, 8.507059e+37
    %v1992 = vand.u32 %v1959, 2147483648
    %v1993 = vor.u32 1.1754944e-38, %v1992
    %v1994 = vsel %vm1991, %v1993, %v1989
    %v1995 = vmul.f32 %v1942, %v1994
    %v1996 = vrcp.pop %v1962
    %v1997 = vmul.f32 %v1962, %v1996
    %v1998 = vsub.f32 1.0, %v1997
    %v1999 = vmul.f32 %v1996, %v1998
    %v2000 = vadd.f32 %v1996, %v1999
    %vm2001 = vweird.f32 %v1962
    %vm2002 = vweird.f32 %v1996
    %vm2003 = vmor %vm2001, %vm2002
    %v2004 = vsel %vm2003, %v1996, %v2000
    %v2005 = vand.u32 2147483647, %v1962
    %vm2006 = vcmp.eq.f32.partialorder %v2005, 8.507059e+37
    %v2007 = vand.u32 %v1962, 2147483648
    %v2008 = vor.u32 1.1754944e-38, %v2007
    %v2009 = vsel %vm2006, %v2008, %v2004
    %v2010 = vmul.f32 %v1944, %v2009
    %v2011 = vrcp.pop %v1965
    %v2012 = vmul.f32 %v1965, %v2011
    %v2013 = vsub.f32 1.0, %v2012
    %v2014 = vmul.f32 %v2011, %v2013
    %v2015 = vadd.f32 %v2011, %v2014
    %vm2016 = vweird.f32 %v1965
    %vm2017 = vweird.f32 %v2011
    %vm2018 = vmor %vm2016, %vm2017
    %v2019 = vsel %vm2018, %v2011, %v2015
    %v2020 = vand.u32 2147483647, %v1965
    %vm2021 = vcmp.eq.f32.partialorder %v2020, 8.507059e+37
    %v2022 = vand.u32 %v1965, 2147483648
    %v2023 = vor.u32 1.1754944e-38, %v2022
    %v2024 = vsel %vm2021, %v2023, %v2019
    %v2025 = vmul.f32 %v1946, %v2024
    %v2026 = vrcp.pop %v1968
    %v2027 = vmul.f32 %v1968, %v2026
    %v2028 = vsub.f32 1.0, %v2027
    %v2029 = vmul.f32 %v2026, %v2028
    %v2030 = vadd.f32 %v2026, %v2029
    %vm2031 = vweird.f32 %v1968
    %vm2032 = vweird.f32 %v2026
    %vm2033 = vmor %vm2031, %vm2032
    %v2034 = vsel %vm2033, %v2026, %v2030
    %v2035 = vand.u32 2147483647, %v1968
    %vm2036 = vcmp.eq.f32.partialorder %v2035, 8.507059e+37
    %v2037 = vand.u32 %v1968, 2147483648
    %v2038 = vor.u32 1.1754944e-38, %v2037
    %v2039 = vsel %vm2036, %v2038, %v2034
    %v2040 = vmul.f32 %v1948, %v2039
    %v2041 = vrcp.pop %v1971
    %v2042 = vmul.f32 %v1971, %v2041
    %v2043 = vsub.f32 1.0, %v2042
    %v2044 = vmul.f32 %v2041, %v2043
    %v2045 = vadd.f32 %v2041, %v2044
    %vm2046 = vweird.f32 %v1971
    %vm2047 = vweird.f32 %v2041
    %vm2048 = vmor %vm2046, %vm2047
    %v2049 = vsel %vm2048, %v2041, %v2045
    %v2050 = vand.u32 2147483647, %v1971
    %vm2051 = vcmp.eq.f32.partialorder %v2050, 8.507059e+37
    %v2052 = vand.u32 %v1971, 2147483648
    %v2053 = vor.u32 1.1754944e-38, %v2052
    %v2054 = vsel %vm2051, %v2053, %v2049
    %v2055 = vmul.f32 %v1950, %v2054
    %v2056 = vrcp.pop %v1974
    %v2057 = vmul.f32 %v1974, %v2056
    %v2058 = vsub.f32 1.0, %v2057
    %v2059 = vmul.f32 %v2056, %v2058
    %v2060 = vadd.f32 %v2056, %v2059
    %vm2061 = vweird.f32 %v1974
    %vm2062 = vweird.f32 %v2056
    %vm2063 = vmor %vm2061, %vm2062
    %v2064 = vsel %vm2063, %v2056, %v2060
    %v2065 = vand.u32 2147483647, %v1974
    %vm2066 = vcmp.eq.f32.partialorder %v2065, 8.507059e+37
    %v2067 = vand.u32 %v1974, 2147483648
    %v2068 = vor.u32 1.1754944e-38, %v2067
    %v2069 = vsel %vm2066, %v2068, %v2064
    %v2070 = vmul.f32 %v1952, %v2069
    %v2071 = vrcp.pop %v1977
    %v2072 = vmul.f32 %v1977, %v2071
    %v2073 = vsub.f32 1.0, %v2072
    %v2074 = vmul.f32 %v2071, %v2073
    %v2075 = vadd.f32 %v2071, %v2074
    %vm2076 = vweird.f32 %v1977
    %vm2077 = vweird.f32 %v2071
    %vm2078 = vmor %vm2076, %vm2077
    %v2079 = vsel %vm2078, %v2071, %v2075
    %v2080 = vand.u32 2147483647, %v1977
    %vm2081 = vcmp.eq.f32.partialorder %v2080, 8.507059e+37
    %v2082 = vand.u32 %v1977, 2147483648
    %v2083 = vor.u32 1.1754944e-38, %v2082
    %v2084 = vsel %vm2081, %v2083, %v2079
    %v2085 = vmul.f32 %v1954, %v2084
    %v2086 = vrcp.pop %v1980
    %v2087 = vmul.f32 %v1980, %v2086
    %v2088 = vsub.f32 1.0, %v2087
    %v2089 = vmul.f32 %v2086, %v2088
    %v2090 = vadd.f32 %v2086, %v2089
    %vm2091 = vweird.f32 %v1980
    %vm2092 = vweird.f32 %v2086
    %vm2093 = vmor %vm2091, %vm2092
    %v2094 = vsel %vm2093, %v2086, %v2090
    %v2095 = vand.u32 2147483647, %v1980
    %vm2096 = vcmp.eq.f32.partialorder %v2095, 8.507059e+37
    %v2097 = vand.u32 %v1980, 2147483648
    %v2098 = vor.u32 1.1754944e-38, %v2097
    %v2099 = vsel %vm2096, %v2098, %v2094
    %v2100 = vmul.f32 %v1956, %v2099
    %2101 = vrot.lane.b32.xlu0 %v421, 48
    %v2102 = vpop.permute.xlu0 %2101
    %v2105 = vsel %vm447, %v1995, 0
    %2107 = vmatpush.msra.mxu0 0.0
    %2108 = vmatpush.msra.mxu0 0.0
    %2109 = vmatpush.msra.mxu0 0.0
    %2110 = vmatpush.msra.mxu0 0.0
    %2111 = vmatpush.msra.mxu0 0.0
    %2112 = vmatpush.msra.mxu0 0.0
    %2113 = vmatpush.msra.mxu0 0.0
    %2114 = vmatpush.msra.mxu0 0.0
    %2115 = vmatpush.msra.mxu0 0.0
    %2116 = vmatpush.msra.mxu0 0.0
    %2117 = vmatpush.msra.mxu0 0.0
    %2118 = vmatpush.msra.mxu0 0.0
    %2119 = vmatpush.msra.mxu0 0.0
    %2120 = vmatpush.msra.mxu0 0.0
    %2121 = vmatpush.msra.mxu0 0.0
    %2122 = vmatpush.msra.mxu0 %v2102
    %2123 = vmatmul.f32.gmra.mxu0 %v2105
    %v2124 = vpop.f32.mrf.mxu0
    %v2125 = vadd.f32 0.0, %v2124
    %2126 = vdwg.mxu0
    %2127 = vrot.lane.b32.xlu0 %v424, 48
    %v2128 = vpop.permute.xlu0 %2127
    %v2131 = vsel %vm447, %v2010, 0
    %2133 = vmatpush.msra.mxu0 0.0
    %2134 = vmatpush.msra.mxu0 0.0
    %2135 = vmatpush.msra.mxu0 0.0
    %2136 = vmatpush.msra.mxu0 0.0
    %2137 = vmatpush.msra.mxu0 0.0
    %2138 = vmatpush.msra.mxu0 0.0
    %2139 = vmatpush.msra.mxu0 0.0
    %2140 = vmatpush.msra.mxu0 0.0
    %2141 = vmatpush.msra.mxu0 0.0
    %2142 = vmatpush.msra.mxu0 0.0
    %2143 = vmatpush.msra.mxu0 0.0
    %2144 = vmatpush.msra.mxu0 0.0
    %2145 = vmatpush.msra.mxu0 0.0
    %2146 = vmatpush.msra.mxu0 0.0
    %2147 = vmatpush.msra.mxu0 0.0
    %2148 = vmatpush.msra.mxu0 %v2128
    %2149 = vmatmul.f32.gmra.mxu0 %v2131
    %v2150 = vpop.f32.mrf.mxu0
    %v2151 = vadd.f32 0.0, %v2150
    %2152 = vdwg.mxu0
    %2153 = vrot.lane.b32.xlu0 %v427, 48
    %v2154 = vpop.permute.xlu0 %2153
    %v2157 = vsel %vm447, %v2025, 0
    %2159 = vmatpush.msra.mxu0 0.0
    %2160 = vmatpush.msra.mxu0 0.0
    %2161 = vmatpush.msra.mxu0 0.0
    %2162 = vmatpush.msra.mxu0 0.0
    %2163 = vmatpush.msra.mxu0 0.0
    %2164 = vmatpush.msra.mxu0 0.0
    %2165 = vmatpush.msra.mxu0 0.0
    %2166 = vmatpush.msra.mxu0 0.0
    %2167 = vmatpush.msra.mxu0 0.0
    %2168 = vmatpush.msra.mxu0 0.0
    %2169 = vmatpush.msra.mxu0 0.0
    %2170 = vmatpush.msra.mxu0 0.0
    %2171 = vmatpush.msra.mxu0 0.0
    %2172 = vmatpush.msra.mxu0 0.0
    %2173 = vmatpush.msra.mxu0 0.0
    %2174 = vmatpush.msra.mxu0 %v2154
    %2175 = vmatmul.f32.gmra.mxu0 %v2157
    %v2176 = vpop.f32.mrf.mxu0
    %v2177 = vadd.f32 0.0, %v2176
    %2178 = vdwg.mxu0
    %2179 = vrot.lane.b32.xlu0 %v430, 48
    %v2180 = vpop.permute.xlu0 %2179
    %v2183 = vsel %vm447, %v2040, 0
    %2185 = vmatpush.msra.mxu0 0.0
    %2186 = vmatpush.msra.mxu0 0.0
    %2187 = vmatpush.msra.mxu0 0.0
    %2188 = vmatpush.msra.mxu0 0.0
    %2189 = vmatpush.msra.mxu0 0.0
    %2190 = vmatpush.msra.mxu0 0.0
    %2191 = vmatpush.msra.mxu0 0.0
    %2192 = vmatpush.msra.mxu0 0.0
    %2193 = vmatpush.msra.mxu0 0.0
    %2194 = vmatpush.msra.mxu0 0.0
    %2195 = vmatpush.msra.mxu0 0.0
    %2196 = vmatpush.msra.mxu0 0.0
    %2197 = vmatpush.msra.mxu0 0.0
    %2198 = vmatpush.msra.mxu0 0.0
    %2199 = vmatpush.msra.mxu0 0.0
    %2200 = vmatpush.msra.mxu0 %v2180
    %2201 = vmatmul.f32.gmra.mxu0 %v2183
    %v2202 = vpop.f32.mrf.mxu0
    %v2203 = vadd.f32 0.0, %v2202
    %2204 = vdwg.mxu0
    %2205 = vrot.lane.b32.xlu0 %v433, 48
    %v2206 = vpop.permute.xlu0 %2205
    %v2209 = vsel %vm447, %v2055, 0
    %2211 = vmatpush.msra.mxu0 0.0
    %2212 = vmatpush.msra.mxu0 0.0
    %2213 = vmatpush.msra.mxu0 0.0
    %2214 = vmatpush.msra.mxu0 0.0
    %2215 = vmatpush.msra.mxu0 0.0
    %2216 = vmatpush.msra.mxu0 0.0
    %2217 = vmatpush.msra.mxu0 0.0
    %2218 = vmatpush.msra.mxu0 0.0
    %2219 = vmatpush.msra.mxu0 0.0
    %2220 = vmatpush.msra.mxu0 0.0
    %2221 = vmatpush.msra.mxu0 0.0
    %2222 = vmatpush.msra.mxu0 0.0
    %2223 = vmatpush.msra.mxu0 0.0
    %2224 = vmatpush.msra.mxu0 0.0
    %2225 = vmatpush.msra.mxu0 0.0
    %2226 = vmatpush.msra.mxu0 %v2206
    %2227 = vmatmul.f32.gmra.mxu0 %v2209
    %v2228 = vpop.f32.mrf.mxu0
    %v2229 = vadd.f32 0.0, %v2228
    %2230 = vdwg.mxu0
    %2231 = vrot.lane.b32.xlu0 %v436, 48
    %v2232 = vpop.permute.xlu0 %2231
    %v2235 = vsel %vm447, %v2070, 0
    %2237 = vmatpush.msra.mxu0 0.0
    %2238 = vmatpush.msra.mxu0 0.0
    %2239 = vmatpush.msra.mxu0 0.0
    %2240 = vmatpush.msra.mxu0 0.0
    %2241 = vmatpush.msra.mxu0 0.0
    %2242 = vmatpush.msra.mxu0 0.0
    %2243 = vmatpush.msra.mxu0 0.0
    %2244 = vmatpush.msra.mxu0 0.0
    %2245 = vmatpush.msra.mxu0 0.0
    %2246 = vmatpush.msra.mxu0 0.0
    %2247 = vmatpush.msra.mxu0 0.0
    %2248 = vmatpush.msra.mxu0 0.0
    %2249 = vmatpush.msra.mxu0 0.0
    %2250 = vmatpush.msra.mxu0 0.0
    %2251 = vmatpush.msra.mxu0 0.0
    %2252 = vmatpush.msra.mxu0 %v2232
    %2253 = vmatmul.f32.gmra.mxu0 %v2235
    %v2254 = vpop.f32.mrf.mxu0
    %v2255 = vadd.f32 0.0, %v2254
    %2256 = vdwg.mxu0
    %2257 = vrot.lane.b32.xlu0 %v439, 48
    %v2258 = vpop.permute.xlu0 %2257
    %v2261 = vsel %vm447, %v2085, 0
    %2263 = vmatpush.msra.mxu0 0.0
    %2264 = vmatpush.msra.mxu0 0.0
    %2265 = vmatpush.msra.mxu0 0.0
    %2266 = vmatpush.msra.mxu0 0.0
    %2267 = vmatpush.msra.mxu0 0.0
    %2268 = vmatpush.msra.mxu0 0.0
    %2269 = vmatpush.msra.mxu0 0.0
    %2270 = vmatpush.msra.mxu0 0.0
    %2271 = vmatpush.msra.mxu0 0.0
    %2272 = vmatpush.msra.mxu0 0.0
    %2273 = vmatpush.msra.mxu0 0.0
    %2274 = vmatpush.msra.mxu0 0.0
    %2275 = vmatpush.msra.mxu0 0.0
    %2276 = vmatpush.msra.mxu0 0.0
    %2277 = vmatpush.msra.mxu0 0.0
    %2278 = vmatpush.msra.mxu0 %v2258
    %2279 = vmatmul.f32.gmra.mxu0 %v2261
    %v2280 = vpop.f32.mrf.mxu0
    %v2281 = vadd.f32 0.0, %v2280
    %2282 = vdwg.mxu0
    %2283 = vrot.lane.b32.xlu0 %v442, 48
    %v2284 = vpop.permute.xlu0 %2283
    %v2287 = vsel %vm447, %v2100, 0
    %2289 = vmatpush.msra.mxu0 0.0
    %2290 = vmatpush.msra.mxu0 0.0
    %2291 = vmatpush.msra.mxu0 0.0
    %2292 = vmatpush.msra.mxu0 0.0
    %2293 = vmatpush.msra.mxu0 0.0
    %2294 = vmatpush.msra.mxu0 0.0
    %2295 = vmatpush.msra.mxu0 0.0
    %2296 = vmatpush.msra.mxu0 0.0
    %2297 = vmatpush.msra.mxu0 0.0
    %2298 = vmatpush.msra.mxu0 0.0
    %2299 = vmatpush.msra.mxu0 0.0
    %2300 = vmatpush.msra.mxu0 0.0
    %2301 = vmatpush.msra.mxu0 0.0
    %2302 = vmatpush.msra.mxu0 0.0
    %2303 = vmatpush.msra.mxu0 0.0
    %2304 = vmatpush.msra.mxu0 %v2284
    %2305 = vmatmul.f32.gmra.mxu0 %v2287
    %v2306 = vpop.f32.mrf.mxu0
    %v2307 = vadd.f32 0.0, %v2306
    %2308 = vdwg.mxu0
    %2309 = vrot.lane.b32.xlu0 %v421, 104
    %v2310 = vpop.permute.xlu0 %2309
    %2311 = vrot.lane.b32.xlu0 %v421, 72
    %v2312 = vpop.permute.xlu0 %2311
    %v2313 = vsel %vm447, %v2310, 0
    %v2315 = vsel %vm447, %v2312, 0
    %2317 = vmatpush.xpose.msra.mxu0 0.0
    %2318 = vmatpush.xpose.msra.mxu0 0.0
    %2319 = vmatpush.xpose.msra.mxu0 0.0
    %2320 = vmatpush.xpose.msra.mxu0 0.0
    %2321 = vmatpush.xpose.msra.mxu0 0.0
    %2322 = vmatpush.xpose.msra.mxu0 0.0
    %2323 = vmatpush.xpose.msra.mxu0 0.0
    %2324 = vmatpush.xpose.msra.mxu0 0.0
    %2325 = vmatpush.xpose.msra.mxu0 0.0
    %2326 = vmatpush.xpose.msra.mxu0 0.0
    %2327 = vmatpush.xpose.msra.mxu0 0.0
    %2328 = vmatpush.xpose.msra.mxu0 0.0
    %2329 = vmatpush.xpose.msra.mxu0 0.0
    %2330 = vmatpush.xpose.msra.mxu0 0.0
    %2331 = vmatpush.xpose.msra.mxu0 0.0
    %2332 = vmatpush.xpose.msra.mxu0 %v2315
    %2333 = vmatmul.f32.gmra.mxu0 %v2313
    %v2334 = vpop.f32.mrf.mxu0
    %v2335 = vadd.f32 0.0, %v2334
    %2336 = vdwg.mxu0
    %2337 = vrot.lane.b32.xlu0 %v424, 104
    %v2338 = vpop.permute.xlu0 %2337
    %2339 = vrot.lane.b32.xlu0 %v424, 72
    %v2340 = vpop.permute.xlu0 %2339
    %v2341 = vsel %vm447, %v2338, 0
    %v2343 = vsel %vm447, %v2340, 0
    %2345 = vmatpush.xpose.msra.mxu0 0.0
    %2346 = vmatpush.xpose.msra.mxu0 0.0
    %2347 = vmatpush.xpose.msra.mxu0 0.0
    %2348 = vmatpush.xpose.msra.mxu0 0.0
    %2349 = vmatpush.xpose.msra.mxu0 0.0
    %2350 = vmatpush.xpose.msra.mxu0 0.0
    %2351 = vmatpush.xpose.msra.mxu0 0.0
    %2352 = vmatpush.xpose.msra.mxu0 0.0
    %2353 = vmatpush.xpose.msra.mxu0 0.0
    %2354 = vmatpush.xpose.msra.mxu0 0.0
    %2355 = vmatpush.xpose.msra.mxu0 0.0
    %2356 = vmatpush.xpose.msra.mxu0 0.0
    %2357 = vmatpush.xpose.msra.mxu0 0.0
    %2358 = vmatpush.xpose.msra.mxu0 0.0
    %2359 = vmatpush.xpose.msra.mxu0 0.0
    %2360 = vmatpush.xpose.msra.mxu0 %v2343
    %2361 = vmatmul.f32.gmra.mxu0 %v2341
    %v2362 = vpop.f32.mrf.mxu0
    %v2363 = vadd.f32 0.0, %v2362
    %2364 = vdwg.mxu0
    %2365 = vrot.lane.b32.xlu0 %v427, 104
    %v2366 = vpop.permute.xlu0 %2365
    %2367 = vrot.lane.b32.xlu0 %v427, 72
    %v2368 = vpop.permute.xlu0 %2367
    %v2369 = vsel %vm447, %v2366, 0
    %v2371 = vsel %vm447, %v2368, 0
    %2373 = vmatpush.xpose.msra.mxu0 0.0
    %2374 = vmatpush.xpose.msra.mxu0 0.0
    %2375 = vmatpush.xpose.msra.mxu0 0.0
    %2376 = vmatpush.xpose.msra.mxu0 0.0
    %2377 = vmatpush.xpose.msra.mxu0 0.0
    %2378 = vmatpush.xpose.msra.mxu0 0.0
    %2379 = vmatpush.xpose.msra.mxu0 0.0
    %2380 = vmatpush.xpose.msra.mxu0 0.0
    %2381 = vmatpush.xpose.msra.mxu0 0.0
    %2382 = vmatpush.xpose.msra.mxu0 0.0
    %2383 = vmatpush.xpose.msra.mxu0 0.0
    %2384 = vmatpush.xpose.msra.mxu0 0.0
    %2385 = vmatpush.xpose.msra.mxu0 0.0
    %2386 = vmatpush.xpose.msra.mxu0 0.0
    %2387 = vmatpush.xpose.msra.mxu0 0.0
    %2388 = vmatpush.xpose.msra.mxu0 %v2371
    %2389 = vmatmul.f32.gmra.mxu0 %v2369
    %v2390 = vpop.f32.mrf.mxu0
    %v2391 = vadd.f32 0.0, %v2390
    %2392 = vdwg.mxu0
    %2393 = vrot.lane.b32.xlu0 %v430, 104
    %v2394 = vpop.permute.xlu0 %2393
    %2395 = vrot.lane.b32.xlu0 %v430, 72
    %v2396 = vpop.permute.xlu0 %2395
    %v2397 = vsel %vm447, %v2394, 0
    %v2399 = vsel %vm447, %v2396, 0
    %2401 = vmatpush.xpose.msra.mxu0 0.0
    %2402 = vmatpush.xpose.msra.mxu0 0.0
    %2403 = vmatpush.xpose.msra.mxu0 0.0
    %2404 = vmatpush.xpose.msra.mxu0 0.0
    %2405 = vmatpush.xpose.msra.mxu0 0.0
    %2406 = vmatpush.xpose.msra.mxu0 0.0
    %2407 = vmatpush.xpose.msra.mxu0 0.0
    %2408 = vmatpush.xpose.msra.mxu0 0.0
    %2409 = vmatpush.xpose.msra.mxu0 0.0
    %2410 = vmatpush.xpose.msra.mxu0 0.0
    %2411 = vmatpush.xpose.msra.mxu0 0.0
    %2412 = vmatpush.xpose.msra.mxu0 0.0
    %2413 = vmatpush.xpose.msra.mxu0 0.0
    %2414 = vmatpush.xpose.msra.mxu0 0.0
    %2415 = vmatpush.xpose.msra.mxu0 0.0
    %2416 = vmatpush.xpose.msra.mxu0 %v2399
    %2417 = vmatmul.f32.gmra.mxu0 %v2397
    %v2418 = vpop.f32.mrf.mxu0
    %v2419 = vadd.f32 0.0, %v2418
    %2420 = vdwg.mxu0
    %2421 = vrot.lane.b32.xlu0 %v433, 104
    %v2422 = vpop.permute.xlu0 %2421
    %2423 = vrot.lane.b32.xlu0 %v433, 72
    %v2424 = vpop.permute.xlu0 %2423
    %v2425 = vsel %vm447, %v2422, 0
    %v2427 = vsel %vm447, %v2424, 0
    %2429 = vmatpush.xpose.msra.mxu0 0.0
    %2430 = vmatpush.xpose.msra.mxu0 0.0
    %2431 = vmatpush.xpose.msra.mxu0 0.0
    %2432 = vmatpush.xpose.msra.mxu0 0.0
    %2433 = vmatpush.xpose.msra.mxu0 0.0
    %2434 = vmatpush.xpose.msra.mxu0 0.0
    %2435 = vmatpush.xpose.msra.mxu0 0.0
    %2436 = vmatpush.xpose.msra.mxu0 0.0
    %2437 = vmatpush.xpose.msra.mxu0 0.0
    %2438 = vmatpush.xpose.msra.mxu0 0.0
    %2439 = vmatpush.xpose.msra.mxu0 0.0
    %2440 = vmatpush.xpose.msra.mxu0 0.0
    %2441 = vmatpush.xpose.msra.mxu0 0.0
    %2442 = vmatpush.xpose.msra.mxu0 0.0
    %2443 = vmatpush.xpose.msra.mxu0 0.0
    %2444 = vmatpush.xpose.msra.mxu0 %v2427
    %2445 = vmatmul.f32.gmra.mxu0 %v2425
    %v2446 = vpop.f32.mrf.mxu0
    %v2447 = vadd.f32 0.0, %v2446
    %2448 = vdwg.mxu0
    %2449 = vrot.lane.b32.xlu0 %v436, 104
    %v2450 = vpop.permute.xlu0 %2449
    %2451 = vrot.lane.b32.xlu0 %v436, 72
    %v2452 = vpop.permute.xlu0 %2451
    %v2453 = vsel %vm447, %v2450, 0
    %v2455 = vsel %vm447, %v2452, 0
    %2457 = vmatpush.xpose.msra.mxu0 0.0
    %2458 = vmatpush.xpose.msra.mxu0 0.0
    %2459 = vmatpush.xpose.msra.mxu0 0.0
    %2460 = vmatpush.xpose.msra.mxu0 0.0
    %2461 = vmatpush.xpose.msra.mxu0 0.0
    %2462 = vmatpush.xpose.msra.mxu0 0.0
    %2463 = vmatpush.xpose.msra.mxu0 0.0
    %2464 = vmatpush.xpose.msra.mxu0 0.0
    %2465 = vmatpush.xpose.msra.mxu0 0.0
    %2466 = vmatpush.xpose.msra.mxu0 0.0
    %2467 = vmatpush.xpose.msra.mxu0 0.0
    %2468 = vmatpush.xpose.msra.mxu0 0.0
    %2469 = vmatpush.xpose.msra.mxu0 0.0
    %2470 = vmatpush.xpose.msra.mxu0 0.0
    %2471 = vmatpush.xpose.msra.mxu0 0.0
    %2472 = vmatpush.xpose.msra.mxu0 %v2455
    %2473 = vmatmul.f32.gmra.mxu0 %v2453
    %v2474 = vpop.f32.mrf.mxu0
    %v2475 = vadd.f32 0.0, %v2474
    %2476 = vdwg.mxu0
    %2477 = vrot.lane.b32.xlu0 %v439, 104
    %v2478 = vpop.permute.xlu0 %2477
    %2479 = vrot.lane.b32.xlu0 %v439, 72
    %v2480 = vpop.permute.xlu0 %2479
    %v2481 = vsel %vm447, %v2478, 0
    %v2483 = vsel %vm447, %v2480, 0
    %2485 = vmatpush.xpose.msra.mxu0 0.0
    %2486 = vmatpush.xpose.msra.mxu0 0.0
    %2487 = vmatpush.xpose.msra.mxu0 0.0
    %2488 = vmatpush.xpose.msra.mxu0 0.0
    %2489 = vmatpush.xpose.msra.mxu0 0.0
    %2490 = vmatpush.xpose.msra.mxu0 0.0
    %2491 = vmatpush.xpose.msra.mxu0 0.0
    %2492 = vmatpush.xpose.msra.mxu0 0.0
    %2493 = vmatpush.xpose.msra.mxu0 0.0
    %2494 = vmatpush.xpose.msra.mxu0 0.0
    %2495 = vmatpush.xpose.msra.mxu0 0.0
    %2496 = vmatpush.xpose.msra.mxu0 0.0
    %2497 = vmatpush.xpose.msra.mxu0 0.0
    %2498 = vmatpush.xpose.msra.mxu0 0.0
    %2499 = vmatpush.xpose.msra.mxu0 0.0
    %2500 = vmatpush.xpose.msra.mxu0 %v2483
    %2501 = vmatmul.f32.gmra.mxu0 %v2481
    %v2502 = vpop.f32.mrf.mxu0
    %v2503 = vadd.f32 0.0, %v2502
    %2504 = vdwg.mxu0
    %2505 = vrot.lane.b32.xlu0 %v442, 104
    %v2506 = vpop.permute.xlu0 %2505
    %2507 = vrot.lane.b32.xlu0 %v442, 72
    %v2508 = vpop.permute.xlu0 %2507
    %v2509 = vsel %vm447, %v2506, 0
    %v2511 = vsel %vm447, %v2508, 0
    %2513 = vmatpush.xpose.msra.mxu0 0.0
    %2514 = vmatpush.xpose.msra.mxu0 0.0
    %2515 = vmatpush.xpose.msra.mxu0 0.0
    %2516 = vmatpush.xpose.msra.mxu0 0.0
    %2517 = vmatpush.xpose.msra.mxu0 0.0
    %2518 = vmatpush.xpose.msra.mxu0 0.0
    %2519 = vmatpush.xpose.msra.mxu0 0.0
    %2520 = vmatpush.xpose.msra.mxu0 0.0
    %2521 = vmatpush.xpose.msra.mxu0 0.0
    %2522 = vmatpush.xpose.msra.mxu0 0.0
    %2523 = vmatpush.xpose.msra.mxu0 0.0
    %2524 = vmatpush.xpose.msra.mxu0 0.0
    %2525 = vmatpush.xpose.msra.mxu0 0.0
    %2526 = vmatpush.xpose.msra.mxu0 0.0
    %2527 = vmatpush.xpose.msra.mxu0 0.0
    %2528 = vmatpush.xpose.msra.mxu0 %v2511
    %2529 = vmatmul.f32.gmra.mxu0 %v2509
    %v2530 = vpop.f32.mrf.mxu0
    %v2531 = vadd.f32 0.0, %v2530
    %2532 = vdwg.mxu0
    %v2533 = vsel %vm447, %v2335, -inf
    %2534 = vmax.xlane.f32.xlu0 %v2533
    %v2535 = vpop.xlane.xlu0 %2534
    %v2536 = vsel %vm447, %v2363, -inf
    %2537 = vmax.xlane.f32.xlu0 %v2536
    %v2538 = vpop.xlane.xlu0 %2537
    %v2539 = vsel %vm447, %v2391, -inf
    %2540 = vmax.xlane.f32.xlu0 %v2539
    %v2541 = vpop.xlane.xlu0 %2540
    %v2542 = vsel %vm447, %v2419, -inf
    %2543 = vmax.xlane.f32.xlu0 %v2542
    %v2544 = vpop.xlane.xlu0 %2543
    %v2545 = vsel %vm447, %v2447, -inf
    %2546 = vmax.xlane.f32.xlu0 %v2545
    %v2547 = vpop.xlane.xlu0 %2546
    %v2548 = vsel %vm447, %v2475, -inf
    %2549 = vmax.xlane.f32.xlu0 %v2548
    %v2550 = vpop.xlane.xlu0 %2549
    %v2551 = vsel %vm447, %v2503, -inf
    %2552 = vmax.xlane.f32.xlu0 %v2551
    %v2553 = vpop.xlane.xlu0 %2552
    %v2554 = vsel %vm447, %v2531, -inf
    %2555 = vmax.xlane.f32.xlu0 %v2554
    %v2556 = vpop.xlane.xlu0 %2555
    %v2557 = vsub.f32 %v2335, %v2535
    %v2558 = vsub.f32 %v2363, %v2538
    %v2559 = vsub.f32 %v2391, %v2541
    %v2560 = vsub.f32 %v2419, %v2544
    %v2561 = vsub.f32 %v2447, %v2547
    %v2562 = vsub.f32 %v2475, %v2550
    %v2563 = vsub.f32 %v2503, %v2553
    %v2564 = vsub.f32 %v2531, %v2556
    %v2565 = vmul.f32 %v2557, 1.442695
    %v2566 = vpow.pop %v2565
    %v2567 = vmul.f32 %v2558, 1.442695
    %v2568 = vpow.pop %v2567
    %v2569 = vmul.f32 %v2559, 1.442695
    %v2570 = vpow.pop %v2569
    %v2571 = vmul.f32 %v2560, 1.442695
    %v2572 = vpow.pop %v2571
    %v2573 = vmul.f32 %v2561, 1.442695
    %v2574 = vpow.pop %v2573
    %v2575 = vmul.f32 %v2562, 1.442695
    %v2576 = vpow.pop %v2575
    %v2577 = vmul.f32 %v2563, 1.442695
    %v2578 = vpow.pop %v2577
    %v2579 = vmul.f32 %v2564, 1.442695
    %v2580 = vpow.pop %v2579
    %v2581 = vsel %vm447, %v2566, 0.0
    %2582 = vadd.xlane.f32.xlu0 %v2581
    %v2583 = vpop.xlane.xlu0 %2582
    %v2584 = vsel %vm447, %v2568, 0.0
    %2585 = vadd.xlane.f32.xlu0 %v2584
    %v2586 = vpop.xlane.xlu0 %2585
    %v2587 = vsel %vm447, %v2570, 0.0
    %2588 = vadd.xlane.f32.xlu0 %v2587
    %v2589 = vpop.xlane.xlu0 %2588
    %v2590 = vsel %vm447, %v2572, 0.0
    %2591 = vadd.xlane.f32.xlu0 %v2590
    %v2592 = vpop.xlane.xlu0 %2591
    %v2593 = vsel %vm447, %v2574, 0.0
    %2594 = vadd.xlane.f32.xlu0 %v2593
    %v2595 = vpop.xlane.xlu0 %2594
    %v2596 = vsel %vm447, %v2576, 0.0
    %2597 = vadd.xlane.f32.xlu0 %v2596
    %v2598 = vpop.xlane.xlu0 %2597
    %v2599 = vsel %vm447, %v2578, 0.0
    %2600 = vadd.xlane.f32.xlu0 %v2599
    %v2601 = vpop.xlane.xlu0 %2600
    %v2602 = vsel %vm447, %v2580, 0.0
    %2603 = vadd.xlane.f32.xlu0 %v2602
    %v2604 = vpop.xlane.xlu0 %2603
    %v2605 = vrcp.pop %v2583
    %v2606 = vmul.f32 %v2583, %v2605
    %v2607 = vsub.f32 1.0, %v2606
    %v2608 = vmul.f32 %v2605, %v2607
    %v2609 = vadd.f32 %v2605, %v2608
    %vm2610 = vweird.f32 %v2583
    %vm2611 = vweird.f32 %v2605
    %vm2612 = vmor %vm2610, %vm2611
    %v2613 = vsel %vm2612, %v2605, %v2609
    %v2614 = vand.u32 2147483647, %v2583
    %vm2615 = vcmp.eq.f32.partialorder %v2614, 8.507059e+37
    %v2616 = vand.u32 %v2583, 2147483648
    %v2617 = vor.u32 1.1754944e-38, %v2616
    %v2618 = vsel %vm2615, %v2617, %v2613
    %v2619 = vmul.f32 %v2566, %v2618
    %v2620 = vrcp.pop %v2586
    %v2621 = vmul.f32 %v2586, %v2620
    %v2622 = vsub.f32 1.0, %v2621
    %v2623 = vmul.f32 %v2620, %v2622
    %v2624 = vadd.f32 %v2620, %v2623
    %vm2625 = vweird.f32 %v2586
    %vm2626 = vweird.f32 %v2620
    %vm2627 = vmor %vm2625, %vm2626
    %v2628 = vsel %vm2627, %v2620, %v2624
    %v2629 = vand.u32 2147483647, %v2586
    %vm2630 = vcmp.eq.f32.partialorder %v2629, 8.507059e+37
    %v2631 = vand.u32 %v2586, 2147483648
    %v2632 = vor.u32 1.1754944e-38, %v2631
    %v2633 = vsel %vm2630, %v2632, %v2628
    %v2634 = vmul.f32 %v2568, %v2633
    %v2635 = vrcp.pop %v2589
    %v2636 = vmul.f32 %v2589, %v2635
    %v2637 = vsub.f32 1.0, %v2636
    %v2638 = vmul.f32 %v2635, %v2637
    %v2639 = vadd.f32 %v2635, %v2638
    %vm2640 = vweird.f32 %v2589
    %vm2641 = vweird.f32 %v2635
    %vm2642 = vmor %vm2640, %vm2641
    %v2643 = vsel %vm2642, %v2635, %v2639
    %v2644 = vand.u32 2147483647, %v2589
    %vm2645 = vcmp.eq.f32.partialorder %v2644, 8.507059e+37
    %v2646 = vand.u32 %v2589, 2147483648
    %v2647 = vor.u32 1.1754944e-38, %v2646
    %v2648 = vsel %vm2645, %v2647, %v2643
    %v2649 = vmul.f32 %v2570, %v2648
    %v2650 = vrcp.pop %v2592
    %v2651 = vmul.f32 %v2592, %v2650
    %v2652 = vsub.f32 1.0, %v2651
    %v2653 = vmul.f32 %v2650, %v2652
    %v2654 = vadd.f32 %v2650, %v2653
    %vm2655 = vweird.f32 %v2592
    %vm2656 = vweird.f32 %v2650
    %vm2657 = vmor %vm2655, %vm2656
    %v2658 = vsel %vm2657, %v2650, %v2654
    %v2659 = vand.u32 2147483647, %v2592
    %vm2660 = vcmp.eq.f32.partialorder %v2659, 8.507059e+37
    %v2661 = vand.u32 %v2592, 2147483648
    %v2662 = vor.u32 1.1754944e-38, %v2661
    %v2663 = vsel %vm2660, %v2662, %v2658
    %v2664 = vmul.f32 %v2572, %v2663
    %v2665 = vrcp.pop %v2595
    %v2666 = vmul.f32 %v2595, %v2665
    %v2667 = vsub.f32 1.0, %v2666
    %v2668 = vmul.f32 %v2665, %v2667
    %v2669 = vadd.f32 %v2665, %v2668
    %vm2670 = vweird.f32 %v2595
    %vm2671 = vweird.f32 %v2665
    %vm2672 = vmor %vm2670, %vm2671
    %v2673 = vsel %vm2672, %v2665, %v2669
    %v2674 = vand.u32 2147483647, %v2595
    %vm2675 = vcmp.eq.f32.partialorder %v2674, 8.507059e+37
    %v2676 = vand.u32 %v2595, 2147483648
    %v2677 = vor.u32 1.1754944e-38, %v2676
    %v2678 = vsel %vm2675, %v2677, %v2673
    %v2679 = vmul.f32 %v2574, %v2678
    %v2680 = vrcp.pop %v2598
    %v2681 = vmul.f32 %v2598, %v2680
    %v2682 = vsub.f32 1.0, %v2681
    %v2683 = vmul.f32 %v2680, %v2682
    %v2684 = vadd.f32 %v2680, %v2683
    %vm2685 = vweird.f32 %v2598
    %vm2686 = vweird.f32 %v2680
    %vm2687 = vmor %vm2685, %vm2686
    %v2688 = vsel %vm2687, %v2680, %v2684
    %v2689 = vand.u32 2147483647, %v2598
    %vm2690 = vcmp.eq.f32.partialorder %v2689, 8.507059e+37
    %v2691 = vand.u32 %v2598, 2147483648
    %v2692 = vor.u32 1.1754944e-38, %v2691
    %v2693 = vsel %vm2690, %v2692, %v2688
    %v2694 = vmul.f32 %v2576, %v2693
    %v2695 = vrcp.pop %v2601
    %v2696 = vmul.f32 %v2601, %v2695
    %v2697 = vsub.f32 1.0, %v2696
    %v2698 = vmul.f32 %v2695, %v2697
    %v2699 = vadd.f32 %v2695, %v2698
    %vm2700 = vweird.f32 %v2601
    %vm2701 = vweird.f32 %v2695
    %vm2702 = vmor %vm2700, %vm2701
    %v2703 = vsel %vm2702, %v2695, %v2699
    %v2704 = vand.u32 2147483647, %v2601
    %vm2705 = vcmp.eq.f32.partialorder %v2704, 8.507059e+37
    %v2706 = vand.u32 %v2601, 2147483648
    %v2707 = vor.u32 1.1754944e-38, %v2706
    %v2708 = vsel %vm2705, %v2707, %v2703
    %v2709 = vmul.f32 %v2578, %v2708
    %v2710 = vrcp.pop %v2604
    %v2711 = vmul.f32 %v2604, %v2710
    %v2712 = vsub.f32 1.0, %v2711
    %v2713 = vmul.f32 %v2710, %v2712
    %v2714 = vadd.f32 %v2710, %v2713
    %vm2715 = vweird.f32 %v2604
    %vm2716 = vweird.f32 %v2710
    %vm2717 = vmor %vm2715, %vm2716
    %v2718 = vsel %vm2717, %v2710, %v2714
    %v2719 = vand.u32 2147483647, %v2604
    %vm2720 = vcmp.eq.f32.partialorder %v2719, 8.507059e+37
    %v2721 = vand.u32 %v2604, 2147483648
    %v2722 = vor.u32 1.1754944e-38, %v2721
    %v2723 = vsel %vm2720, %v2722, %v2718
    %v2724 = vmul.f32 %v2580, %v2723
    %2725 = vrot.lane.b32.xlu0 %v421, 40
    %v2726 = vpop.permute.xlu0 %2725
    %v2729 = vsel %vm447, %v2619, 0
    %2731 = vmatpush.msra.mxu0 0.0
    %2732 = vmatpush.msra.mxu0 0.0
    %2733 = vmatpush.msra.mxu0 0.0
    %2734 = vmatpush.msra.mxu0 0.0
    %2735 = vmatpush.msra.mxu0 0.0
    %2736 = vmatpush.msra.mxu0 0.0
    %2737 = vmatpush.msra.mxu0 0.0
    %2738 = vmatpush.msra.mxu0 0.0
    %2739 = vmatpush.msra.mxu0 0.0
    %2740 = vmatpush.msra.mxu0 0.0
    %2741 = vmatpush.msra.mxu0 0.0
    %2742 = vmatpush.msra.mxu0 0.0
    %2743 = vmatpush.msra.mxu0 0.0
    %2744 = vmatpush.msra.mxu0 0.0
    %2745 = vmatpush.msra.mxu0 0.0
    %2746 = vmatpush.msra.mxu0 %v2726
    %2747 = vmatmul.f32.gmra.mxu0 %v2729
    %v2748 = vpop.f32.mrf.mxu0
    %v2749 = vadd.f32 0.0, %v2748
    %2750 = vdwg.mxu0
    %2751 = vrot.lane.b32.xlu0 %v424, 40
    %v2752 = vpop.permute.xlu0 %2751
    %v2755 = vsel %vm447, %v2634, 0
    %2757 = vmatpush.msra.mxu0 0.0
    %2758 = vmatpush.msra.mxu0 0.0
    %2759 = vmatpush.msra.mxu0 0.0
    %2760 = vmatpush.msra.mxu0 0.0
    %2761 = vmatpush.msra.mxu0 0.0
    %2762 = vmatpush.msra.mxu0 0.0
    %2763 = vmatpush.msra.mxu0 0.0
    %2764 = vmatpush.msra.mxu0 0.0
    %2765 = vmatpush.msra.mxu0 0.0
    %2766 = vmatpush.msra.mxu0 0.0
    %2767 = vmatpush.msra.mxu0 0.0
    %2768 = vmatpush.msra.mxu0 0.0
    %2769 = vmatpush.msra.mxu0 0.0
    %2770 = vmatpush.msra.mxu0 0.0
    %2771 = vmatpush.msra.mxu0 0.0
    %2772 = vmatpush.msra.mxu0 %v2752
    %2773 = vmatmul.f32.gmra.mxu0 %v2755
    %v2774 = vpop.f32.mrf.mxu0
    %v2775 = vadd.f32 0.0, %v2774
    %2776 = vdwg.mxu0
    %2777 = vrot.lane.b32.xlu0 %v427, 40
    %v2778 = vpop.permute.xlu0 %2777
    %v2781 = vsel %vm447, %v2649, 0
    %2783 = vmatpush.msra.mxu0 0.0
    %2784 = vmatpush.msra.mxu0 0.0
    %2785 = vmatpush.msra.mxu0 0.0
    %2786 = vmatpush.msra.mxu0 0.0
    %2787 = vmatpush.msra.mxu0 0.0
    %2788 = vmatpush.msra.mxu0 0.0
    %2789 = vmatpush.msra.mxu0 0.0
    %2790 = vmatpush.msra.mxu0 0.0
    %2791 = vmatpush.msra.mxu0 0.0
    %2792 = vmatpush.msra.mxu0 0.0
    %2793 = vmatpush.msra.mxu0 0.0
    %2794 = vmatpush.msra.mxu0 0.0
    %2795 = vmatpush.msra.mxu0 0.0
    %2796 = vmatpush.msra.mxu0 0.0
    %2797 = vmatpush.msra.mxu0 0.0
    %2798 = vmatpush.msra.mxu0 %v2778
    %2799 = vmatmul.f32.gmra.mxu0 %v2781
    %v2800 = vpop.f32.mrf.mxu0
    %v2801 = vadd.f32 0.0, %v2800
    %2802 = vdwg.mxu0
    %2803 = vrot.lane.b32.xlu0 %v430, 40
    %v2804 = vpop.permute.xlu0 %2803
    %v2807 = vsel %vm447, %v2664, 0
    %2809 = vmatpush.msra.mxu0 0.0
    %2810 = vmatpush.msra.mxu0 0.0
    %2811 = vmatpush.msra.mxu0 0.0
    %2812 = vmatpush.msra.mxu0 0.0
    %2813 = vmatpush.msra.mxu0 0.0
    %2814 = vmatpush.msra.mxu0 0.0
    %2815 = vmatpush.msra.mxu0 0.0
    %2816 = vmatpush.msra.mxu0 0.0
    %2817 = vmatpush.msra.mxu0 0.0
    %2818 = vmatpush.msra.mxu0 0.0
    %2819 = vmatpush.msra.mxu0 0.0
    %2820 = vmatpush.msra.mxu0 0.0
    %2821 = vmatpush.msra.mxu0 0.0
    %2822 = vmatpush.msra.mxu0 0.0
    %2823 = vmatpush.msra.mxu0 0.0
    %2824 = vmatpush.msra.mxu0 %v2804
    %2825 = vmatmul.f32.gmra.mxu0 %v2807
    %v2826 = vpop.f32.mrf.mxu0
    %v2827 = vadd.f32 0.0, %v2826
    %2828 = vdwg.mxu0
    %2829 = vrot.lane.b32.xlu0 %v433, 40
    %v2830 = vpop.permute.xlu0 %2829
    %v2833 = vsel %vm447, %v2679, 0
    %2835 = vmatpush.msra.mxu0 0.0
    %2836 = vmatpush.msra.mxu0 0.0
    %2837 = vmatpush.msra.mxu0 0.0
    %2838 = vmatpush.msra.mxu0 0.0
    %2839 = vmatpush.msra.mxu0 0.0
    %2840 = vmatpush.msra.mxu0 0.0
    %2841 = vmatpush.msra.mxu0 0.0
    %2842 = vmatpush.msra.mxu0 0.0
    %2843 = vmatpush.msra.mxu0 0.0
    %2844 = vmatpush.msra.mxu0 0.0
    %2845 = vmatpush.msra.mxu0 0.0
    %2846 = vmatpush.msra.mxu0 0.0
    %2847 = vmatpush.msra.mxu0 0.0
    %2848 = vmatpush.msra.mxu0 0.0
    %2849 = vmatpush.msra.mxu0 0.0
    %2850 = vmatpush.msra.mxu0 %v2830
    %2851 = vmatmul.f32.gmra.mxu0 %v2833
    %v2852 = vpop.f32.mrf.mxu0
    %v2853 = vadd.f32 0.0, %v2852
    %2854 = vdwg.mxu0
    %2855 = vrot.lane.b32.xlu0 %v436, 40
    %v2856 = vpop.permute.xlu0 %2855
    %v2859 = vsel %vm447, %v2694, 0
    %2861 = vmatpush.msra.mxu0 0.0
    %2862 = vmatpush.msra.mxu0 0.0
    %2863 = vmatpush.msra.mxu0 0.0
    %2864 = vmatpush.msra.mxu0 0.0
    %2865 = vmatpush.msra.mxu0 0.0
    %2866 = vmatpush.msra.mxu0 0.0
    %2867 = vmatpush.msra.mxu0 0.0
    %2868 = vmatpush.msra.mxu0 0.0
    %2869 = vmatpush.msra.mxu0 0.0
    %2870 = vmatpush.msra.mxu0 0.0
    %2871 = vmatpush.msra.mxu0 0.0
    %2872 = vmatpush.msra.mxu0 0.0
    %2873 = vmatpush.msra.mxu0 0.0
    %2874 = vmatpush.msra.mxu0 0.0
    %2875 = vmatpush.msra.mxu0 0.0
    %2876 = vmatpush.msra.mxu0 %v2856
    %2877 = vmatmul.f32.gmra.mxu0 %v2859
    %v2878 = vpop.f32.mrf.mxu0
    %v2879 = vadd.f32 0.0, %v2878
    %2880 = vdwg.mxu0
    %2881 = vrot.lane.b32.xlu0 %v439, 40
    %v2882 = vpop.permute.xlu0 %2881
    %v2885 = vsel %vm447, %v2709, 0
    %2887 = vmatpush.msra.mxu0 0.0
    %2888 = vmatpush.msra.mxu0 0.0
    %2889 = vmatpush.msra.mxu0 0.0
    %2890 = vmatpush.msra.mxu0 0.0
    %2891 = vmatpush.msra.mxu0 0.0
    %2892 = vmatpush.msra.mxu0 0.0
    %2893 = vmatpush.msra.mxu0 0.0
    %2894 = vmatpush.msra.mxu0 0.0
    %2895 = vmatpush.msra.mxu0 0.0
    %2896 = vmatpush.msra.mxu0 0.0
    %2897 = vmatpush.msra.mxu0 0.0
    %2898 = vmatpush.msra.mxu0 0.0
    %2899 = vmatpush.msra.mxu0 0.0
    %2900 = vmatpush.msra.mxu0 0.0
    %2901 = vmatpush.msra.mxu0 0.0
    %2902 = vmatpush.msra.mxu0 %v2882
    %2903 = vmatmul.f32.gmra.mxu0 %v2885
    %v2904 = vpop.f32.mrf.mxu0
    %v2905 = vadd.f32 0.0, %v2904
    %2906 = vdwg.mxu0
    %2907 = vrot.lane.b32.xlu0 %v442, 40
    %v2908 = vpop.permute.xlu0 %2907
    %v2911 = vsel %vm447, %v2724, 0
    %2913 = vmatpush.msra.mxu0 0.0
    %2914 = vmatpush.msra.mxu0 0.0
    %2915 = vmatpush.msra.mxu0 0.0
    %2916 = vmatpush.msra.mxu0 0.0
    %2917 = vmatpush.msra.mxu0 0.0
    %2918 = vmatpush.msra.mxu0 0.0
    %2919 = vmatpush.msra.mxu0 0.0
    %2920 = vmatpush.msra.mxu0 0.0
    %2921 = vmatpush.msra.mxu0 0.0
    %2922 = vmatpush.msra.mxu0 0.0
    %2923 = vmatpush.msra.mxu0 0.0
    %2924 = vmatpush.msra.mxu0 0.0
    %2925 = vmatpush.msra.mxu0 0.0
    %2926 = vmatpush.msra.mxu0 0.0
    %2927 = vmatpush.msra.mxu0 0.0
    %2928 = vmatpush.msra.mxu0 %v2908
    %2929 = vmatmul.f32.gmra.mxu0 %v2911
    %v2930 = vpop.f32.mrf.mxu0
    %v2931 = vadd.f32 0.0, %v2930
    %2932 = vdwg.mxu0
    %2941 = vrot.lane.b32.xlu0 %v1501, 8
    %v2942 = vpop.permute.xlu0 %2941
    %2943 = vrot.lane.b32.xlu0 %v1527, 8
    %v2944 = vpop.permute.xlu0 %2943
    %2945 = vrot.lane.b32.xlu0 %v1553, 8
    %v2946 = vpop.permute.xlu0 %2945
    %2947 = vrot.lane.b32.xlu0 %v1579, 8
    %v2948 = vpop.permute.xlu0 %2947
    %2949 = vrot.lane.b32.xlu0 %v1605, 8
    %v2950 = vpop.permute.xlu0 %2949
    %2951 = vrot.lane.b32.xlu0 %v1631, 8
    %v2952 = vpop.permute.xlu0 %2951
    %2953 = vrot.lane.b32.xlu0 %v1657, 8
    %v2954 = vpop.permute.xlu0 %2953
    %2955 = vrot.lane.b32.xlu0 %v1683, 8
    %v2956 = vpop.permute.xlu0 %2955
    %2973 = vrot.lane.b32.xlu0 %v2125, 16
    %v2974 = vpop.permute.xlu0 %2973
    %2975 = vrot.lane.b32.xlu0 %v2151, 16
    %v2976 = vpop.permute.xlu0 %2975
    %2977 = vrot.lane.b32.xlu0 %v2177, 16
    %v2978 = vpop.permute.xlu0 %2977
    %2979 = vrot.lane.b32.xlu0 %v2203, 16
    %v2980 = vpop.permute.xlu0 %2979
    %2981 = vrot.lane.b32.xlu0 %v2229, 16
    %v2982 = vpop.permute.xlu0 %2981
    %2983 = vrot.lane.b32.xlu0 %v2255, 16
    %v2984 = vpop.permute.xlu0 %2983
    %2985 = vrot.lane.b32.xlu0 %v2281, 16
    %v2986 = vpop.permute.xlu0 %2985
    %2987 = vrot.lane.b32.xlu0 %v2307, 16
    %v2988 = vpop.permute.xlu0 %2987
    %3005 = vrot.lane.b32.xlu0 %v2749, 24
    %v3006 = vpop.permute.xlu0 %3005
    %3007 = vrot.lane.b32.xlu0 %v2775, 24
    %v3008 = vpop.permute.xlu0 %3007
    %3009 = vrot.lane.b32.xlu0 %v2801, 24
    %v3010 = vpop.permute.xlu0 %3009
    %3011 = vrot.lane.b32.xlu0 %v2827, 24
    %v3012 = vpop.permute.xlu0 %3011
    %3013 = vrot.lane.b32.xlu0 %v2853, 24
    %v3014 = vpop.permute.xlu0 %3013
    %3015 = vrot.lane.b32.xlu0 %v2879, 24
    %v3016 = vpop.permute.xlu0 %3015
    %3017 = vrot.lane.b32.xlu0 %v2905, 24
    %v3018 = vpop.permute.xlu0 %3017
    %3019 = vrot.lane.b32.xlu0 %v2931, 24
    %v3020 = vpop.permute.xlu0 %3019
    %v3029 = vsel %vm447, %v877, %v2942
    %v3030 = vsel %vm447, %v903, %v2944
    %v3031 = vsel %vm447, %v929, %v2946
    %v3032 = vsel %vm447, %v955, %v2948
    %v3033 = vsel %vm447, %v981, %v2950
    %v3034 = vsel %vm447, %v1007, %v2952
    %v3035 = vsel %vm447, %v1033, %v2954
    %v3036 = vsel %vm447, %v1059, %v2956
    %vm3037 = vcmask 130048
    %v3038 = vsel %vm3037, %v3029, %v2974
    %v3039 = vsel %vm3037, %v3030, %v2976
    %v3040 = vsel %vm3037, %v3031, %v2978
    %v3041 = vsel %vm3037, %v3032, %v2980
    %v3042 = vsel %vm3037, %v3033, %v2982
    %v3043 = vsel %vm3037, %v3034, %v2984
    %v3044 = vsel %vm3037, %v3035, %v2986
    %v3045 = vsel %vm3037, %v3036, %v2988
    %vm3046 = vcmask 195584
    %v3047 = vsel %vm3046, %v3038, %v3006
    %v3048 = vsel %vm3046, %v3039, %v3008
    %v3049 = vsel %vm3046, %v3040, %v3010
    %v3050 = vsel %vm3046, %v3041, %v3012
    %v3051 = vsel %vm3046, %v3042, %v3014
    %v3052 = vsel %vm3046, %v3043, %v3016
    %v3053 = vsel %vm3046, %v3044, %v3018
    %v3054 = vsel %vm3046, %v3045, %v3020
    %v3055 = vld [vmem:[%s2] sm:$0xff]
    %v3056 = vld [vmem:[%s2 + $0x8] sm:$0xff]
    %v3057 = vld [vmem:[%s2 + $0x10] sm:$0xff]
    %v3058 = vld [vmem:[%s2 + $0x18] sm:$0xff]
    %v3059 = vld [vmem:[%s4 + $0x1] sm:$0x1]
    %v3060 = vperm.slane %v3059, 0
    %v3062 = vsel %vm347, %v3047, 0
    %v3065 = vsel %vm347, %v3048, 0
    %v3068 = vsel %vm347, %v3049, 0
    %v3071 = vsel %vm347, %v3050, 0
    %v3074 = vsel %vm347, %v3051, 0
    %v3077 = vsel %vm347, %v3052, 0
    %v3080 = vsel %vm347, %v3053, 0
    %v3083 = vsel %vm347, %v3054, 0
    %3085 = vmatpush.msra.mxu0 0.0
    %3086 = vmatpush.msra.mxu0 0.0
    %3087 = vmatpush.msra.mxu0 0.0
    %3088 = vmatpush.msra.mxu0 0.0
    %3089 = vmatpush.msra.mxu0 0.0
    %3090 = vmatpush.msra.mxu0 0.0
    %3091 = vmatpush.msra.mxu0 0.0
    %3092 = vmatpush.msra.mxu0 0.0
    %3093 = vmatpush.msra.mxu0 0.0
    %3094 = vmatpush.msra.mxu0 0.0
    %3095 = vmatpush.msra.mxu0 0.0
    %3096 = vmatpush.msra.mxu0 0.0
    %3097 = vmatpush.msra.mxu0 %v3058
    %3098 = vmatpush.msra.mxu0 %v3057
    %3099 = vmatpush.msra.mxu0 %v3056
    %3100 = vmatpush.msra.mxu0 %v3055
    %3101 = vmatmul.f32.gmra.mxu0 %v3062
    %v3102 = vpop.f32.mrf.mxu0
    %v3103 = vadd.f32 %v3060, %v3102
    %3104 = vmatmul.f32.gmra.mxu0 %v3065
    %v3105 = vpop.f32.mrf.mxu0
    %v3106 = vadd.f32 %v3060, %v3105
    %3107 = vmatmul.f32.gmra.mxu0 %v3068
    %v3108 = vpop.f32.mrf.mxu0
    %v3109 = vadd.f32 %v3060, %v3108
    %3110 = vmatmul.f32.gmra.mxu0 %v3071
    %v3111 = vpop.f32.mrf.mxu0
    %v3112 = vadd.f32 %v3060, %v3111
    %3113 = vmatmul.f32.gmra.mxu0 %v3074
    %v3114 = vpop.f32.mrf.mxu0
    %v3115 = vadd.f32 %v3060, %v3114
    %3116 = vmatmul.f32.gmra.mxu0 %v3077
    %v3117 = vpop.f32.mrf.mxu0
    %v3118 = vadd.f32 %v3060, %v3117
    %3119 = vmatmul.f32.gmra.mxu0 %v3080
    %v3120 = vpop.f32.mrf.mxu0
    %v3121 = vadd.f32 %v3060, %v3120
    %3122 = vmatmul.f32.gmra.mxu0 %v3083
    %v3123 = vpop.f32.mrf.mxu0
    %v3124 = vadd.f32 %v3060, %v3123
    %3125 = vdwg.mxu0
    %v3126 = vmul.u32 %v40, 8
    %v3127 = vmul.u32 %v41, 8
    %v3128 = vmul.u32 %v42, 8
    %v3129 = vmul.u32 %v43, 8
    %v3130 = vmul.u32 %v44, 8
    %v3131 = vmul.u32 %v45, 8
    %v3132 = vmul.u32 %v46, 8
    %v3133 = vmul.u32 %v47, 8
    %v3134 = vadd.s32 %v3126, %v48
    %v3135 = vadd.s32 %v3127, %v49
    %v3136 = vadd.s32 %v3128, %v50
    %v3137 = vadd.s32 %v3129, %v51
    %v3138 = vadd.s32 %v3130, %v52
    %v3139 = vadd.s32 %v3131, %v53
    %v3140 = vadd.s32 %v3132, %v54
    %v3141 = vadd.s32 %v3133, %v55
    %vm3142 = vcmp.eq.s32.totalorder %v39, %v3134
    %vm3143 = vcmp.eq.s32.totalorder %v39, %v3135
    %vm3144 = vcmp.eq.s32.totalorder %v39, %v3136
    %vm3145 = vcmp.eq.s32.totalorder %v39, %v3137
    %vm3146 = vcmp.eq.s32.totalorder %v39, %v3138
    %vm3147 = vcmp.eq.s32.totalorder %v39, %v3139
    %vm3148 = vcmp.eq.s32.totalorder %v39, %v3140
    %vm3149 = vcmp.eq.s32.totalorder %v39, %v3141
    %v3150 = vsel %vm3142, 1, 0
    %v3151 = vsel %vm3143, 1, 0
    %v3152 = vsel %vm3144, 1, 0
    %v3153 = vsel %vm3145, 1, 0
    %v3154 = vsel %vm3146, 1, 0
    %v3155 = vsel %vm3147, 1, 0
    %v3156 = vsel %vm3148, 1, 0
    %v3157 = vsel %vm3149, 1, 0
    %v3158 = vcvt.s32.f32 %v3150
    %v3159 = vcvt.s32.f32 %v3151
    %v3160 = vcvt.s32.f32 %v3152
    %v3161 = vcvt.s32.f32 %v3153
    %v3162 = vcvt.s32.f32 %v3154
    %v3163 = vcvt.s32.f32 %v3155
    %v3164 = vcvt.s32.f32 %v3156
    %v3165 = vcvt.s32.f32 %v3157
    %v3167 = vsel %vm104, %v3158, 0
    %v3170 = vsel %vm104, %v3159, 0
    %v3173 = vsel %vm104, %v3160, 0
    %v3176 = vsel %vm104, %v3161, 0
    %v3179 = vsel %vm104, %v3162, 0
    %v3182 = vsel %vm104, %v3163, 0
    %v3185 = vsel %vm104, %v3164, 0
    %v3188 = vsel %vm104, %v3165, 0
    %3190 = vmatpush.msra.mxu0 0.0
    %3191 = vmatpush.msra.mxu0 0.0
    %3192 = vmatpush.msra.mxu0 0.0
    %3193 = vmatpush.msra.mxu0 0.0
    %3194 = vmatpush.msra.mxu0 0.0
    %3195 = vmatpush.msra.mxu0 0.0
    %3196 = vmatpush.msra.mxu0 0.0
    %3197 = vmatpush.msra.mxu0 0.0
    %3198 = vmatpush.msra.mxu0 %v3124
    %3199 = vmatpush.msra.mxu0 %v3121
    %3200 = vmatpush.msra.mxu0 %v3118
    %3201 = vmatpush.msra.mxu0 %v3115
    %3202 = vmatpush.msra.mxu0 %v3112
    %3203 = vmatpush.msra.mxu0 %v3109
    %3204 = vmatpush.msra.mxu0 %v3106
    %3205 = vmatpush.msra.mxu0 %v3103
    %3206 = vmatmul.f32.gmra.mxu0 %v3167
    %v3207 = vpop.f32.mrf.mxu0
    %v3208 = vadd.f32 0.0, %v3207
    %3209 = vmatmul.f32.gmra.mxu0 %v3170
    %v3210 = vpop.f32.mrf.mxu0
    %v3211 = vadd.f32 0.0, %v3210
    %3212 = vmatmul.f32.gmra.mxu0 %v3173
    %v3213 = vpop.f32.mrf.mxu0
    %v3214 = vadd.f32 0.0, %v3213
    %3215 = vmatmul.f32.gmra.mxu0 %v3176
    %v3216 = vpop.f32.mrf.mxu0
    %v3217 = vadd.f32 0.0, %v3216
    %3218 = vmatmul.f32.gmra.mxu0 %v3179
    %v3219 = vpop.f32.mrf.mxu0
    %v3220 = vadd.f32 0.0, %v3219
    %3221 = vmatmul.f32.gmra.mxu0 %v3182
    %v3222 = vpop.f32.mrf.mxu0
    %v3223 = vadd.f32 0.0, %v3222
    %3224 = vmatmul.f32.gmra.mxu0 %v3185
    %v3225 = vpop.f32.mrf.mxu0
    %v3226 = vadd.f32 0.0, %v3225
    %3227 = vmatmul.f32.gmra.mxu0 %v3188
    %v3228 = vpop.f32.mrf.mxu0
    %v3229 = vadd.f32 0.0, %v3228
    %3230 = vdwg.mxu0
    %v3231 = vadd.f32 %v21, %v3208
    %v3232 = vadd.f32 %v22, %v3211
    %v3233 = vadd.f32 %v23, %v3214
    %v3234 = vadd.f32 %v24, %v3217
    %v3235 = vadd.f32 %v25, %v3220
    %v3236 = vadd.f32 %v26, %v3223
    %v3237 = vadd.f32 %v27, %v3226
    %v3238 = vadd.f32 %v28, %v3229
    %v3239 = vsel %vm347, %v3231, 0.0
    %3240 = vadd.xlane.f32.xlu0 %v3239
    %v3241 = vpop.xlane.xlu0 %3240
    %v3242 = vsel %vm347, %v3232, 0.0
    %3243 = vadd.xlane.f32.xlu0 %v3242
    %v3244 = vpop.xlane.xlu0 %3243
    %v3245 = vsel %vm347, %v3233, 0.0
    %3246 = vadd.xlane.f32.xlu0 %v3245
    %v3247 = vpop.xlane.xlu0 %3246
    %v3248 = vsel %vm347, %v3234, 0.0
    %3249 = vadd.xlane.f32.xlu0 %v3248
    %v3250 = vpop.xlane.xlu0 %3249
    %v3251 = vsel %vm347, %v3235, 0.0
    %3252 = vadd.xlane.f32.xlu0 %v3251
    %v3253 = vpop.xlane.xlu0 %3252
    %v3254 = vsel %vm347, %v3236, 0.0
    %3255 = vadd.xlane.f32.xlu0 %v3254
    %v3256 = vpop.xlane.xlu0 %3255
    %v3257 = vsel %vm347, %v3237, 0.0
    %3258 = vadd.xlane.f32.xlu0 %v3257
    %v3259 = vpop.xlane.xlu0 %3258
    %v3260 = vsel %vm347, %v3238, 0.0
    %3261 = vadd.xlane.f32.xlu0 %v3260
    %v3262 = vpop.xlane.xlu0 %3261
    %v3263 = vrcp.pop 32.0
    %v3264 = vmul.f32 32.0, %v3263
    %v3265 = vsub.f32 1.0, %v3264
    %v3266 = vmul.f32 %v3263, %v3265
    %v3267 = vadd.f32 %v3263, %v3266
    %vm3268 = vweird.f32 %v3263
    %v3269 = vsel %vm3268, %v3263, %v3267
    %v3270 = vmul.f32 %v3241, %v3269
    %v3271 = vmul.f32 %v3244, %v3269
    %v3272 = vmul.f32 %v3247, %v3269
    %v3273 = vmul.f32 %v3250, %v3269
    %v3274 = vmul.f32 %v3253, %v3269
    %v3275 = vmul.f32 %v3256, %v3269
    %v3276 = vmul.f32 %v3259, %v3269
    %v3277 = vmul.f32 %v3262, %v3269
    %v3278 = vsub.f32 %v3231, %v3270
    %v3279 = vsub.f32 %v3232, %v3271
    %v3280 = vsub.f32 %v3233, %v3272
    %v3281 = vsub.f32 %v3234, %v3273
    %v3282 = vsub.f32 %v3235, %v3274
    %v3283 = vsub.f32 %v3236, %v3275
    %v3284 = vsub.f32 %v3237, %v3276
    %v3285 = vsub.f32 %v3238, %v3277
    %v3286 = vmul.f32 %v3278, %v3278
    %v3287 = vmul.f32 %v3279, %v3279
    %v3288 = vmul.f32 %v3280, %v3280
    %v3289 = vmul.f32 %v3281, %v3281
    %v3290 = vmul.f32 %v3282, %v3282
    %v3291 = vmul.f32 %v3283, %v3283
    %v3292 = vmul.f32 %v3284, %v3284
    %v3293 = vmul.f32 %v3285, %v3285
    %v3294 = vsel %vm347, %v3286, 0.0
    %3295 = vadd.xlane.f32.xlu0 %v3294
    %v3296 = vpop.xlane.xlu0 %3295
    %v3297 = vsel %vm347, %v3287, 0.0
    %3298 = vadd.xlane.f32.xlu0 %v3297
    %v3299 = vpop.xlane.xlu0 %3298
    %v3300 = vsel %vm347, %v3288, 0.0
    %3301 = vadd.xlane.f32.xlu0 %v3300
    %v3302 = vpop.xlane.xlu0 %3301
    %v3303 = vsel %vm347, %v3289, 0.0
    %3304 = vadd.xlane.f32.xlu0 %v3303
    %v3305 = vpop.xlane.xlu0 %3304
    %v3306 = vsel %vm347, %v3290, 0.0
    %3307 = vadd.xlane.f32.xlu0 %v3306
    %v3308 = vpop.xlane.xlu0 %3307
    %v3309 = vsel %vm347, %v3291, 0.0
    %3310 = vadd.xlane.f32.xlu0 %v3309
    %v3311 = vpop.xlane.xlu0 %3310
    %v3312 = vsel %vm347, %v3292, 0.0
    %3313 = vadd.xlane.f32.xlu0 %v3312
    %v3314 = vpop.xlane.xlu0 %3313
    %v3315 = vsel %vm347, %v3293, 0.0
    %3316 = vadd.xlane.f32.xlu0 %v3315
    %v3317 = vpop.xlane.xlu0 %3316
    %v3318 = vmul.f32 %v3296, %v3269
    %v3319 = vmul.f32 %v3299, %v3269
    %v3320 = vmul.f32 %v3302, %v3269
    %v3321 = vmul.f32 %v3305, %v3269
    %v3322 = vmul.f32 %v3308, %v3269
    %v3323 = vmul.f32 %v3311, %v3269
    %v3324 = vmul.f32 %v3314, %v3269
    %v3325 = vmul.f32 %v3317, %v3269
    %v3326 = vadd.f32 %v3318, 1e-05
    %v3327 = vadd.f32 %v3319, 1e-05
    %v3328 = vadd.f32 %v3320, 1e-05
    %v3329 = vadd.f32 %v3321, 1e-05
    %v3330 = vadd.f32 %v3322, 1e-05
    %v3331 = vadd.f32 %v3323, 1e-05
    %v3332 = vadd.f32 %v3324, 1e-05
    %v3333 = vadd.f32 %v3325, 1e-05
    %v3334 = vrsqrt.pop %v3326
    %v3335 = vmul.f32 %v3334, %v3326
    %v3336 = vmul.f32 %v3335, %v3334
    %v3337 = vmul.f32 0.5, %v3336
    %v3338 = vsub.f32 1.5, %v3337
    %v3339 = vmul.f32 %v3334, %v3338
    %vm3340 = vweird.f32 %v3326
    %vm3341 = vweird.f32 %v3334
    %vm3342 = vmor %vm3340, %vm3341
    %v3343 = vsel %vm3342, %v3334, %v3339
    %v3344 = vrsqrt.pop %v3327
    %v3345 = vmul.f32 %v3344, %v3327
    %v3346 = vmul.f32 %v3345, %v3344
    %v3347 = vmul.f32 0.5, %v3346
    %v3348 = vsub.f32 1.5, %v3347
    %v3349 = vmul.f32 %v3344, %v3348
    %vm3350 = vweird.f32 %v3327
    %vm3351 = vweird.f32 %v3344
    %vm3352 = vmor %vm3350, %vm3351
    %v3353 = vsel %vm3352, %v3344, %v3349
    %v3354 = vrsqrt.pop %v3328
    %v3355 = vmul.f32 %v3354, %v3328
    %v3356 = vmul.f32 %v3355, %v3354
    %v3357 = vmul.f32 0.5, %v3356
    %v3358 = vsub.f32 1.5, %v3357
    %v3359 = vmul.f32 %v3354, %v3358
    %vm3360 = vweird.f32 %v3328
    %vm3361 = vweird.f32 %v3354
    %vm3362 = vmor %vm3360, %vm3361
    %v3363 = vsel %vm3362, %v3354, %v3359
    %v3364 = vrsqrt.pop %v3329
    %v3365 = vmul.f32 %v3364, %v3329
    %v3366 = vmul.f32 %v3365, %v3364
    %v3367 = vmul.f32 0.5, %v3366
    %v3368 = vsub.f32 1.5, %v3367
    %v3369 = vmul.f32 %v3364, %v3368
    %vm3370 = vweird.f32 %v3329
    %vm3371 = vweird.f32 %v3364
    %vm3372 = vmor %vm3370, %vm3371
    %v3373 = vsel %vm3372, %v3364, %v3369
    %v3374 = vrsqrt.pop %v3330
    %v3375 = vmul.f32 %v3374, %v3330
    %v3376 = vmul.f32 %v3375, %v3374
    %v3377 = vmul.f32 0.5, %v3376
    %v3378 = vsub.f32 1.5, %v3377
    %v3379 = vmul.f32 %v3374, %v3378
    %vm3380 = vweird.f32 %v3330
    %vm3381 = vweird.f32 %v3374
    %vm3382 = vmor %vm3380, %vm3381
    %v3383 = vsel %vm3382, %v3374, %v3379
    %v3384 = vrsqrt.pop %v3331
    %v3385 = vmul.f32 %v3384, %v3331
    %v3386 = vmul.f32 %v3385, %v3384
    %v3387 = vmul.f32 0.5, %v3386
    %v3388 = vsub.f32 1.5, %v3387
    %v3389 = vmul.f32 %v3384, %v3388
    %vm3390 = vweird.f32 %v3331
    %vm3391 = vweird.f32 %v3384
    %vm3392 = vmor %vm3390, %vm3391
    %v3393 = vsel %vm3392, %v3384, %v3389
    %v3394 = vrsqrt.pop %v3332
    %v3395 = vmul.f32 %v3394, %v3332
    %v3396 = vmul.f32 %v3395, %v3394
    %v3397 = vmul.f32 0.5, %v3396
    %v3398 = vsub.f32 1.5, %v3397
    %v3399 = vmul.f32 %v3394, %v3398
    %vm3400 = vweird.f32 %v3332
    %vm3401 = vweird.f32 %v3394
    %vm3402 = vmor %vm3400, %vm3401
    %v3403 = vsel %vm3402, %v3394, %v3399
    %v3404 = vrsqrt.pop %v3333
    %v3405 = vmul.f32 %v3404, %v3333
    %v3406 = vmul.f32 %v3405, %v3404
    %v3407 = vmul.f32 0.5, %v3406
    %v3408 = vsub.f32 1.5, %v3407
    %v3409 = vmul.f32 %v3404, %v3408
    %vm3410 = vweird.f32 %v3333
    %vm3411 = vweird.f32 %v3404
    %vm3412 = vmor %vm3410, %vm3411
    %v3413 = vsel %vm3412, %v3404, %v3409
    %v3414 = vmul.f32 %v3278, %v3343
    %v3415 = vmul.f32 %v3279, %v3353
    %v3416 = vmul.f32 %v3280, %v3363
    %v3417 = vmul.f32 %v3281, %v3373
    %v3418 = vmul.f32 %v3282, %v3383
    %v3419 = vmul.f32 %v3283, %v3393
    %v3420 = vmul.f32 %v3284, %v3403
    %v3421 = vmul.f32 %v3285, %v3413
    %v3422 = vld [vmem:[%s4 + $0x2] sm:$0x1]
    %v3423 = vperm.slane %v3422, 0
    %v3424 = vmul.f32 %v3414, %v3423
    %v3425 = vmul.f32 %v3415, %v3423
    %v3426 = vmul.f32 %v3416, %v3423
    %v3427 = vmul.f32 %v3417, %v3423
    %v3428 = vmul.f32 %v3418, %v3423
    %v3429 = vmul.f32 %v3419, %v3423
    %v3430 = vmul.f32 %v3420, %v3423
    %v3431 = vmul.f32 %v3421, %v3423
    %v3432 = vld [vmem:[%s4 + $0x3] sm:$0x1]
    %v3433 = vperm.slane %v3432, 0
    %v3434 = vadd.f32 %v3424, %v3433
    %v3435 = vadd.f32 %v3425, %v3433
    %v3436 = vadd.f32 %v3426, %v3433
    %v3437 = vadd.f32 %v3427, %v3433
    %v3438 = vadd.f32 %v3428, %v3433
    %v3439 = vadd.f32 %v3429, %v3433
    %v3440 = vadd.f32 %v3430, %v3433
    %v3441 = vadd.f32 %v3431, %v3433
    %v3442 = vld [vmem:[%s4 + $0x4] sm:$0x1]
    %v3443 = vperm.slane %v3442, 0
    %3448 = vrot.lane.b32.xlu0 %v3055, 96
    %v3449 = vpop.permute.xlu0 %3448
    %3450 = vrot.lane.b32.xlu0 %v3056, 96
    %v3451 = vpop.permute.xlu0 %3450
    %3452 = vrot.lane.b32.xlu0 %v3057, 96
    %v3453 = vpop.permute.xlu0 %3452
    %3454 = vrot.lane.b32.xlu0 %v3058, 96
    %v3455 = vpop.permute.xlu0 %3454
    %v3461 = vsel %vm347, %v3434, 0
    %v3464 = vsel %vm347, %v3435, 0
    %v3467 = vsel %vm347, %v3436, 0
    %v3470 = vsel %vm347, %v3437, 0
    %v3473 = vsel %vm347, %v3438, 0
    %v3476 = vsel %vm347, %v3439, 0
    %v3479 = vsel %vm347, %v3440, 0
    %v3482 = vsel %vm347, %v3441, 0
    %3484 = vmatpush.msra.mxu0 0.0
    %3485 = vmatpush.msra.mxu0 0.0
    %3486 = vmatpush.msra.mxu0 0.0
    %3487 = vmatpush.msra.mxu0 0.0
    %3488 = vmatpush.msra.mxu0 0.0
    %3489 = vmatpush.msra.mxu0 0.0
    %3490 = vmatpush.msra.mxu0 0.0
    %3491 = vmatpush.msra.mxu0 0.0
    %3492 = vmatpush.msra.mxu0 0.0
    %3493 = vmatpush.msra.mxu0 0.0
    %3494 = vmatpush.msra.mxu0 0.0
    %3495 = vmatpush.msra.mxu0 0.0
    %3496 = vmatpush.msra.mxu0 %v3455
    %3497 = vmatpush.msra.mxu0 %v3453
    %3498 = vmatpush.msra.mxu0 %v3451
    %3499 = vmatpush.msra.mxu0 %v3449
    %3500 = vmatmul.f32.gmra.mxu0 %v3461
    %v3501 = vpop.f32.mrf.mxu0
    %v3502 = vadd.f32 %v3443, %v3501
    %3503 = vmatmul.f32.gmra.mxu0 %v3464
    %v3504 = vpop.f32.mrf.mxu0
    %v3505 = vadd.f32 %v3443, %v3504
    %3506 = vmatmul.f32.gmra.mxu0 %v3467
    %v3507 = vpop.f32.mrf.mxu0
    %v3508 = vadd.f32 %v3443, %v3507
    %3509 = vmatmul.f32.gmra.mxu0 %v3470
    %v3510 = vpop.f32.mrf.mxu0
    %v3511 = vadd.f32 %v3443, %v3510
    %3512 = vmatmul.f32.gmra.mxu0 %v3473
    %v3513 = vpop.f32.mrf.mxu0
    %v3514 = vadd.f32 %v3443, %v3513
    %3515 = vmatmul.f32.gmra.mxu0 %v3476
    %v3516 = vpop.f32.mrf.mxu0
    %v3517 = vadd.f32 %v3443, %v3516
    %3518 = vmatmul.f32.gmra.mxu0 %v3479
    %v3519 = vpop.f32.mrf.mxu0
    %v3520 = vadd.f32 %v3443, %v3519
    %3521 = vmatmul.f32.gmra.mxu0 %v3482
    %v3522 = vpop.f32.mrf.mxu0
    %v3523 = vadd.f32 %v3443, %v3522
    %3524 = vdwg.mxu0
    %v3525 = vmax.f32 %v3502, 0.0
    %v3526 = vmax.f32 %v3505, 0.0
    %v3527 = vmax.f32 %v3508, 0.0
    %v3528 = vmax.f32 %v3511, 0.0
    %v3529 = vmax.f32 %v3514, 0.0
    %v3530 = vmax.f32 %v3517, 0.0
    %v3531 = vmax.f32 %v3520, 0.0
    %v3532 = vmax.f32 %v3523, 0.0
    %v3533 = vld [vmem:[%s3] sm:$0xff]
    %v3534 = vld [vmem:[%s3 + $0x8] sm:$0xff]
    %v3535 = vld [vmem:[%s3 + $0x10] sm:$0xff]
    %v3536 = vld [vmem:[%s3 + $0x18] sm:$0xff]
    %v3537 = vld [vmem:[%s3 + $0x20] sm:$0xff]
    %v3538 = vld [vmem:[%s3 + $0x28] sm:$0xff]
    %v3539 = vld [vmem:[%s3 + $0x30] sm:$0xff]
    %v3540 = vld [vmem:[%s3 + $0x38] sm:$0xff]
    %v3541 = vld [vmem:[%s4 + $0x5] sm:$0x1]
    %v3542 = vperm.slane %v3541, 0
    %v3544 = vsel %vm104, %v3525, 0
    %v3547 = vsel %vm104, %v3526, 0
    %v3550 = vsel %vm104, %v3527, 0
    %v3553 = vsel %vm104, %v3528, 0
    %v3556 = vsel %vm104, %v3529, 0
    %v3559 = vsel %vm104, %v3530, 0
    %v3562 = vsel %vm104, %v3531, 0
    %v3565 = vsel %vm104, %v3532, 0
    %3567 = vmatpush.msra.mxu0 0.0
    %3568 = vmatpush.msra.mxu0 0.0
    %3569 = vmatpush.msra.mxu0 0.0
    %3570 = vmatpush.msra.mxu0 0.0
    %3571 = vmatpush.msra.mxu0 0.0
    %3572 = vmatpush.msra.mxu0 0.0
    %3573 = vmatpush.msra.mxu0 0.0
    %3574 = vmatpush.msra.mxu0 0.0
    %3575 = vmatpush.msra.mxu0 %v3540
    %3576 = vmatpush.msra.mxu0 %v3539
    %3577 = vmatpush.msra.mxu0 %v3538
    %3578 = vmatpush.msra.mxu0 %v3537
    %3579 = vmatpush.msra.mxu0 %v3536
    %3580 = vmatpush.msra.mxu0 %v3535
    %3581 = vmatpush.msra.mxu0 %v3534
    %3582 = vmatpush.msra.mxu0 %v3533
    %3583 = vmatmul.f32.gmra.mxu0 %v3544
    %v3584 = vpop.f32.mrf.mxu0
    %v3585 = vadd.f32 %v3542, %v3584
    %3586 = vmatmul.f32.gmra.mxu0 %v3547
    %v3587 = vpop.f32.mrf.mxu0
    %v3588 = vadd.f32 %v3542, %v3587
    %3589 = vmatmul.f32.gmra.mxu0 %v3550
    %v3590 = vpop.f32.mrf.mxu0
    %v3591 = vadd.f32 %v3542, %v3590
    %3592 = vmatmul.f32.gmra.mxu0 %v3553
    %v3593 = vpop.f32.mrf.mxu0
    %v3594 = vadd.f32 %v3542, %v3593
    %3595 = vmatmul.f32.gmra.mxu0 %v3556
    %v3596 = vpop.f32.mrf.mxu0
    %v3597 = vadd.f32 %v3542, %v3596
    %3598 = vmatmul.f32.gmra.mxu0 %v3559
    %v3599 = vpop.f32.mrf.mxu0
    %v3600 = vadd.f32 %v3542, %v3599
    %3601 = vmatmul.f32.gmra.mxu0 %v3562
    %v3602 = vpop.f32.mrf.mxu0
    %v3603 = vadd.f32 %v3542, %v3602
    %3604 = vmatmul.f32.gmra.mxu0 %v3565
    %v3605 = vpop.f32.mrf.mxu0
    %v3606 = vadd.f32 %v3542, %v3605
    %3607 = vdwg.mxu0
    %v3608 = vadd.f32 %v3434, %v3585
    %v3609 = vadd.f32 %v3435, %v3588
    %v3610 = vadd.f32 %v3436, %v3591
    %v3611 = vadd.f32 %v3437, %v3594
    %v3612 = vadd.f32 %v3438, %v3597
    %v3613 = vadd.f32 %v3439, %v3600
    %v3614 = vadd.f32 %v3440, %v3603
    %v3615 = vadd.f32 %v3441, %v3606
    %v3616 = vsel %vm347, %v3608, 0.0
    %3617 = vadd.xlane.f32.xlu0 %v3616
    %v3618 = vpop.xlane.xlu0 %3617
    %v3619 = vsel %vm347, %v3609, 0.0
    %3620 = vadd.xlane.f32.xlu0 %v3619
    %v3621 = vpop.xlane.xlu0 %3620
    %v3622 = vsel %vm347, %v3610, 0.0
    %3623 = vadd.xlane.f32.xlu0 %v3622
    %v3624 = vpop.xlane.xlu0 %3623
    %v3625 = vsel %vm347, %v3611, 0.0
    %3626 = vadd.xlane.f32.xlu0 %v3625
    %v3627 = vpop.xlane.xlu0 %3626
    %v3628 = vsel %vm347, %v3612, 0.0
    %3629 = vadd.xlane.f32.xlu0 %v3628
    %v3630 = vpop.xlane.xlu0 %3629
    %v3631 = vsel %vm347, %v3613, 0.0
    %3632 = vadd.xlane.f32.xlu0 %v3631
    %v3633 = vpop.xlane.xlu0 %3632
    %v3634 = vsel %vm347, %v3614, 0.0
    %3635 = vadd.xlane.f32.xlu0 %v3634
    %v3636 = vpop.xlane.xlu0 %3635
    %v3637 = vsel %vm347, %v3615, 0.0
    %3638 = vadd.xlane.f32.xlu0 %v3637
    %v3639 = vpop.xlane.xlu0 %3638
    %v3640 = vmul.f32 %v3618, %v3269
    %v3641 = vmul.f32 %v3621, %v3269
    %v3642 = vmul.f32 %v3624, %v3269
    %v3643 = vmul.f32 %v3627, %v3269
    %v3644 = vmul.f32 %v3630, %v3269
    %v3645 = vmul.f32 %v3633, %v3269
    %v3646 = vmul.f32 %v3636, %v3269
    %v3647 = vmul.f32 %v3639, %v3269
    %v3648 = vsub.f32 %v3608, %v3640
    %v3649 = vsub.f32 %v3609, %v3641
    %v3650 = vsub.f32 %v3610, %v3642
    %v3651 = vsub.f32 %v3611, %v3643
    %v3652 = vsub.f32 %v3612, %v3644
    %v3653 = vsub.f32 %v3613, %v3645
    %v3654 = vsub.f32 %v3614, %v3646
    %v3655 = vsub.f32 %v3615, %v3647
    %v3656 = vmul.f32 %v3648, %v3648
    %v3657 = vmul.f32 %v3649, %v3649
    %v3658 = vmul.f32 %v3650, %v3650
    %v3659 = vmul.f32 %v3651, %v3651
    %v3660 = vmul.f32 %v3652, %v3652
    %v3661 = vmul.f32 %v3653, %v3653
    %v3662 = vmul.f32 %v3654, %v3654
    %v3663 = vmul.f32 %v3655, %v3655
    %v3664 = vsel %vm347, %v3656, 0.0
    %3665 = vadd.xlane.f32.xlu0 %v3664
    %v3666 = vpop.xlane.xlu0 %3665
    %v3667 = vsel %vm347, %v3657, 0.0
    %3668 = vadd.xlane.f32.xlu0 %v3667
    %v3669 = vpop.xlane.xlu0 %3668
    %v3670 = vsel %vm347, %v3658, 0.0
    %3671 = vadd.xlane.f32.xlu0 %v3670
    %v3672 = vpop.xlane.xlu0 %3671
    %v3673 = vsel %vm347, %v3659, 0.0
    %3674 = vadd.xlane.f32.xlu0 %v3673
    %v3675 = vpop.xlane.xlu0 %3674
    %v3676 = vsel %vm347, %v3660, 0.0
    %3677 = vadd.xlane.f32.xlu0 %v3676
    %v3678 = vpop.xlane.xlu0 %3677
    %v3679 = vsel %vm347, %v3661, 0.0
    %3680 = vadd.xlane.f32.xlu0 %v3679
    %v3681 = vpop.xlane.xlu0 %3680
    %v3682 = vsel %vm347, %v3662, 0.0
    %3683 = vadd.xlane.f32.xlu0 %v3682
    %v3684 = vpop.xlane.xlu0 %3683
    %v3685 = vsel %vm347, %v3663, 0.0
    %3686 = vadd.xlane.f32.xlu0 %v3685
    %v3687 = vpop.xlane.xlu0 %3686
    %v3688 = vmul.f32 %v3666, %v3269
    %v3689 = vmul.f32 %v3669, %v3269
    %v3690 = vmul.f32 %v3672, %v3269
    %v3691 = vmul.f32 %v3675, %v3269
    %v3692 = vmul.f32 %v3678, %v3269
    %v3693 = vmul.f32 %v3681, %v3269
    %v3694 = vmul.f32 %v3684, %v3269
    %v3695 = vmul.f32 %v3687, %v3269
    %v3696 = vadd.f32 %v3688, 1e-05
    %v3697 = vadd.f32 %v3689, 1e-05
    %v3698 = vadd.f32 %v3690, 1e-05
    %v3699 = vadd.f32 %v3691, 1e-05
    %v3700 = vadd.f32 %v3692, 1e-05
    %v3701 = vadd.f32 %v3693, 1e-05
    %v3702 = vadd.f32 %v3694, 1e-05
    %v3703 = vadd.f32 %v3695, 1e-05
    %v3704 = vrsqrt.pop %v3696
    %v3705 = vmul.f32 %v3704, %v3696
    %v3706 = vmul.f32 %v3705, %v3704
    %v3707 = vmul.f32 0.5, %v3706
    %v3708 = vsub.f32 1.5, %v3707
    %v3709 = vmul.f32 %v3704, %v3708
    %vm3710 = vweird.f32 %v3696
    %vm3711 = vweird.f32 %v3704
    %vm3712 = vmor %vm3710, %vm3711
    %v3713 = vsel %vm3712, %v3704, %v3709
    %v3714 = vrsqrt.pop %v3697
    %v3715 = vmul.f32 %v3714, %v3697
    %v3716 = vmul.f32 %v3715, %v3714
    %v3717 = vmul.f32 0.5, %v3716
    %v3718 = vsub.f32 1.5, %v3717
    %v3719 = vmul.f32 %v3714, %v3718
    %vm3720 = vweird.f32 %v3697
    %vm3721 = vweird.f32 %v3714
    %vm3722 = vmor %vm3720, %vm3721
    %v3723 = vsel %vm3722, %v3714, %v3719
    %v3724 = vrsqrt.pop %v3698
    %v3725 = vmul.f32 %v3724, %v3698
    %v3726 = vmul.f32 %v3725, %v3724
    %v3727 = vmul.f32 0.5, %v3726
    %v3728 = vsub.f32 1.5, %v3727
    %v3729 = vmul.f32 %v3724, %v3728
    %vm3730 = vweird.f32 %v3698
    %vm3731 = vweird.f32 %v3724
    %vm3732 = vmor %vm3730, %vm3731
    %v3733 = vsel %vm3732, %v3724, %v3729
    %v3734 = vrsqrt.pop %v3699
    %v3735 = vmul.f32 %v3734, %v3699
    %v3736 = vmul.f32 %v3735, %v3734
    %v3737 = vmul.f32 0.5, %v3736
    %v3738 = vsub.f32 1.5, %v3737
    %v3739 = vmul.f32 %v3734, %v3738
    %vm3740 = vweird.f32 %v3699
    %vm3741 = vweird.f32 %v3734
    %vm3742 = vmor %vm3740, %vm3741
    %v3743 = vsel %vm3742, %v3734, %v3739
    %v3744 = vrsqrt.pop %v3700
    %v3745 = vmul.f32 %v3744, %v3700
    %v3746 = vmul.f32 %v3745, %v3744
    %v3747 = vmul.f32 0.5, %v3746
    %v3748 = vsub.f32 1.5, %v3747
    %v3749 = vmul.f32 %v3744, %v3748
    %vm3750 = vweird.f32 %v3700
    %vm3751 = vweird.f32 %v3744
    %vm3752 = vmor %vm3750, %vm3751
    %v3753 = vsel %vm3752, %v3744, %v3749
    %v3754 = vrsqrt.pop %v3701
    %v3755 = vmul.f32 %v3754, %v3701
    %v3756 = vmul.f32 %v3755, %v3754
    %v3757 = vmul.f32 0.5, %v3756
    %v3758 = vsub.f32 1.5, %v3757
    %v3759 = vmul.f32 %v3754, %v3758
    %vm3760 = vweird.f32 %v3701
    %vm3761 = vweird.f32 %v3754
    %vm3762 = vmor %vm3760, %vm3761
    %v3763 = vsel %vm3762, %v3754, %v3759
    %v3764 = vrsqrt.pop %v3702
    %v3765 = vmul.f32 %v3764, %v3702
    %v3766 = vmul.f32 %v3765, %v3764
    %v3767 = vmul.f32 0.5, %v3766
    %v3768 = vsub.f32 1.5, %v3767
    %v3769 = vmul.f32 %v3764, %v3768
    %vm3770 = vweird.f32 %v3702
    %vm3771 = vweird.f32 %v3764
    %vm3772 = vmor %vm3770, %vm3771
    %v3773 = vsel %vm3772, %v3764, %v3769
    %v3774 = vrsqrt.pop %v3703
    %v3775 = vmul.f32 %v3774, %v3703
    %v3776 = vmul.f32 %v3775, %v3774
    %v3777 = vmul.f32 0.5, %v3776
    %v3778 = vsub.f32 1.5, %v3777
    %v3779 = vmul.f32 %v3774, %v3778
    %vm3780 = vweird.f32 %v3703
    %vm3781 = vweird.f32 %v3774
    %vm3782 = vmor %vm3780, %vm3781
    %v3783 = vsel %vm3782, %v3774, %v3779
    %v3784 = vmul.f32 %v3648, %v3713
    %v3785 = vmul.f32 %v3649, %v3723
    %v3786 = vmul.f32 %v3650, %v3733
    %v3787 = vmul.f32 %v3651, %v3743
    %v3788 = vmul.f32 %v3652, %v3753
    %v3789 = vmul.f32 %v3653, %v3763
    %v3790 = vmul.f32 %v3654, %v3773
    %v3791 = vmul.f32 %v3655, %v3783
    %v3792 = vld [vmem:[%s4 + $0x6] sm:$0x1]
    %v3793 = vperm.slane %v3792, 0
    %v3794 = vmul.f32 %v3784, %v3793
    %v3795 = vmul.f32 %v3785, %v3793
    %v3796 = vmul.f32 %v3786, %v3793
    %v3797 = vmul.f32 %v3787, %v3793
    %v3798 = vmul.f32 %v3788, %v3793
    %v3799 = vmul.f32 %v3789, %v3793
    %v3800 = vmul.f32 %v3790, %v3793
    %v3801 = vmul.f32 %v3791, %v3793
    %v3802 = vld [vmem:[%s4 + $0x7] sm:$0x1]
    %v3803 = vperm.slane %v3802, 0
    %v3804 = vadd.f32 %v3794, %v3803
    %v3805 = vadd.f32 %v3795, %v3803
    %v3806 = vadd.f32 %v3796, %v3803
    %v3807 = vadd.f32 %v3797, %v3803
    %v3808 = vadd.f32 %v3798, %v3803
    %v3809 = vadd.f32 %v3799, %v3803
    %v3810 = vadd.f32 %v3800, %v3803
    %v3811 = vadd.f32 %v3801, %v3803
    %3812 = vst.msk [vmem:[#allocation2] sm:$0xff] %vm347, %v3804
    %3813 = vst.msk [vmem:[#allocation2 + $0x8] sm:$0xff] %vm347, %v3805
    %3814 = vst.msk [vmem:[#allocation2 + $0x10] sm:$0xff] %vm347, %v3806
    %3815 = vst.msk [vmem:[#allocation2 + $0x18] sm:$0xff] %vm347, %v3807
    %3816 = vst.msk [vmem:[#allocation2 + $0x20] sm:$0xff] %vm347, %v3808
    %3817 = vst.msk [vmem:[#allocation2 + $0x28] sm:$0xff] %vm347, %v3809
    %3818 = vst.msk [vmem:[#allocation2 + $0x30] sm:$0xff] %vm347, %v3810
    %3819 = vst.msk [vmem:[#allocation2 + $0x38] sm:$0xff] %vm347, %v3811
    // Predicated region
    $region22: #{conv_attention_encoder_layer.1} parent=1 // pred_check
      _
    $region23: #{conv_attention_encoder_layer.1} parent=1 // pred_check_branch
      %3821 = sbr.rel (0) target = $region25
    $region24: #{conv_attention_encoder_layer.1} parent=1 // pred_region
      %3823 = vsyncadd [#allocation3], 0
      %s3824 = sshll.u32 [#allocation2], 4
      %s3825 = int_to_ptr.vmem [resolvable:$true] %s3824
      %s3826 = sshll.u32 %s5, 4
      %s3827 = int_to_ptr.hbm [resolvable:$true] %s3826
      %3832 = dma.vmem_to_hbm [thread:$0]  %s3825, 1024, %s3827, [#allocation3], 128, 128, 8
    $region25: #{conv_attention_encoder_layer.1} parent=1 // pred_fallthru
      _
    // Predicated region
    $region26: #{conv_attention_encoder_layer.1} parent=1 // pred_check
      _
    $region27: #{conv_attention_encoder_layer.1} parent=1 // pred_check_branch
      %3834 = sbr.rel (0) target = $region29
    $region28: #{conv_attention_encoder_layer.1} parent=1 // pred_region
      %3836 = dma.done [#allocation3], 1024
    $region29: #{conv_attention_encoder_layer.1} parent=1 // pred_fallthru
      _
    %3837 = vsyncpa [#allocation3], 1

</llo_original>
